<compile_context>
chip_gen: v7x
topology: tpu7x:2x2x1
jax: 0.10.0
libtpu: 0.0.40
codegen_flags: <defaults>
</compile_context>

<pallas_src>
import functools

import jax
import jax.numpy as jnp
from jax.experimental import pallas as pl
from jax.experimental.pallas import tpu as pltpu


def _vae_kernel(x_ref, eps_ref,
                w1_ref, b1_ref, w2_ref, b2_ref,
                w3_ref, b3_ref,                      # fused fc31|fc32
                w4_ref, b4_ref, w5_ref, b5_ref, w6_ref, b6_ref,
                recon_ref, mulv_ref, *, z_dim):
    x = x_ref[...]                                   # already bf16 (wrapper cast)

    # ---------------- encoder ----------------
    h = jnp.dot(x, w1_ref[...], preferred_element_type=jnp.float32) + b1_ref[...]
    h = jnp.maximum(h, 0.0).astype(jnp.bfloat16)
    h = jnp.dot(h, w2_ref[...], preferred_element_type=jnp.float32) + b2_ref[...]
    h = jnp.maximum(h, 0.0).astype(jnp.bfloat16)

    # fused latent heads: one (TB, 2*z_dim) matmul, mu | log_var side by side
    mulv = jnp.dot(h, w3_ref[...], preferred_element_type=jnp.float32) + b3_ref[...]
    mu = mulv[:, :z_dim]
    log_var = mulv[:, z_dim:]

    # ---------------- sampling (reparameterization, f32) ----------------
    std = jnp.exp(0.5 * log_var)
    z = (eps_ref[...] * std + mu).astype(jnp.bfloat16)

    # ---------------- decoder ----------------
    d = jnp.dot(z, w4_ref[...], preferred_element_type=jnp.float32) + b4_ref[...]
    d = jnp.maximum(d, 0.0).astype(jnp.bfloat16)
    d = jnp.dot(d, w5_ref[...], preferred_element_type=jnp.float32) + b5_ref[...]
    d = jnp.maximum(d, 0.0).astype(jnp.bfloat16)
    logits = jnp.dot(d, w6_ref[...], preferred_element_type=jnp.float32) + b6_ref[...]

    # Sigmoid in f32 (v5e EUP has no bf16 path); store bf16 to halve the
    # largest output stream.
    recon_ref[...] = jax.nn.sigmoid(logits).astype(recon_ref.dtype)
    mulv_ref[...] = mulv


def prepare_params(params):
    """One-time weight prep (call once, cache the result).

    Fuses fc31|fc32 into a single (h_dim2, 2*z_dim) head and casts all weights
    to bf16 (biases stay f32, shaped (1, out) for in-kernel broadcast).
    Weights are stored (in_features, out_features) = transpose of nn.Linear.
    """
    w31, b31 = params["fc31"]
    w32, b32 = params["fc32"]
    w3 = jnp.concatenate([w31, w32], axis=1)
    b3 = jnp.concatenate([b31, b32], axis=0)

    prepped = []
    for W, b in (params["fc1"], params["fc2"], (w3, b3),
                 params["fc4"], params["fc5"], params["fc6"]):
        prepped.append(W.astype(jnp.bfloat16))
        prepped.append(b.astype(jnp.float32).reshape(1, -1))
    return tuple(prepped)


def _pick_tb(batch):
    # Larger tiles amortize the ~0.35 us per-grid-step overhead, but only
    # raise TB when the grid still has >= 2 steps per TensorCore (v7x has 2 TCs,
    # i.e. require B >= 4*TB).
    for tb in (512, 256):
        if batch >= 4 * tb:
            return tb
    return 128


@functools.partial(jax.jit, static_argnames=("tb",))
def vae_forward(x, eps, prepped, *, tb=None):
    """x: (B, x_dim), eps: (B, z_dim), prepped: prepare_params(params).

    Returns (recon [bf16], mu [f32], log_var [f32]).
    """
    B, x_dim = x.shape
    z_dim = eps.shape[1]
    if tb is None:
        tb = _pick_tb(B)

    # bf16 input stream (no-op if the caller already feeds bf16); eps stays f32
    # (small) so the reparameterization math is exact-ish in f32.
    x = x.astype(jnp.bfloat16)
    eps = eps.astype(jnp.float32)

    # Pad only if the batch doesn't tile exactly (and only under jit).
    pad = (-B) % tb
    if pad:
        x = jnp.pad(x, ((0, pad), (0, 0)))
        eps = jnp.pad(eps, ((0, pad), (0, 0)))
    Bp = B + pad
    grid = (Bp // tb,)

    def batch_tile(shape):
        return pl.BlockSpec(shape, lambda i: (i, 0))

    def resident(shape):
        # Constant block index: DMA'd once, stays resident in VMEM for the
        # whole grid (no per-tile weight reload).
        return pl.BlockSpec(shape, lambda i: (0, 0))

    in_specs = [batch_tile((tb, x_dim)), batch_tile((tb, z_dim))]
    in_specs += [resident(w.shape) for w in prepped]

    out_shapes = (
        jax.ShapeDtypeStruct((Bp, x_dim), jnp.bfloat16),     # reconstruction
        jax.ShapeDtypeStruct((Bp, 2 * z_dim), jnp.float32),  # mu | log_var slab
    )
    out_specs = (
        batch_tile((tb, x_dim)),
        batch_tile((tb, 2 * z_dim)),
    )

    recon, mulv = pl.pallas_call(
        functools.partial(_vae_kernel, z_dim=z_dim),
        grid=grid,
        out_shape=out_shapes,
        in_specs=in_specs,
        out_specs=out_specs,
        compiler_params=pltpu.CompilerParams(
            dimension_semantics=("parallel",),   # megacore split of batch tiles
            vmem_limit_bytes=32 << 20,           # headroom for TB up to 512
        ),
    )(x, eps, *prepped)

    recon = recon[:B]
    mulv = mulv[:B]
    return recon, mulv[:, :z_dim], mulv[:, z_dim:]


def init_linear(key, in_dim, out_dim):
    """Deterministic init mimicking nn.Linear (uniform +/- 1/sqrt(in_dim)).
    Weight stored as (in_dim, out_dim) = PyTorch weight transposed."""
    kw, kb = jax.random.split(key)
    bound = 1.0 / jnp.sqrt(jnp.float32(in_dim))
    W = jax.random.uniform(kw, (in_dim, out_dim), jnp.float32, -bound, bound)
    b = jax.random.uniform(kb, (out_dim,), jnp.float32, -bound, bound)
    return W, b


def reference_forward(x, eps, params):
    """Plain-JAX reference mirroring the kernel's bf16-weight / f32-accum math."""
    def lin(h, name):
        W, b = params[name]
        return jnp.dot(h.astype(jnp.bfloat16), W.astype(jnp.bfloat16),
                       preferred_element_type=jnp.float32) + b.astype(jnp.float32)

    h = jnp.maximum(lin(x, "fc1"), 0.0)
    h = jnp.maximum(lin(h, "fc2"), 0.0)
    mu = lin(h, "fc31")
    log_var = lin(h, "fc32")
    z = eps * jnp.exp(0.5 * log_var) + mu
    d = jnp.maximum(lin(z, "fc4"), 0.0)
    d = jnp.maximum(lin(d, "fc5"), 0.0)
    return jax.nn.sigmoid(lin(d, "fc6")), mu, log_var


if __name__ == "__main__":
    # img_size=32 -> flattened x_dim=1024 (matches the torch module).
    # B=256 with TB=128 -> 2 grid steps (one per TensorCore on v7x).
    # NOTE: z_dim kept a multiple of 128 so the mulv[:, :z_dim] split and the
    # (tb, z_dim) eps block stay lane-aligned.
    B = 256
    x_dim, h_dim1, h_dim2, z_dim = 1024, 256, 128, 128

    key = jax.random.PRNGKey(0)
    keys = jax.random.split(key, 9)

    params = {
        "fc1":  init_linear(keys[0], x_dim,  h_dim1),
        "fc2":  init_linear(keys[1], h_dim1, h_dim2),
        "fc31": init_linear(keys[2], h_dim2, z_dim),
        "fc32": init_linear(keys[3], h_dim2, z_dim),
        "fc4":  init_linear(keys[4], z_dim,  h_dim2),
        "fc5":  init_linear(keys[5], h_dim2, h_dim1),
        "fc6":  init_linear(keys[6], h_dim1, x_dim),
    }
    # One-time weight prep (bf16 cast, fc31|fc32 fusion) hoisted off the hot path.
    prepped = jax.block_until_ready(prepare_params(params))

    # Input images as NCHW (B, 1, 32, 32) like the torch model, then flattened
    # exactly as x.view(-1, flattened_size).
    x_img = jax.random.normal(keys[7], (B, 1, 32, 32), jnp.float32)
    x = x_img.reshape(-1, x_dim)
    eps = jax.random.normal(keys[8], (B, z_dim), jnp.float32)  # randn_like(std)

    recon, mu, log_var = vae_forward(x, eps, prepped)
    jax.block_until_ready((recon, mu, log_var))

    # Sanity check against a plain-JAX reference using the same bf16 weights
    # (recon is bf16 from the kernel; 1e-2 tolerance covers the cast).
    r_ref, mu_ref, lv_ref = reference_forward(x, eps, params)
    assert jnp.allclose(recon.astype(jnp.float32), r_ref, atol=1e-2, rtol=1e-2), \
        "recon mismatch"
    assert jnp.allclose(mu, mu_ref, atol=1e-2, rtol=1e-2), "mu mismatch"
    assert jnp.allclose(log_var, lv_ref, atol=1e-2, rtol=1e-2), "log_var mismatch"

    print("KERNEL_OK")
</pallas_src>

<mosaic_0001>
module attributes {stable_mosaic.version = 11 : i64} {
  func.func @_vae_kernel(%arg0: i32, %arg1: memref<128x1024xbf16, #tpu.memory_space<vmem>>, %arg2: memref<128x128xf32, #tpu.memory_space<vmem>>, %arg3: memref<1024x256xbf16, #tpu.memory_space<vmem>>, %arg4: memref<1x256xf32, #tpu.memory_space<vmem>>, %arg5: memref<256x128xbf16, #tpu.memory_space<vmem>>, %arg6: memref<1x128xf32, #tpu.memory_space<vmem>>, %arg7: memref<128x256xbf16, #tpu.memory_space<vmem>>, %arg8: memref<1x256xf32, #tpu.memory_space<vmem>>, %arg9: memref<128x128xbf16, #tpu.memory_space<vmem>>, %arg10: memref<1x128xf32, #tpu.memory_space<vmem>>, %arg11: memref<128x256xbf16, #tpu.memory_space<vmem>>, %arg12: memref<1x256xf32, #tpu.memory_space<vmem>>, %arg13: memref<256x1024xbf16, #tpu.memory_space<vmem>>, %arg14: memref<1x1024xf32, #tpu.memory_space<vmem>>, %arg15: memref<128x1024xbf16, #tpu.memory_space<vmem>>, %arg16: memref<128x256xf32, #tpu.memory_space<vmem>>) attributes {dimension_semantics = [#tpu.dimension_semantics<parallel>], iteration_bounds = array<i64: 2>, scalar_prefetch = 0 : i64, scratch_operands = 0 : i64, tpu.core_type = #tpu.core_type<tc>, window_params = [{transform_indices = @transform_0, window_bounds = array<i64: 128, 1024>}, {transform_indices = @transform_1, window_bounds = array<i64: 128, 128>}, {pipeline_mode = #tpu.pipeline_mode<synchronous>, transform_indices = @transform_2, window_bounds = array<i64: 1024, 256>}, {pipeline_mode = #tpu.pipeline_mode<synchronous>, transform_indices = @transform_3, window_bounds = array<i64: 1, 256>}, {pipeline_mode = #tpu.pipeline_mode<synchronous>, transform_indices = @transform_4, window_bounds = array<i64: 256, 128>}, {pipeline_mode = #tpu.pipeline_mode<synchronous>, transform_indices = @transform_5, window_bounds = array<i64: 1, 128>}, {pipeline_mode = #tpu.pipeline_mode<synchronous>, transform_indices = @transform_6, window_bounds = array<i64: 128, 256>}, {pipeline_mode = #tpu.pipeline_mode<synchronous>, transform_indices = @transform_7, window_bounds = array<i64: 1, 256>}, {pipeline_mode = #tpu.pipeline_mode<synchronous>, transform_indices = @transform_8, window_bounds = array<i64: 128, 128>}, {pipeline_mode = #tpu.pipeline_mode<synchronous>, transform_indices = @transform_9, window_bounds = array<i64: 1, 128>}, {pipeline_mode = #tpu.pipeline_mode<synchronous>, transform_indices = @transform_10, window_bounds = array<i64: 128, 256>}, {pipeline_mode = #tpu.pipeline_mode<synchronous>, transform_indices = @transform_11, window_bounds = array<i64: 1, 256>}, {pipeline_mode = #tpu.pipeline_mode<synchronous>, transform_indices = @transform_12, window_bounds = array<i64: 256, 1024>}, {pipeline_mode = #tpu.pipeline_mode<synchronous>, transform_indices = @transform_13, window_bounds = array<i64: 1, 1024>}, {transform_indices = @transform_14, window_bounds = array<i64: 128, 1024>}, {transform_indices = @transform_15, window_bounds = array<i64: 128, 256>}]} {
    %c0 = arith.constant 0 : index
    %c0_0 = arith.constant 0 : index
    %0 = vector.load %arg1[%c0, %c0_0] : memref<128x1024xbf16, #tpu.memory_space<vmem>>, vector<128x1024xbf16>
    %c0_1 = arith.constant 0 : index
    %c0_2 = arith.constant 0 : index
    %1 = vector.load %arg3[%c0_1, %c0_2] : memref<1024x256xbf16, #tpu.memory_space<vmem>>, vector<1024x256xbf16>
    %cst = arith.constant dense<0.000000e+00> : vector<128x256xf32>
    %2 = tpu.matmul %0, %1, %cst {dimension_numbers = #tpu.dot_dimension_numbers<[1], [0], [0], [1], [0, 0, 1, 1], [], []>} : vector<128x1024xbf16>, vector<1024x256xbf16>, vector<128x256xf32> -> vector<128x256xf32>
    %c0_3 = arith.constant 0 : index
    %c0_4 = arith.constant 0 : index
    %3 = vector.load %arg4[%c0_3, %c0_4] : memref<1x256xf32, #tpu.memory_space<vmem>>, vector<1x256xf32>
    %4 = vector.broadcast %3 : vector<1x256xf32> to vector<128x256xf32>
    %5 = arith.addf %2, %4 : vector<128x256xf32>
    %cst_5 = arith.constant 0.000000e+00 : f32
    %6 = vector.broadcast %cst_5 : f32 to vector<128x256xf32>
    %7 = arith.maximumf %5, %6 : vector<128x256xf32>
    %8 = arith.truncf %7 : vector<128x256xf32> to vector<128x256xbf16>
    %c0_6 = arith.constant 0 : index
    %c0_7 = arith.constant 0 : index
    %9 = vector.load %arg5[%c0_6, %c0_7] : memref<256x128xbf16, #tpu.memory_space<vmem>>, vector<256x128xbf16>
    %cst_8 = arith.constant dense<0.000000e+00> : vector<128x128xf32>
    %10 = tpu.matmul %8, %9, %cst_8 {dimension_numbers = #tpu.dot_dimension_numbers<[1], [0], [0], [1], [0, 0, 1, 1], [], []>} : vector<128x256xbf16>, vector<256x128xbf16>, vector<128x128xf32> -> vector<128x128xf32>
    %c0_9 = arith.constant 0 : index
    %c0_10 = arith.constant 0 : index
    %11 = vector.load %arg6[%c0_9, %c0_10] : memref<1x128xf32, #tpu.memory_space<vmem>>, vector<1x128xf32>
    %12 = vector.broadcast %11 : vector<1x128xf32> to vector<128x128xf32>
    %13 = arith.addf %10, %12 : vector<128x128xf32>
    %cst_11 = arith.constant 0.000000e+00 : f32
    %14 = vector.broadcast %cst_11 : f32 to vector<128x128xf32>
    %15 = arith.maximumf %13, %14 : vector<128x128xf32>
    %16 = arith.truncf %15 : vector<128x128xf32> to vector<128x128xbf16>
    %c0_12 = arith.constant 0 : index
    %c0_13 = arith.constant 0 : index
    %17 = vector.load %arg7[%c0_12, %c0_13] : memref<128x256xbf16, #tpu.memory_space<vmem>>, vector<128x256xbf16>
    %cst_14 = arith.constant dense<0.000000e+00> : vector<128x256xf32>
    %18 = tpu.matmul %16, %17, %cst_14 {dimension_numbers = #tpu.dot_dimension_numbers<[1], [0], [0], [1], [0, 0, 1, 1], [], []>} : vector<128x128xbf16>, vector<128x256xbf16>, vector<128x256xf32> -> vector<128x256xf32>
    %c0_15 = arith.constant 0 : index
    %c0_16 = arith.constant 0 : index
    %19 = vector.load %arg8[%c0_15, %c0_16] : memref<1x256xf32, #tpu.memory_space<vmem>>, vector<1x256xf32>
    %20 = vector.broadcast %19 : vector<1x256xf32> to vector<128x256xf32>
    %21 = arith.addf %18, %20 : vector<128x256xf32>
    %22 = vector.extract_strided_slice %21 {offsets = [0, 0], sizes = [128, 128], strides = [1, 1]} : vector<128x256xf32> to vector<128x128xf32>
    %23 = vector.extract_strided_slice %21 {offsets = [0, 128], sizes = [128, 128], strides = [1, 1]} : vector<128x256xf32> to vector<128x128xf32>
    %cst_17 = arith.constant 5.000000e-01 : f32
    %24 = vector.broadcast %cst_17 : f32 to vector<128x128xf32>
    %25 = arith.mulf %24, %23 : vector<128x128xf32>
    %26 = math.exp %25 : vector<128x128xf32>
    %c0_18 = arith.constant 0 : index
    %c0_19 = arith.constant 0 : index
    %27 = vector.load %arg2[%c0_18, %c0_19] : memref<128x128xf32, #tpu.memory_space<vmem>>, vector<128x128xf32>
    %28 = arith.mulf %27, %26 : vector<128x128xf32>
    %29 = arith.addf %28, %22 : vector<128x128xf32>
    %30 = arith.truncf %29 : vector<128x128xf32> to vector<128x128xbf16>
    %c0_20 = arith.constant 0 : index
    %c0_21 = arith.constant 0 : index
    %31 = vector.load %arg9[%c0_20, %c0_21] : memref<128x128xbf16, #tpu.memory_space<vmem>>, vector<128x128xbf16>
    %cst_22 = arith.constant dense<0.000000e+00> : vector<128x128xf32>
    %32 = tpu.matmul %30, %31, %cst_22 {dimension_numbers = #tpu.dot_dimension_numbers<[1], [0], [0], [1], [0, 0, 1, 1], [], []>} : vector<128x128xbf16>, vector<128x128xbf16>, vector<128x128xf32> -> vector<128x128xf32>
    %c0_23 = arith.constant 0 : index
    %c0_24 = arith.constant 0 : index
    %33 = vector.load %arg10[%c0_23, %c0_24] : memref<1x128xf32, #tpu.memory_space<vmem>>, vector<1x128xf32>
    %34 = vector.broadcast %33 : vector<1x128xf32> to vector<128x128xf32>
    %35 = arith.addf %32, %34 : vector<128x128xf32>
    %cst_25 = arith.constant 0.000000e+00 : f32
    %36 = vector.broadcast %cst_25 : f32 to vector<128x128xf32>
    %37 = arith.maximumf %35, %36 : vector<128x128xf32>
    %38 = arith.truncf %37 : vector<128x128xf32> to vector<128x128xbf16>
    %c0_26 = arith.constant 0 : index
    %c0_27 = arith.constant 0 : index
    %39 = vector.load %arg11[%c0_26, %c0_27] : memref<128x256xbf16, #tpu.memory_space<vmem>>, vector<128x256xbf16>
    %cst_28 = arith.constant dense<0.000000e+00> : vector<128x256xf32>
    %40 = tpu.matmul %38, %39, %cst_28 {dimension_numbers = #tpu.dot_dimension_numbers<[1], [0], [0], [1], [0, 0, 1, 1], [], []>} : vector<128x128xbf16>, vector<128x256xbf16>, vector<128x256xf32> -> vector<128x256xf32>
    %c0_29 = arith.constant 0 : index
    %c0_30 = arith.constant 0 : index
    %41 = vector.load %arg12[%c0_29, %c0_30] : memref<1x256xf32, #tpu.memory_space<vmem>>, vector<1x256xf32>
    %42 = vector.broadcast %41 : vector<1x256xf32> to vector<128x256xf32>
    %43 = arith.addf %40, %42 : vector<128x256xf32>
    %cst_31 = arith.constant 0.000000e+00 : f32
    %44 = vector.broadcast %cst_31 : f32 to vector<128x256xf32>
    %45 = arith.maximumf %43, %44 : vector<128x256xf32>
    %46 = arith.truncf %45 : vector<128x256xf32> to vector<128x256xbf16>
    %c0_32 = arith.constant 0 : index
    %c0_33 = arith.constant 0 : index
    %47 = vector.load %arg13[%c0_32, %c0_33] : memref<256x1024xbf16, #tpu.memory_space<vmem>>, vector<256x1024xbf16>
    %cst_34 = arith.constant dense<0.000000e+00> : vector<128x1024xf32>
    %48 = tpu.matmul %46, %47, %cst_34 {dimension_numbers = #tpu.dot_dimension_numbers<[1], [0], [0], [1], [0, 0, 1, 1], [], []>} : vector<128x256xbf16>, vector<256x1024xbf16>, vector<128x1024xf32> -> vector<128x1024xf32>
    %c0_35 = arith.constant 0 : index
    %c0_36 = arith.constant 0 : index
    %49 = vector.load %arg14[%c0_35, %c0_36] : memref<1x1024xf32, #tpu.memory_space<vmem>>, vector<1x1024xf32>
    %50 = vector.broadcast %49 : vector<1x1024xf32> to vector<128x1024xf32>
    %51 = arith.addf %48, %50 : vector<128x1024xf32>
    %52 = arith.negf %51 : vector<128x1024xf32>
    %53 = math.exp %52 : vector<128x1024xf32>
    %cst_37 = arith.constant 1.000000e+00 : f32
    %54 = vector.broadcast %cst_37 : f32 to vector<128x1024xf32>
    %55 = arith.addf %54, %53 : vector<128x1024xf32>
    %56 = arith.divf %54, %55 : vector<128x1024xf32>
    %57 = arith.truncf %56 : vector<128x1024xf32> to vector<128x1024xbf16>
    %c0_38 = arith.constant 0 : index
    %c0_39 = arith.constant 0 : index
    %58 = vector.load %arg15[%c0_38, %c0_39] : memref<128x1024xbf16, #tpu.memory_space<vmem>>, vector<128x1024xbf16>
    tpu.vector_store %arg15[%c0_38, %c0_39], %57 {strides = array<i32>} : memref<128x1024xbf16, #tpu.memory_space<vmem>>, vector<128x1024xbf16>,
    %c0_40 = arith.constant 0 : index
    %c0_41 = arith.constant 0 : index
    %59 = vector.load %arg16[%c0_40, %c0_41] : memref<128x256xf32, #tpu.memory_space<vmem>>, vector<128x256xf32>
    tpu.vector_store %arg16[%c0_40, %c0_41], %21 {strides = array<i32>} : memref<128x256xf32, #tpu.memory_space<vmem>>, vector<128x256xf32>,
    return
  }
  func.func @transform_0(%arg0: i32) -> (i32, i32) {
    %c0_i32 = arith.constant 0 : i32
    %c0_i32_0 = arith.constant 0 : i32
    return %arg0, %c0_i32 : i32, i32
  }
  func.func @transform_1(%arg0: i32) -> (i32, i32) {
    %c0_i32 = arith.constant 0 : i32
    %c0_i32_0 = arith.constant 0 : i32
    return %arg0, %c0_i32 : i32, i32
  }
  func.func @transform_2(%arg0: i32) -> (i32, i32) {
    %c0_i32 = arith.constant 0 : i32
    %c0_i32_0 = arith.constant 0 : i32
    %c0_i32_1 = arith.constant 0 : i32
    return %c0_i32, %c0_i32_0 : i32, i32
  }
  func.func @transform_3(%arg0: i32) -> (i32, i32) {
    %c0_i32 = arith.constant 0 : i32
    %c0_i32_0 = arith.constant 0 : i32
    %c0_i32_1 = arith.constant 0 : i32
    return %c0_i32, %c0_i32_0 : i32, i32
  }
  func.func @transform_4(%arg0: i32) -> (i32, i32) {
    %c0_i32 = arith.constant 0 : i32
    %c0_i32_0 = arith.constant 0 : i32
    %c0_i32_1 = arith.constant 0 : i32
    return %c0_i32, %c0_i32_0 : i32, i32
  }
  func.func @transform_5(%arg0: i32) -> (i32, i32) {
    %c0_i32 = arith.constant 0 : i32
    %c0_i32_0 = arith.constant 0 : i32
    %c0_i32_1 = arith.constant 0 : i32
    return %c0_i32, %c0_i32_0 : i32, i32
  }
  func.func @transform_6(%arg0: i32) -> (i32, i32) {
    %c0_i32 = arith.constant 0 : i32
    %c0_i32_0 = arith.constant 0 : i32
    %c0_i32_1 = arith.constant 0 : i32
    return %c0_i32, %c0_i32_0 : i32, i32
  }
  func.func @transform_7(%arg0: i32) -> (i32, i32) {
    %c0_i32 = arith.constant 0 : i32
    %c0_i32_0 = arith.constant 0 : i32
    %c0_i32_1 = arith.constant 0 : i32
    return %c0_i32, %c0_i32_0 : i32, i32
  }
  func.func @transform_8(%arg0: i32) -> (i32, i32) {
    %c0_i32 = arith.constant 0 : i32
    %c0_i32_0 = arith.constant 0 : i32
    %c0_i32_1 = arith.constant 0 : i32
    return %c0_i32, %c0_i32_0 : i32, i32
  }
  func.func @transform_9(%arg0: i32) -> (i32, i32) {
    %c0_i32 = arith.constant 0 : i32
    %c0_i32_0 = arith.constant 0 : i32
    %c0_i32_1 = arith.constant 0 : i32
    return %c0_i32, %c0_i32_0 : i32, i32
  }
  func.func @transform_10(%arg0: i32) -> (i32, i32) {
    %c0_i32 = arith.constant 0 : i32
    %c0_i32_0 = arith.constant 0 : i32
    %c0_i32_1 = arith.constant 0 : i32
    return %c0_i32, %c0_i32_0 : i32, i32
  }
  func.func @transform_11(%arg0: i32) -> (i32, i32) {
    %c0_i32 = arith.constant 0 : i32
    %c0_i32_0 = arith.constant 0 : i32
    %c0_i32_1 = arith.constant 0 : i32
    return %c0_i32, %c0_i32_0 : i32, i32
  }
  func.func @transform_12(%arg0: i32) -> (i32, i32) {
    %c0_i32 = arith.constant 0 : i32
    %c0_i32_0 = arith.constant 0 : i32
    %c0_i32_1 = arith.constant 0 : i32
    return %c0_i32, %c0_i32_0 : i32, i32
  }
  func.func @transform_13(%arg0: i32) -> (i32, i32) {
    %c0_i32 = arith.constant 0 : i32
    %c0_i32_0 = arith.constant 0 : i32
    %c0_i32_1 = arith.constant 0 : i32
    return %c0_i32, %c0_i32_0 : i32, i32
  }
  func.func @transform_14(%arg0: i32) -> (i32, i32) {
    %c0_i32 = arith.constant 0 : i32
    %c0_i32_0 = arith.constant 0 : i32
    return %arg0, %c0_i32 : i32, i32
  }
  func.func @transform_15(%arg0: i32) -> (i32, i32) {
    %c0_i32 = arith.constant 0 : i32
    %c0_i32_0 = arith.constant 0 : i32
    return %arg0, %c0_i32 : i32, i32
  }
}

</mosaic_0001>

<llo_original>
// kernel: vae_forward.1
$region0: #{vae_forward.1}
  #allocation0 [shape = 'u32[]', space=smem, size = 0x4, offset = 0x4, fixed_abs, tag = 'smem constant byte address 0x4 - core index']
  #allocation1 [shape = 'u32[144,128]{1,0:T(1,128)}', space=vmem, size = 0x12000, scoped, tag = 'internal scratch']
  %s0 = inlined_call_operand.vmem [shape: bf16[256,1024], index: 0, kind: input, shape index: {}]
  %s1 = inlined_call_operand.vmem [shape: f32[256,128], index: 1, kind: input, shape index: {}]
  %s2 = inlined_call_operand.vmem [shape: bf16[1024,256], index: 2, kind: input, shape index: {}]
  %s3 = inlined_call_operand.vmem [shape: f32[1,256], index: 3, kind: input, shape index: {}]
  %s4 = inlined_call_operand.vmem [shape: bf16[256,128], index: 4, kind: input, shape index: {}]
  %s5 = inlined_call_operand.vmem [shape: f32[1,128], index: 5, kind: input, shape index: {}]
  %s6 = inlined_call_operand.vmem [shape: bf16[128,256], index: 6, kind: input, shape index: {}]
  %s7 = inlined_call_operand.vmem [shape: f32[1,256], index: 7, kind: input, shape index: {}]
  %s8 = inlined_call_operand.vmem [shape: bf16[128,128], index: 8, kind: input, shape index: {}]
  %s9 = inlined_call_operand.vmem [shape: f32[1,128], index: 9, kind: input, shape index: {}]
  %s10 = inlined_call_operand.vmem [shape: bf16[128,256], index: 10, kind: input, shape index: {}]
  %s11 = inlined_call_operand.vmem [shape: f32[1,256], index: 11, kind: input, shape index: {}]
  %s12 = inlined_call_operand.vmem [shape: bf16[256,1024], index: 12, kind: input, shape index: {}]
  %s13 = inlined_call_operand.vmem [shape: f32[1,1024], index: 13, kind: input, shape index: {}]
  %s14 = inlined_call_operand.hbm [shape: bf16[256,1024], index: 14, kind: output, shape index: {0}]
  %s15 = inlined_call_operand.vmem [shape: f32[256,256], index: 15, kind: output, shape index: {1}]
  %16 = xla_tuple %s14, %s15
  %s17 = sld [smem:[#allocation0]]
  $region97: #{vae_forward.1} parent=0
    _
  %s19 = ssub.s32 1, %s17
  %s20 = scalar_select 0, %s19, %s17
  $region1: #{vae_forward.1} parent=0
    #allocation2 [shape = 'u8[524288]{0}', space=vmem, size = 0x80000, scoped, tag = 'output window, operand 0']
    #allocation3 [shape = 's32[2]{0}', space=sflag, size = 0x8, scoped, tag = 'scoped memory for vae_forward.1']
    %21 = vsyncpa [#allocation3], 0
    %s22 = scalar_lea.sflag [#allocation3], 1
    %23 = vsyncpa %s22, 0
    loop: start=0, step=1, limit=4
    $region2: #{vae_forward.1} parent=1 // loop_pre_header
      _
    $region3: #{vae_forward.1} parent=1 // loop_header
      %s25 = sphi 0, %s29
      %p26 = scmp.ge.s32.totalorder %s25, 4
      %s35 = sphi 0, %s37
      %s38 = sphi 0, %s35
      %s39 = sphi 0, %s38
      %s55 = sphi 0, %s39
      %s61 = sphi 0, %s63
      %s64 = sphi 0, %s61
      %s65 = sphi 0, %s64
      %s81 = sphi 0, %s65
      %s85 = sphi 0, %s85
      %s87 = sphi 0, %s85
      %s88 = sphi 0, %s87
      %s102 = sphi 0, %s88
      %s106 = sphi 0, %s106
      %s108 = sphi 0, %s106
      %s109 = sphi 0, %s108
      %s123 = sphi 0, %s109
      %s127 = sphi 0, %s127
      %s129 = sphi 0, %s127
      %s130 = sphi 0, %s129
      %s144 = sphi 0, %s130
      %s148 = sphi 0, %s148
      %s150 = sphi 0, %s148
      %s151 = sphi 0, %s150
      %s165 = sphi 0, %s151
      %s169 = sphi 0, %s169
      %s171 = sphi 0, %s169
      %s172 = sphi 0, %s171
      %s186 = sphi 0, %s172
      %s190 = sphi 0, %s190
      %s192 = sphi 0, %s190
      %s193 = sphi 0, %s192
      %s207 = sphi 0, %s193
      %s211 = sphi 0, %s211
      %s213 = sphi 0, %s211
      %s214 = sphi 0, %s213
      %s228 = sphi 0, %s214
      %s232 = sphi 0, %s232
      %s234 = sphi 0, %s232
      %s235 = sphi 0, %s234
      %s249 = sphi 0, %s235
      %s253 = sphi 0, %s253
      %s255 = sphi 0, %s253
      %s256 = sphi 0, %s255
      %s270 = sphi 0, %s256
      %s274 = sphi 0, %s274
      %s276 = sphi 0, %s274
      %s277 = sphi 0, %s276
      %s291 = sphi 0, %s277
      %s295 = sphi 0, %s295
      %s297 = sphi 0, %s295
      %s298 = sphi 0, %s297
      %s312 = sphi 0, %s298
      %s316 = sphi 0, %s316
      %s318 = sphi 0, %s316
      %s319 = sphi 0, %s318
      %s333 = sphi 0, %s319
      %s339 = sphi 0, %s341
      %s342 = sphi 0, %s339
      %s343 = sphi 0, %s342
      %s359 = sphi 0, %s343
      %s365 = sphi 0, %s367
      %s368 = sphi 0, %s365
      %s369 = sphi 0, %s368
      %s385 = sphi 0, %s369
    $region4: #{vae_forward.1} parent=1 // loop_header_branch
      %28 = sbr.rel (%p26) target = $region8
    $region5: #{vae_forward.1} parent=1 // loop_body
      %s30 = ssub.s32 %s25, 1
      %s31 = ssub.s32 %s25, 2
      %s32 = sadd.s32 %s25, 1
      %s33 = ssub.s32 %s25, %s32
      %p34 = scmp.eq.s32.totalorder %s33, 0
      %s36 = sadd.s32 %s35, 1
      %s37 = scalar_select %p34, %s35, %s36
      %p40 = pneg %p34
      %p41 = scmp.eq.s32.totalorder %s25, 1
      %p42 = por %p40, %p41
      %p43 = scmp.ne.s32.totalorder %s35, %s38
      %p44 = scmp.eq.s32.totalorder %s25, 0
      %p45 = por %p43, %p44
      %p46 = scmp.ne.s32.totalorder %s35, %s38
      %p47 = scmp.eq.s32.totalorder %s30, 1
      %p48 = por %p46, %p47
      %p49 = scmp.ne.s32.totalorder %s38, %s39
      %p50 = scmp.eq.s32.totalorder %s30, 0
      %p51 = por %p49, %p50
      %p52 = scmp.ne.s32.totalorder %s38, %s39
      %p53 = scmp.eq.s32.totalorder %s31, 1
      %p54 = por %p52, %p53
      %p56 = scmp.ne.s32.totalorder %s39, %s55
      %p57 = scmp.eq.s32.totalorder %s31, 0
      %p58 = por %p56, %p57
      %s59 = ssub.s32 %s25, %s32
      %p60 = scmp.eq.s32.totalorder %s59, 0
      %s62 = sadd.s32 %s61, 1
      %s63 = scalar_select %p60, %s61, %s62
      %p66 = pneg %p60
      %p67 = scmp.eq.s32.totalorder %s25, 1
      %p68 = por %p66, %p67
      %p69 = scmp.ne.s32.totalorder %s61, %s64
      %p70 = scmp.eq.s32.totalorder %s25, 0
      %p71 = por %p69, %p70
      %p72 = scmp.ne.s32.totalorder %s61, %s64
      %p73 = scmp.eq.s32.totalorder %s30, 1
      %p74 = por %p72, %p73
      %p75 = scmp.ne.s32.totalorder %s64, %s65
      %p76 = scmp.eq.s32.totalorder %s30, 0
      %p77 = por %p75, %p76
      %p78 = scmp.ne.s32.totalorder %s64, %s65
      %p79 = scmp.eq.s32.totalorder %s31, 1
      %p80 = por %p78, %p79
      %p82 = scmp.ne.s32.totalorder %s65, %s81
      %p83 = scmp.eq.s32.totalorder %s31, 0
      %p84 = por %p82, %p83
      %s86 = sadd.s32 %s85, 1
      %p89 = scmp.eq.s32.totalorder %s25, 1
      %p90 = scmp.ne.s32.totalorder %s85, %s87
      %p91 = scmp.eq.s32.totalorder %s25, 0
      %p92 = por %p90, %p91
      %p93 = scmp.ne.s32.totalorder %s85, %s87
      %p94 = scmp.eq.s32.totalorder %s30, 1
      %p95 = por %p93, %p94
      %p96 = scmp.ne.s32.totalorder %s87, %s88
      %p97 = scmp.eq.s32.totalorder %s30, 0
      %p98 = por %p96, %p97
      %p99 = scmp.ne.s32.totalorder %s87, %s88
      %p100 = scmp.eq.s32.totalorder %s31, 1
      %p101 = por %p99, %p100
      %p103 = scmp.ne.s32.totalorder %s88, %s102
      %p104 = scmp.eq.s32.totalorder %s31, 0
      %p105 = por %p103, %p104
      %s107 = sadd.s32 %s106, 1
      %p110 = scmp.eq.s32.totalorder %s25, 1
      %p111 = scmp.ne.s32.totalorder %s106, %s108
      %p112 = scmp.eq.s32.totalorder %s25, 0
      %p113 = por %p111, %p112
      %p114 = scmp.ne.s32.totalorder %s106, %s108
      %p115 = scmp.eq.s32.totalorder %s30, 1
      %p116 = por %p114, %p115
      %p117 = scmp.ne.s32.totalorder %s108, %s109
      %p118 = scmp.eq.s32.totalorder %s30, 0
      %p119 = por %p117, %p118
      %p120 = scmp.ne.s32.totalorder %s108, %s109
      %p121 = scmp.eq.s32.totalorder %s31, 1
      %p122 = por %p120, %p121
      %p124 = scmp.ne.s32.totalorder %s109, %s123
      %p125 = scmp.eq.s32.totalorder %s31, 0
      %p126 = por %p124, %p125
      %s128 = sadd.s32 %s127, 1
      %p131 = scmp.eq.s32.totalorder %s25, 1
      %p132 = scmp.ne.s32.totalorder %s127, %s129
      %p133 = scmp.eq.s32.totalorder %s25, 0
      %p134 = por %p132, %p133
      %p135 = scmp.ne.s32.totalorder %s127, %s129
      %p136 = scmp.eq.s32.totalorder %s30, 1
      %p137 = por %p135, %p136
      %p138 = scmp.ne.s32.totalorder %s129, %s130
      %p139 = scmp.eq.s32.totalorder %s30, 0
      %p140 = por %p138, %p139
      %p141 = scmp.ne.s32.totalorder %s129, %s130
      %p142 = scmp.eq.s32.totalorder %s31, 1
      %p143 = por %p141, %p142
      %p145 = scmp.ne.s32.totalorder %s130, %s144
      %p146 = scmp.eq.s32.totalorder %s31, 0
      %p147 = por %p145, %p146
      %s149 = sadd.s32 %s148, 1
      %p152 = scmp.eq.s32.totalorder %s25, 1
      %p153 = scmp.ne.s32.totalorder %s148, %s150
      %p154 = scmp.eq.s32.totalorder %s25, 0
      %p155 = por %p153, %p154
      %p156 = scmp.ne.s32.totalorder %s148, %s150
      %p157 = scmp.eq.s32.totalorder %s30, 1
      %p158 = por %p156, %p157
      %p159 = scmp.ne.s32.totalorder %s150, %s151
      %p160 = scmp.eq.s32.totalorder %s30, 0
      %p161 = por %p159, %p160
      %p162 = scmp.ne.s32.totalorder %s150, %s151
      %p163 = scmp.eq.s32.totalorder %s31, 1
      %p164 = por %p162, %p163
      %p166 = scmp.ne.s32.totalorder %s151, %s165
      %p167 = scmp.eq.s32.totalorder %s31, 0
      %p168 = por %p166, %p167
      %s170 = sadd.s32 %s169, 1
      %p173 = scmp.eq.s32.totalorder %s25, 1
      %p174 = scmp.ne.s32.totalorder %s169, %s171
      %p175 = scmp.eq.s32.totalorder %s25, 0
      %p176 = por %p174, %p175
      %p177 = scmp.ne.s32.totalorder %s169, %s171
      %p178 = scmp.eq.s32.totalorder %s30, 1
      %p179 = por %p177, %p178
      %p180 = scmp.ne.s32.totalorder %s171, %s172
      %p181 = scmp.eq.s32.totalorder %s30, 0
      %p182 = por %p180, %p181
      %p183 = scmp.ne.s32.totalorder %s171, %s172
      %p184 = scmp.eq.s32.totalorder %s31, 1
      %p185 = por %p183, %p184
      %p187 = scmp.ne.s32.totalorder %s172, %s186
      %p188 = scmp.eq.s32.totalorder %s31, 0
      %p189 = por %p187, %p188
      %s191 = sadd.s32 %s190, 1
      %p194 = scmp.eq.s32.totalorder %s25, 1
      %p195 = scmp.ne.s32.totalorder %s190, %s192
      %p196 = scmp.eq.s32.totalorder %s25, 0
      %p197 = por %p195, %p196
      %p198 = scmp.ne.s32.totalorder %s190, %s192
      %p199 = scmp.eq.s32.totalorder %s30, 1
      %p200 = por %p198, %p199
      %p201 = scmp.ne.s32.totalorder %s192, %s193
      %p202 = scmp.eq.s32.totalorder %s30, 0
      %p203 = por %p201, %p202
      %p204 = scmp.ne.s32.totalorder %s192, %s193
      %p205 = scmp.eq.s32.totalorder %s31, 1
      %p206 = por %p204, %p205
      %p208 = scmp.ne.s32.totalorder %s193, %s207
      %p209 = scmp.eq.s32.totalorder %s31, 0
      %p210 = por %p208, %p209
      %s212 = sadd.s32 %s211, 1
      %p215 = scmp.eq.s32.totalorder %s25, 1
      %p216 = scmp.ne.s32.totalorder %s211, %s213
      %p217 = scmp.eq.s32.totalorder %s25, 0
      %p218 = por %p216, %p217
      %p219 = scmp.ne.s32.totalorder %s211, %s213
      %p220 = scmp.eq.s32.totalorder %s30, 1
      %p221 = por %p219, %p220
      %p222 = scmp.ne.s32.totalorder %s213, %s214
      %p223 = scmp.eq.s32.totalorder %s30, 0
      %p224 = por %p222, %p223
      %p225 = scmp.ne.s32.totalorder %s213, %s214
      %p226 = scmp.eq.s32.totalorder %s31, 1
      %p227 = por %p225, %p226
      %p229 = scmp.ne.s32.totalorder %s214, %s228
      %p230 = scmp.eq.s32.totalorder %s31, 0
      %p231 = por %p229, %p230
      %s233 = sadd.s32 %s232, 1
      %p236 = scmp.eq.s32.totalorder %s25, 1
      %p237 = scmp.ne.s32.totalorder %s232, %s234
      %p238 = scmp.eq.s32.totalorder %s25, 0
      %p239 = por %p237, %p238
      %p240 = scmp.ne.s32.totalorder %s232, %s234
      %p241 = scmp.eq.s32.totalorder %s30, 1
      %p242 = por %p240, %p241
      %p243 = scmp.ne.s32.totalorder %s234, %s235
      %p244 = scmp.eq.s32.totalorder %s30, 0
      %p245 = por %p243, %p244
      %p246 = scmp.ne.s32.totalorder %s234, %s235
      %p247 = scmp.eq.s32.totalorder %s31, 1
      %p248 = por %p246, %p247
      %p250 = scmp.ne.s32.totalorder %s235, %s249
      %p251 = scmp.eq.s32.totalorder %s31, 0
      %p252 = por %p250, %p251
      %s254 = sadd.s32 %s253, 1
      %p257 = scmp.eq.s32.totalorder %s25, 1
      %p258 = scmp.ne.s32.totalorder %s253, %s255
      %p259 = scmp.eq.s32.totalorder %s25, 0
      %p260 = por %p258, %p259
      %p261 = scmp.ne.s32.totalorder %s253, %s255
      %p262 = scmp.eq.s32.totalorder %s30, 1
      %p263 = por %p261, %p262
      %p264 = scmp.ne.s32.totalorder %s255, %s256
      %p265 = scmp.eq.s32.totalorder %s30, 0
      %p266 = por %p264, %p265
      %p267 = scmp.ne.s32.totalorder %s255, %s256
      %p268 = scmp.eq.s32.totalorder %s31, 1
      %p269 = por %p267, %p268
      %p271 = scmp.ne.s32.totalorder %s256, %s270
      %p272 = scmp.eq.s32.totalorder %s31, 0
      %p273 = por %p271, %p272
      %s275 = sadd.s32 %s274, 1
      %p278 = scmp.eq.s32.totalorder %s25, 1
      %p279 = scmp.ne.s32.totalorder %s274, %s276
      %p280 = scmp.eq.s32.totalorder %s25, 0
      %p281 = por %p279, %p280
      %p282 = scmp.ne.s32.totalorder %s274, %s276
      %p283 = scmp.eq.s32.totalorder %s30, 1
      %p284 = por %p282, %p283
      %p285 = scmp.ne.s32.totalorder %s276, %s277
      %p286 = scmp.eq.s32.totalorder %s30, 0
      %p287 = por %p285, %p286
      %p288 = scmp.ne.s32.totalorder %s276, %s277
      %p289 = scmp.eq.s32.totalorder %s31, 1
      %p290 = por %p288, %p289
      %p292 = scmp.ne.s32.totalorder %s277, %s291
      %p293 = scmp.eq.s32.totalorder %s31, 0
      %p294 = por %p292, %p293
      %s296 = sadd.s32 %s295, 1
      %p299 = scmp.eq.s32.totalorder %s25, 1
      %p300 = scmp.ne.s32.totalorder %s295, %s297
      %p301 = scmp.eq.s32.totalorder %s25, 0
      %p302 = por %p300, %p301
      %p303 = scmp.ne.s32.totalorder %s295, %s297
      %p304 = scmp.eq.s32.totalorder %s30, 1
      %p305 = por %p303, %p304
      %p306 = scmp.ne.s32.totalorder %s297, %s298
      %p307 = scmp.eq.s32.totalorder %s30, 0
      %p308 = por %p306, %p307
      %p309 = scmp.ne.s32.totalorder %s297, %s298
      %p310 = scmp.eq.s32.totalorder %s31, 1
      %p311 = por %p309, %p310
      %p313 = scmp.ne.s32.totalorder %s298, %s312
      %p314 = scmp.eq.s32.totalorder %s31, 0
      %p315 = por %p313, %p314
      %s317 = sadd.s32 %s316, 1
      %p320 = scmp.eq.s32.totalorder %s25, 1
      %p321 = scmp.ne.s32.totalorder %s316, %s318
      %p322 = scmp.eq.s32.totalorder %s25, 0
      %p323 = por %p321, %p322
      %p324 = scmp.ne.s32.totalorder %s316, %s318
      %p325 = scmp.eq.s32.totalorder %s30, 1
      %p326 = por %p324, %p325
      %p327 = scmp.ne.s32.totalorder %s318, %s319
      %p328 = scmp.eq.s32.totalorder %s30, 0
      %p329 = por %p327, %p328
      %p330 = scmp.ne.s32.totalorder %s318, %s319
      %p331 = scmp.eq.s32.totalorder %s31, 1
      %p332 = por %p330, %p331
      %p334 = scmp.ne.s32.totalorder %s319, %s333
      %p335 = scmp.eq.s32.totalorder %s31, 0
      %p336 = por %p334, %p335
      %s337 = ssub.s32 %s25, %s32
      %p338 = scmp.eq.s32.totalorder %s337, 0
      %s340 = sadd.s32 %s339, 1
      %s341 = scalar_select %p338, %s339, %s340
      %p344 = pneg %p338
      %p345 = scmp.eq.s32.totalorder %s25, 1
      %p346 = por %p344, %p345
      %p347 = scmp.ne.s32.totalorder %s339, %s342
      %p348 = scmp.eq.s32.totalorder %s25, 0
      %p349 = por %p347, %p348
      %p350 = scmp.ne.s32.totalorder %s339, %s342
      %p351 = scmp.eq.s32.totalorder %s30, 1
      %p352 = por %p350, %p351
      %p353 = scmp.ne.s32.totalorder %s342, %s343
      %p354 = scmp.eq.s32.totalorder %s30, 0
      %p355 = por %p353, %p354
      %p356 = scmp.ne.s32.totalorder %s342, %s343
      %p357 = scmp.eq.s32.totalorder %s31, 1
      %p358 = por %p356, %p357
      %p360 = scmp.ne.s32.totalorder %s343, %s359
      %p361 = scmp.eq.s32.totalorder %s31, 0
      %p362 = por %p360, %p361
      %s363 = ssub.s32 %s25, %s32
      %p364 = scmp.eq.s32.totalorder %s363, 0
      %s366 = sadd.s32 %s365, 1
      %s367 = scalar_select %p364, %s365, %s366
      %p370 = pneg %p364
      %p371 = scmp.eq.s32.totalorder %s25, 1
      %p372 = por %p370, %p371
      %p373 = scmp.ne.s32.totalorder %s365, %s368
      %p374 = scmp.eq.s32.totalorder %s25, 0
      %p375 = por %p373, %p374
      %p376 = scmp.ne.s32.totalorder %s365, %s368
      %p377 = scmp.eq.s32.totalorder %s30, 1
      %p378 = por %p376, %p377
      %p379 = scmp.ne.s32.totalorder %s368, %s369
      %p380 = scmp.eq.s32.totalorder %s30, 0
      %p381 = por %p379, %p380
      %p382 = scmp.ne.s32.totalorder %s368, %s369
      %p383 = scmp.eq.s32.totalorder %s31, 1
      %p384 = por %p382, %p383
      %p386 = scmp.ne.s32.totalorder %s369, %s385
      %p387 = scmp.eq.s32.totalorder %s31, 0
      %p388 = por %p386, %p387
      %p389 = scmp.le.s32.totalorder 1, %s25
      %p390 = scmp.lt.s32.totalorder %s25, 3
      %p391 = pnand %p389, %p390
      %p392 = pneg %p391
      // Predicated region
      $region9: #{vae_forward.1} parent=5 // pred_check
        _
      $region10: #{vae_forward.1} parent=5 // pred_check_branch
        %394 = sbr.rel (%p391) target = $region12
      $region11: #{vae_forward.1} parent=5 // pred_region
        %s395 = ssub.s32 %s25, 1
        // Predicated region
        $region13: #{vae_forward.1} parent=11 // pred_check
          %p396 = pneg %p98
        $region14: #{vae_forward.1} parent=11 // pred_check_branch
          %398 = sbr.rel (%p396) target = $region16
        $region15: #{vae_forward.1} parent=11 // pred_region
          _
        $region16: #{vae_forward.1} parent=11 // pred_fallthru
          _
        // Predicated region
        $region17: #{vae_forward.1} parent=11 // pred_check
          %p399 = pneg %p119
        $region18: #{vae_forward.1} parent=11 // pred_check_branch
          %401 = sbr.rel (%p399) target = $region20
        $region19: #{vae_forward.1} parent=11 // pred_region
          _
        $region20: #{vae_forward.1} parent=11 // pred_fallthru
          _
        // Predicated region
        $region21: #{vae_forward.1} parent=11 // pred_check
          %p402 = pneg %p140
        $region22: #{vae_forward.1} parent=11 // pred_check_branch
          %404 = sbr.rel (%p402) target = $region24
        $region23: #{vae_forward.1} parent=11 // pred_region
          _
        $region24: #{vae_forward.1} parent=11 // pred_fallthru
          _
        // Predicated region
        $region25: #{vae_forward.1} parent=11 // pred_check
          %p405 = pneg %p161
        $region26: #{vae_forward.1} parent=11 // pred_check_branch
          %407 = sbr.rel (%p405) target = $region28
        $region27: #{vae_forward.1} parent=11 // pred_region
          _
        $region28: #{vae_forward.1} parent=11 // pred_fallthru
          _
        // Predicated region
        $region29: #{vae_forward.1} parent=11 // pred_check
          %p408 = pneg %p182
        $region30: #{vae_forward.1} parent=11 // pred_check_branch
          %410 = sbr.rel (%p408) target = $region32
        $region31: #{vae_forward.1} parent=11 // pred_region
          _
        $region32: #{vae_forward.1} parent=11 // pred_fallthru
          _
        // Predicated region
        $region33: #{vae_forward.1} parent=11 // pred_check
          %p411 = pneg %p203
        $region34: #{vae_forward.1} parent=11 // pred_check_branch
          %413 = sbr.rel (%p411) target = $region36
        $region35: #{vae_forward.1} parent=11 // pred_region
          _
        $region36: #{vae_forward.1} parent=11 // pred_fallthru
          _
        // Predicated region
        $region37: #{vae_forward.1} parent=11 // pred_check
          %p414 = pneg %p224
        $region38: #{vae_forward.1} parent=11 // pred_check_branch
          %416 = sbr.rel (%p414) target = $region40
        $region39: #{vae_forward.1} parent=11 // pred_region
          _
        $region40: #{vae_forward.1} parent=11 // pred_fallthru
          _
        // Predicated region
        $region41: #{vae_forward.1} parent=11 // pred_check
          %p417 = pneg %p245
        $region42: #{vae_forward.1} parent=11 // pred_check_branch
          %419 = sbr.rel (%p417) target = $region44
        $region43: #{vae_forward.1} parent=11 // pred_region
          _
        $region44: #{vae_forward.1} parent=11 // pred_fallthru
          _
        // Predicated region
        $region45: #{vae_forward.1} parent=11 // pred_check
          %p420 = pneg %p266
        $region46: #{vae_forward.1} parent=11 // pred_check_branch
          %422 = sbr.rel (%p420) target = $region48
        $region47: #{vae_forward.1} parent=11 // pred_region
          _
        $region48: #{vae_forward.1} parent=11 // pred_fallthru
          _
        // Predicated region
        $region49: #{vae_forward.1} parent=11 // pred_check
          %p423 = pneg %p287
        $region50: #{vae_forward.1} parent=11 // pred_check_branch
          %425 = sbr.rel (%p423) target = $region52
        $region51: #{vae_forward.1} parent=11 // pred_region
          _
        $region52: #{vae_forward.1} parent=11 // pred_fallthru
          _
        // Predicated region
        $region53: #{vae_forward.1} parent=11 // pred_check
          %p426 = pneg %p308
        $region54: #{vae_forward.1} parent=11 // pred_check_branch
          %428 = sbr.rel (%p426) target = $region56
        $region55: #{vae_forward.1} parent=11 // pred_region
          _
        $region56: #{vae_forward.1} parent=11 // pred_fallthru
          _
        // Predicated region
        $region57: #{vae_forward.1} parent=11 // pred_check
          %p429 = pneg %p329
        $region58: #{vae_forward.1} parent=11 // pred_check_branch
          %431 = sbr.rel (%p429) target = $region60
        $region59: #{vae_forward.1} parent=11 // pred_region
          _
        $region60: #{vae_forward.1} parent=11 // pred_fallthru
          _
      $region12: #{vae_forward.1} parent=5 // pred_fallthru
        _
      %p432 = scmp.lt.s32.totalorder %s25, 2
      // Predicated region
      $region61: #{vae_forward.1} parent=5 // pred_check
        %p433 = pneg %p432
      $region62: #{vae_forward.1} parent=5 // pred_check_branch
        %435 = sbr.rel (%p433) target = $region64
      $region63: #{vae_forward.1} parent=5 // pred_region
        // Predicated region
        $region65: #{vae_forward.1} parent=63 // pred_check
          %p436 = pneg %p45
        $region66: #{vae_forward.1} parent=63 // pred_check_branch
          %438 = sbr.rel (%p436) target = $region68
        $region67: #{vae_forward.1} parent=63 // pred_region
          %s439 = smul.u32 16, %s25
          %p440 = scmp.lt.s32.totalorder %s439, 31
          %s441 = scalar_select %p440, %s439, 31
          %s442 = smul.addr %s441, 8
          %s443 = smul.addr %s442, 4
          %s444 = scalar_lea.vmem %s0, %s443
          %s445 = smul.u32 16, %s25
        $region68: #{vae_forward.1} parent=63 // pred_fallthru
          _
        // Predicated region
        $region69: #{vae_forward.1} parent=63 // pred_check
          %p446 = pneg %p71
        $region70: #{vae_forward.1} parent=63 // pred_check_branch
          %448 = sbr.rel (%p446) target = $region72
        $region71: #{vae_forward.1} parent=63 // pred_region
          %s449 = smul.u32 16, %s25
          %p450 = scmp.lt.s32.totalorder %s449, 31
          %s451 = scalar_select %p450, %s449, 31
          %s452 = smul.addr %s451, 8
          %s453 = scalar_lea.vmem %s1, %s452
          %s454 = smul.u32 16, %s25
        $region72: #{vae_forward.1} parent=63 // pred_fallthru
          _
      $region64: #{vae_forward.1} parent=5 // pred_fallthru
        _
      %p455 = scmp.le.s32.totalorder 1, %s25
      %p456 = scmp.lt.s32.totalorder %s25, 3
      %p457 = pnand %p455, %p456
      %p458 = pneg %p457
      // Predicated region
      $region73: #{vae_forward.1} parent=5 // pred_check
        _
      $region74: #{vae_forward.1} parent=5 // pred_check_branch
        %460 = sbr.rel (%p457) target = $region76
      $region75: #{vae_forward.1} parent=5 // pred_region
        %s461 = ssub.s32 %s25, 1
        %s462 = smul.u32 16, %s30
        %p463 = scmp.lt.s32.totalorder %s462, 31
        %s464 = scalar_select %p463, %s462, 31
        %s465 = smul.addr %s464, 8
        %s466 = smul.addr %s465, 4
        %s467 = scalar_lea.vmem %s0, %s466
        %p468 = pneg %p51
        %p469 = pneg %p48
        %s470 = smul.u32 16, %s30
        %p471 = scmp.lt.s32.totalorder %s470, 31
        %s472 = scalar_select %p471, %s470, 31
        %s473 = smul.addr %s472, 8
        %s474 = scalar_lea.vmem %s1, %s473
        %p475 = pneg %p77
        %p476 = pneg %p74
        %p477 = pneg %p98
        %p478 = pneg %p95
        %p479 = pneg %p119
        %p480 = pneg %p116
        %p481 = pneg %p140
        %p482 = pneg %p137
        %p483 = pneg %p161
        %p484 = pneg %p158
        %p485 = pneg %p182
        %p486 = pneg %p179
        %p487 = pneg %p203
        %p488 = pneg %p200
        %p489 = pneg %p224
        %p490 = pneg %p221
        %p491 = pneg %p245
        %p492 = pneg %p242
        %p493 = pneg %p266
        %p494 = pneg %p263
        %p495 = pneg %p287
        %p496 = pneg %p284
        %p497 = pneg %p308
        %p498 = pneg %p305
        %p499 = pneg %p329
        %p500 = pneg %p326
        %p501 = pneg %p355
        %p502 = pneg %p352
        %s503 = sand.u32 %s342, 1
        %s504 = scalar_lea.sflag [#allocation3], %s503
        %s505 = sand.u32 %s342, 1
        %s506 = smul.addr %s505, 512
        %s507 = scalar_lea.vmem [#allocation2], %s506
        %p508 = pneg %p381
        %p509 = pneg %p378
        %s510 = smul.u32 16, %s30
        %p511 = scmp.lt.s32.totalorder %s510, 31
        %s512 = scalar_select %p511, %s510, 31
        %s513 = smul.addr %s512, 2
        %s514 = smul.addr %s513, 8
        %s515 = scalar_lea.vmem %s15, %s514
        %s516 = smul.u32 16, %s30
        %p517 = scmp.lt.s32.totalorder %s516, 31
        %s518 = scalar_select %p517, %s516, 31
        %s519 = smul.addr %s518, 8
        %s520 = smul.addr %s519, 4
        %s521 = scalar_lea.vmem %s0, %s520
        %s522 = smul.u32 16, %s30
        %s523 = smul.u32 16, %s30
        %p524 = scmp.lt.s32.totalorder %s523, 31
        %s525 = scalar_select %p524, %s523, 31
        %s526 = smul.addr %s525, 8
        %s527 = scalar_lea.vmem %s1, %s526
        %s528 = smul.u32 16, %s30
        %s529 = smul.u32 16, %s30
        %s530 = smul.u32 16, %s30
        %p531 = scmp.lt.s32.totalorder %s530, 31
        %s532 = scalar_select %p531, %s530, 31
        %s533 = smul.addr %s532, 2
        %s534 = smul.addr %s533, 8
        %s535 = scalar_lea.vmem %s15, %s534
        %s536 = smul.u32 16, %s30
        %v538 = vld [vmem:[%s521] sm:$0xff]
        %v539 = vld [vmem:[%s521 + $0x8] sm:$0xff]
        %v540 = vld [vmem:[%s521 + $0x10] sm:$0xff]
        %v541 = vld [vmem:[%s521 + $0x18] sm:$0xff]
        %v542 = vld [vmem:[%s521 + $0x20] sm:$0xff]
        %v543 = vld [vmem:[%s521 + $0x28] sm:$0xff]
        %v544 = vld [vmem:[%s521 + $0x30] sm:$0xff]
        %v545 = vld [vmem:[%s521 + $0x38] sm:$0xff]
        %v546 = vld [vmem:[%s521 + $0x40] sm:$0xff]
        %v547 = vld [vmem:[%s521 + $0x48] sm:$0xff]
        %v548 = vld [vmem:[%s521 + $0x50] sm:$0xff]
        %v549 = vld [vmem:[%s521 + $0x58] sm:$0xff]
        %v550 = vld [vmem:[%s521 + $0x60] sm:$0xff]
        %v551 = vld [vmem:[%s521 + $0x68] sm:$0xff]
        %v552 = vld [vmem:[%s521 + $0x70] sm:$0xff]
        %v553 = vld [vmem:[%s521 + $0x78] sm:$0xff]
        %v554 = vld [vmem:[%s521 + $0x80] sm:$0xff]
        %v555 = vld [vmem:[%s521 + $0x88] sm:$0xff]
        %v556 = vld [vmem:[%s521 + $0x90] sm:$0xff]
        %v557 = vld [vmem:[%s521 + $0x98] sm:$0xff]
        %v558 = vld [vmem:[%s521 + $0xa0] sm:$0xff]
        %v559 = vld [vmem:[%s521 + $0xa8] sm:$0xff]
        %v560 = vld [vmem:[%s521 + $0xb0] sm:$0xff]
        %v561 = vld [vmem:[%s521 + $0xb8] sm:$0xff]
        %v562 = vld [vmem:[%s521 + $0xc0] sm:$0xff]
        %v563 = vld [vmem:[%s521 + $0xc8] sm:$0xff]
        %v564 = vld [vmem:[%s521 + $0xd0] sm:$0xff]
        %v565 = vld [vmem:[%s521 + $0xd8] sm:$0xff]
        %v566 = vld [vmem:[%s521 + $0xe0] sm:$0xff]
        %v567 = vld [vmem:[%s521 + $0xe8] sm:$0xff]
        %v568 = vld [vmem:[%s521 + $0xf0] sm:$0xff]
        %v569 = vld [vmem:[%s521 + $0xf8] sm:$0xff]
        %v570 = vld [vmem:[%s521 + $0x100] sm:$0xff]
        %v571 = vld [vmem:[%s521 + $0x108] sm:$0xff]
        %v572 = vld [vmem:[%s521 + $0x110] sm:$0xff]
        %v573 = vld [vmem:[%s521 + $0x118] sm:$0xff]
        %v574 = vld [vmem:[%s521 + $0x120] sm:$0xff]
        %v575 = vld [vmem:[%s521 + $0x128] sm:$0xff]
        %v576 = vld [vmem:[%s521 + $0x130] sm:$0xff]
        %v577 = vld [vmem:[%s521 + $0x138] sm:$0xff]
        %v578 = vld [vmem:[%s521 + $0x140] sm:$0xff]
        %v579 = vld [vmem:[%s521 + $0x148] sm:$0xff]
        %v580 = vld [vmem:[%s521 + $0x150] sm:$0xff]
        %v581 = vld [vmem:[%s521 + $0x158] sm:$0xff]
        %v582 = vld [vmem:[%s521 + $0x160] sm:$0xff]
        %v583 = vld [vmem:[%s521 + $0x168] sm:$0xff]
        %v584 = vld [vmem:[%s521 + $0x170] sm:$0xff]
        %v585 = vld [vmem:[%s521 + $0x178] sm:$0xff]
        %v586 = vld [vmem:[%s521 + $0x180] sm:$0xff]
        %v587 = vld [vmem:[%s521 + $0x188] sm:$0xff]
        %v588 = vld [vmem:[%s521 + $0x190] sm:$0xff]
        %v589 = vld [vmem:[%s521 + $0x198] sm:$0xff]
        %v590 = vld [vmem:[%s521 + $0x1a0] sm:$0xff]
        %v591 = vld [vmem:[%s521 + $0x1a8] sm:$0xff]
        %v592 = vld [vmem:[%s521 + $0x1b0] sm:$0xff]
        %v593 = vld [vmem:[%s521 + $0x1b8] sm:$0xff]
        %v594 = vld [vmem:[%s521 + $0x1c0] sm:$0xff]
        %v595 = vld [vmem:[%s521 + $0x1c8] sm:$0xff]
        %v596 = vld [vmem:[%s521 + $0x1d0] sm:$0xff]
        %v597 = vld [vmem:[%s521 + $0x1d8] sm:$0xff]
        %v598 = vld [vmem:[%s521 + $0x1e0] sm:$0xff]
        %v599 = vld [vmem:[%s521 + $0x1e8] sm:$0xff]
        %v600 = vld [vmem:[%s521 + $0x1f0] sm:$0xff]
        %v601 = vld [vmem:[%s521 + $0x1f8] sm:$0xff]
        %v602 = vld [vmem:[%s2] sm:$0xff]
        %v603 = vld [vmem:[%s2 + $0x8] sm:$0xff]
        %v604 = vld [vmem:[%s2 + $0x10] sm:$0xff]
        %v605 = vld [vmem:[%s2 + $0x18] sm:$0xff]
        %v606 = vld [vmem:[%s2 + $0x20] sm:$0xff]
        %v607 = vld [vmem:[%s2 + $0x28] sm:$0xff]
        %v608 = vld [vmem:[%s2 + $0x30] sm:$0xff]
        %v609 = vld [vmem:[%s2 + $0x38] sm:$0xff]
        %v610 = vld [vmem:[%s2 + $0x40] sm:$0xff]
        %v611 = vld [vmem:[%s2 + $0x48] sm:$0xff]
        %v612 = vld [vmem:[%s2 + $0x50] sm:$0xff]
        %v613 = vld [vmem:[%s2 + $0x58] sm:$0xff]
        %v614 = vld [vmem:[%s2 + $0x60] sm:$0xff]
        %v615 = vld [vmem:[%s2 + $0x68] sm:$0xff]
        %v616 = vld [vmem:[%s2 + $0x70] sm:$0xff]
        %v617 = vld [vmem:[%s2 + $0x78] sm:$0xff]
        %v618 = vld [vmem:[%s2 + $0x80] sm:$0xff]
        %v619 = vld [vmem:[%s2 + $0x88] sm:$0xff]
        %v620 = vld [vmem:[%s2 + $0x90] sm:$0xff]
        %v621 = vld [vmem:[%s2 + $0x98] sm:$0xff]
        %v622 = vld [vmem:[%s2 + $0xa0] sm:$0xff]
        %v623 = vld [vmem:[%s2 + $0xa8] sm:$0xff]
        %v624 = vld [vmem:[%s2 + $0xb0] sm:$0xff]
        %v625 = vld [vmem:[%s2 + $0xb8] sm:$0xff]
        %v626 = vld [vmem:[%s2 + $0xc0] sm:$0xff]
        %v627 = vld [vmem:[%s2 + $0xc8] sm:$0xff]
        %v628 = vld [vmem:[%s2 + $0xd0] sm:$0xff]
        %v629 = vld [vmem:[%s2 + $0xd8] sm:$0xff]
        %v630 = vld [vmem:[%s2 + $0xe0] sm:$0xff]
        %v631 = vld [vmem:[%s2 + $0xe8] sm:$0xff]
        %v632 = vld [vmem:[%s2 + $0xf0] sm:$0xff]
        %v633 = vld [vmem:[%s2 + $0xf8] sm:$0xff]
        %v634 = vld [vmem:[%s2 + $0x100] sm:$0xff]
        %v635 = vld [vmem:[%s2 + $0x108] sm:$0xff]
        %v636 = vld [vmem:[%s2 + $0x110] sm:$0xff]
        %v637 = vld [vmem:[%s2 + $0x118] sm:$0xff]
        %v638 = vld [vmem:[%s2 + $0x120] sm:$0xff]
        %v639 = vld [vmem:[%s2 + $0x128] sm:$0xff]
        %v640 = vld [vmem:[%s2 + $0x130] sm:$0xff]
        %v641 = vld [vmem:[%s2 + $0x138] sm:$0xff]
        %v642 = vld [vmem:[%s2 + $0x140] sm:$0xff]
        %v643 = vld [vmem:[%s2 + $0x148] sm:$0xff]
        %v644 = vld [vmem:[%s2 + $0x150] sm:$0xff]
        %v645 = vld [vmem:[%s2 + $0x158] sm:$0xff]
        %v646 = vld [vmem:[%s2 + $0x160] sm:$0xff]
        %v647 = vld [vmem:[%s2 + $0x168] sm:$0xff]
        %v648 = vld [vmem:[%s2 + $0x170] sm:$0xff]
        %v649 = vld [vmem:[%s2 + $0x178] sm:$0xff]
        %v650 = vld [vmem:[%s2 + $0x180] sm:$0xff]
        %v651 = vld [vmem:[%s2 + $0x188] sm:$0xff]
        %v652 = vld [vmem:[%s2 + $0x190] sm:$0xff]
        %v653 = vld [vmem:[%s2 + $0x198] sm:$0xff]
        %v654 = vld [vmem:[%s2 + $0x1a0] sm:$0xff]
        %v655 = vld [vmem:[%s2 + $0x1a8] sm:$0xff]
        %v656 = vld [vmem:[%s2 + $0x1b0] sm:$0xff]
        %v657 = vld [vmem:[%s2 + $0x1b8] sm:$0xff]
        %v658 = vld [vmem:[%s2 + $0x1c0] sm:$0xff]
        %v659 = vld [vmem:[%s2 + $0x1c8] sm:$0xff]
        %v660 = vld [vmem:[%s2 + $0x1d0] sm:$0xff]
        %v661 = vld [vmem:[%s2 + $0x1d8] sm:$0xff]
        %v662 = vld [vmem:[%s2 + $0x1e0] sm:$0xff]
        %v663 = vld [vmem:[%s2 + $0x1e8] sm:$0xff]
        %v664 = vld [vmem:[%s2 + $0x1f0] sm:$0xff]
        %v665 = vld [vmem:[%s2 + $0x1f8] sm:$0xff]
        %v666 = vld [vmem:[%s2 + $0x200] sm:$0xff]
        %v667 = vld [vmem:[%s2 + $0x208] sm:$0xff]
        %v668 = vld [vmem:[%s2 + $0x210] sm:$0xff]
        %v669 = vld [vmem:[%s2 + $0x218] sm:$0xff]
        %v670 = vld [vmem:[%s2 + $0x220] sm:$0xff]
        %v671 = vld [vmem:[%s2 + $0x228] sm:$0xff]
        %v672 = vld [vmem:[%s2 + $0x230] sm:$0xff]
        %v673 = vld [vmem:[%s2 + $0x238] sm:$0xff]
        %v674 = vld [vmem:[%s2 + $0x240] sm:$0xff]
        %v675 = vld [vmem:[%s2 + $0x248] sm:$0xff]
        %v676 = vld [vmem:[%s2 + $0x250] sm:$0xff]
        %v677 = vld [vmem:[%s2 + $0x258] sm:$0xff]
        %v678 = vld [vmem:[%s2 + $0x260] sm:$0xff]
        %v679 = vld [vmem:[%s2 + $0x268] sm:$0xff]
        %v680 = vld [vmem:[%s2 + $0x270] sm:$0xff]
        %v681 = vld [vmem:[%s2 + $0x278] sm:$0xff]
        %v682 = vld [vmem:[%s2 + $0x280] sm:$0xff]
        %v683 = vld [vmem:[%s2 + $0x288] sm:$0xff]
        %v684 = vld [vmem:[%s2 + $0x290] sm:$0xff]
        %v685 = vld [vmem:[%s2 + $0x298] sm:$0xff]
        %v686 = vld [vmem:[%s2 + $0x2a0] sm:$0xff]
        %v687 = vld [vmem:[%s2 + $0x2a8] sm:$0xff]
        %v688 = vld [vmem:[%s2 + $0x2b0] sm:$0xff]
        %v689 = vld [vmem:[%s2 + $0x2b8] sm:$0xff]
        %v690 = vld [vmem:[%s2 + $0x2c0] sm:$0xff]
        %v691 = vld [vmem:[%s2 + $0x2c8] sm:$0xff]
        %v692 = vld [vmem:[%s2 + $0x2d0] sm:$0xff]
        %v693 = vld [vmem:[%s2 + $0x2d8] sm:$0xff]
        %v694 = vld [vmem:[%s2 + $0x2e0] sm:$0xff]
        %v695 = vld [vmem:[%s2 + $0x2e8] sm:$0xff]
        %v696 = vld [vmem:[%s2 + $0x2f0] sm:$0xff]
        %v697 = vld [vmem:[%s2 + $0x2f8] sm:$0xff]
        %v698 = vld [vmem:[%s2 + $0x300] sm:$0xff]
        %v699 = vld [vmem:[%s2 + $0x308] sm:$0xff]
        %v700 = vld [vmem:[%s2 + $0x310] sm:$0xff]
        %v701 = vld [vmem:[%s2 + $0x318] sm:$0xff]
        %v702 = vld [vmem:[%s2 + $0x320] sm:$0xff]
        %v703 = vld [vmem:[%s2 + $0x328] sm:$0xff]
        %v704 = vld [vmem:[%s2 + $0x330] sm:$0xff]
        %v705 = vld [vmem:[%s2 + $0x338] sm:$0xff]
        %v706 = vld [vmem:[%s2 + $0x340] sm:$0xff]
        %v707 = vld [vmem:[%s2 + $0x348] sm:$0xff]
        %v708 = vld [vmem:[%s2 + $0x350] sm:$0xff]
        %v709 = vld [vmem:[%s2 + $0x358] sm:$0xff]
        %v710 = vld [vmem:[%s2 + $0x360] sm:$0xff]
        %v711 = vld [vmem:[%s2 + $0x368] sm:$0xff]
        %v712 = vld [vmem:[%s2 + $0x370] sm:$0xff]
        %v713 = vld [vmem:[%s2 + $0x378] sm:$0xff]
        %v714 = vld [vmem:[%s2 + $0x380] sm:$0xff]
        %v715 = vld [vmem:[%s2 + $0x388] sm:$0xff]
        %v716 = vld [vmem:[%s2 + $0x390] sm:$0xff]
        %v717 = vld [vmem:[%s2 + $0x398] sm:$0xff]
        %v718 = vld [vmem:[%s2 + $0x3a0] sm:$0xff]
        %v719 = vld [vmem:[%s2 + $0x3a8] sm:$0xff]
        %v720 = vld [vmem:[%s2 + $0x3b0] sm:$0xff]
        %v721 = vld [vmem:[%s2 + $0x3b8] sm:$0xff]
        %v722 = vld [vmem:[%s2 + $0x3c0] sm:$0xff]
        %v723 = vld [vmem:[%s2 + $0x3c8] sm:$0xff]
        %v724 = vld [vmem:[%s2 + $0x3d0] sm:$0xff]
        %v725 = vld [vmem:[%s2 + $0x3d8] sm:$0xff]
        %v726 = vld [vmem:[%s2 + $0x3e0] sm:$0xff]
        %v727 = vld [vmem:[%s2 + $0x3e8] sm:$0xff]
        %v728 = vld [vmem:[%s2 + $0x3f0] sm:$0xff]
        %v729 = vld [vmem:[%s2 + $0x3f8] sm:$0xff]
        %v730 = vld [vmem:[%s3] sm:$0x3]
        %v732 = vlaneseq
        %v733 = vshrl.u32 %v732, 7
        %v734 = vsub.s32 0, %v733
        %v735 = vrot.slane %v730, %v734
        %v736 = vlaneseq
        %v737 = vshrl.u32 %v736, 7
        %v738 = vsub.s32 1, %v737
        %v739 = vrot.slane %v730, %v738
        %v806 = vunpack.c.l.b16 %v538
        %v807 = vunpack.c.h.b16 %v538
        %v808 = vunpack.c.l.b16 %v539
        %v809 = vunpack.c.h.b16 %v539
        %v810 = vunpack.c.l.b16 %v540
        %v811 = vunpack.c.h.b16 %v540
        %v812 = vunpack.c.l.b16 %v541
        %v813 = vunpack.c.h.b16 %v541
        %v814 = vunpack.c.l.b16 %v542
        %v815 = vunpack.c.h.b16 %v542
        %v816 = vunpack.c.l.b16 %v543
        %v817 = vunpack.c.h.b16 %v543
        %v818 = vunpack.c.l.b16 %v544
        %v819 = vunpack.c.h.b16 %v544
        %v820 = vunpack.c.l.b16 %v545
        %v821 = vunpack.c.h.b16 %v545
        %v822 = vunpack.c.l.b16 %v546
        %v823 = vunpack.c.h.b16 %v546
        %v824 = vunpack.c.l.b16 %v547
        %v825 = vunpack.c.h.b16 %v547
        %v826 = vunpack.c.l.b16 %v548
        %v827 = vunpack.c.h.b16 %v548
        %v828 = vunpack.c.l.b16 %v549
        %v829 = vunpack.c.h.b16 %v549
        %v830 = vunpack.c.l.b16 %v550
        %v831 = vunpack.c.h.b16 %v550
        %v832 = vunpack.c.l.b16 %v551
        %v833 = vunpack.c.h.b16 %v551
        %v834 = vunpack.c.l.b16 %v552
        %v835 = vunpack.c.h.b16 %v552
        %v836 = vunpack.c.l.b16 %v553
        %v837 = vunpack.c.h.b16 %v553
        %v838 = vunpack.c.l.b16 %v554
        %v839 = vunpack.c.h.b16 %v554
        %v840 = vunpack.c.l.b16 %v555
        %v841 = vunpack.c.h.b16 %v555
        %v842 = vunpack.c.l.b16 %v556
        %v843 = vunpack.c.h.b16 %v556
        %v844 = vunpack.c.l.b16 %v557
        %v845 = vunpack.c.h.b16 %v557
        %v846 = vunpack.c.l.b16 %v558
        %v847 = vunpack.c.h.b16 %v558
        %v848 = vunpack.c.l.b16 %v559
        %v849 = vunpack.c.h.b16 %v559
        %v850 = vunpack.c.l.b16 %v560
        %v851 = vunpack.c.h.b16 %v560
        %v852 = vunpack.c.l.b16 %v561
        %v853 = vunpack.c.h.b16 %v561
        %v854 = vunpack.c.l.b16 %v562
        %v855 = vunpack.c.h.b16 %v562
        %v856 = vunpack.c.l.b16 %v563
        %v857 = vunpack.c.h.b16 %v563
        %v858 = vunpack.c.l.b16 %v564
        %v859 = vunpack.c.h.b16 %v564
        %v860 = vunpack.c.l.b16 %v565
        %v861 = vunpack.c.h.b16 %v565
        %v862 = vunpack.c.l.b16 %v566
        %v863 = vunpack.c.h.b16 %v566
        %v864 = vunpack.c.l.b16 %v567
        %v865 = vunpack.c.h.b16 %v567
        %v866 = vunpack.c.l.b16 %v568
        %v867 = vunpack.c.h.b16 %v568
        %v868 = vunpack.c.l.b16 %v569
        %v869 = vunpack.c.h.b16 %v569
        %v870 = vunpack.c.l.b16 %v570
        %v871 = vunpack.c.h.b16 %v570
        %v872 = vunpack.c.l.b16 %v571
        %v873 = vunpack.c.h.b16 %v571
        %v874 = vunpack.c.l.b16 %v572
        %v875 = vunpack.c.h.b16 %v572
        %v876 = vunpack.c.l.b16 %v573
        %v877 = vunpack.c.h.b16 %v573
        %v878 = vunpack.c.l.b16 %v574
        %v879 = vunpack.c.h.b16 %v574
        %v880 = vunpack.c.l.b16 %v575
        %v881 = vunpack.c.h.b16 %v575
        %v882 = vunpack.c.l.b16 %v576
        %v883 = vunpack.c.h.b16 %v576
        %v884 = vunpack.c.l.b16 %v577
        %v885 = vunpack.c.h.b16 %v577
        %v886 = vunpack.c.l.b16 %v578
        %v887 = vunpack.c.h.b16 %v578
        %v888 = vunpack.c.l.b16 %v579
        %v889 = vunpack.c.h.b16 %v579
        %v890 = vunpack.c.l.b16 %v580
        %v891 = vunpack.c.h.b16 %v580
        %v892 = vunpack.c.l.b16 %v581
        %v893 = vunpack.c.h.b16 %v581
        %v894 = vunpack.c.l.b16 %v582
        %v895 = vunpack.c.h.b16 %v582
        %v896 = vunpack.c.l.b16 %v583
        %v897 = vunpack.c.h.b16 %v583
        %v898 = vunpack.c.l.b16 %v584
        %v899 = vunpack.c.h.b16 %v584
        %v900 = vunpack.c.l.b16 %v585
        %v901 = vunpack.c.h.b16 %v585
        %v902 = vunpack.c.l.b16 %v586
        %v903 = vunpack.c.h.b16 %v586
        %v904 = vunpack.c.l.b16 %v587
        %v905 = vunpack.c.h.b16 %v587
        %v906 = vunpack.c.l.b16 %v588
        %v907 = vunpack.c.h.b16 %v588
        %v908 = vunpack.c.l.b16 %v589
        %v909 = vunpack.c.h.b16 %v589
        %v910 = vunpack.c.l.b16 %v590
        %v911 = vunpack.c.h.b16 %v590
        %v912 = vunpack.c.l.b16 %v591
        %v913 = vunpack.c.h.b16 %v591
        %v914 = vunpack.c.l.b16 %v592
        %v915 = vunpack.c.h.b16 %v592
        %v916 = vunpack.c.l.b16 %v593
        %v917 = vunpack.c.h.b16 %v593
        %v918 = vunpack.c.l.b16 %v594
        %v919 = vunpack.c.h.b16 %v594
        %v920 = vunpack.c.l.b16 %v595
        %v921 = vunpack.c.h.b16 %v595
        %v922 = vunpack.c.l.b16 %v596
        %v923 = vunpack.c.h.b16 %v596
        %v924 = vunpack.c.l.b16 %v597
        %v925 = vunpack.c.h.b16 %v597
        %v926 = vunpack.c.l.b16 %v598
        %v927 = vunpack.c.h.b16 %v598
        %v928 = vunpack.c.l.b16 %v599
        %v929 = vunpack.c.h.b16 %v599
        %v930 = vunpack.c.l.b16 %v600
        %v931 = vunpack.c.h.b16 %v600
        %v932 = vunpack.c.l.b16 %v601
        %v933 = vunpack.c.h.b16 %v601
        %v934 = vpack.c.b16 %v814, %v806
        %v935 = vpack.c.b16 %v815, %v807
        %v936 = vpack.c.b16 %v816, %v808
        %v937 = vpack.c.b16 %v817, %v809
        %v938 = vpack.c.b16 %v818, %v810
        %v939 = vpack.c.b16 %v819, %v811
        %v940 = vpack.c.b16 %v820, %v812
        %v941 = vpack.c.b16 %v821, %v813
        %v942 = vpack.c.b16 %v830, %v822
        %v943 = vpack.c.b16 %v831, %v823
        %v944 = vpack.c.b16 %v832, %v824
        %v945 = vpack.c.b16 %v833, %v825
        %v946 = vpack.c.b16 %v834, %v826
        %v947 = vpack.c.b16 %v835, %v827
        %v948 = vpack.c.b16 %v836, %v828
        %v949 = vpack.c.b16 %v837, %v829
        %v950 = vpack.c.b16 %v846, %v838
        %v951 = vpack.c.b16 %v847, %v839
        %v952 = vpack.c.b16 %v848, %v840
        %v953 = vpack.c.b16 %v849, %v841
        %v954 = vpack.c.b16 %v850, %v842
        %v955 = vpack.c.b16 %v851, %v843
        %v956 = vpack.c.b16 %v852, %v844
        %v957 = vpack.c.b16 %v853, %v845
        %v958 = vpack.c.b16 %v862, %v854
        %v959 = vpack.c.b16 %v863, %v855
        %v960 = vpack.c.b16 %v864, %v856
        %v961 = vpack.c.b16 %v865, %v857
        %v962 = vpack.c.b16 %v866, %v858
        %v963 = vpack.c.b16 %v867, %v859
        %v964 = vpack.c.b16 %v868, %v860
        %v965 = vpack.c.b16 %v869, %v861
        %v966 = vpack.c.b16 %v878, %v870
        %v967 = vpack.c.b16 %v879, %v871
        %v968 = vpack.c.b16 %v880, %v872
        %v969 = vpack.c.b16 %v881, %v873
        %v970 = vpack.c.b16 %v882, %v874
        %v971 = vpack.c.b16 %v883, %v875
        %v972 = vpack.c.b16 %v884, %v876
        %v973 = vpack.c.b16 %v885, %v877
        %v974 = vpack.c.b16 %v894, %v886
        %v975 = vpack.c.b16 %v895, %v887
        %v976 = vpack.c.b16 %v896, %v888
        %v977 = vpack.c.b16 %v897, %v889
        %v978 = vpack.c.b16 %v898, %v890
        %v979 = vpack.c.b16 %v899, %v891
        %v980 = vpack.c.b16 %v900, %v892
        %v981 = vpack.c.b16 %v901, %v893
        %v982 = vpack.c.b16 %v910, %v902
        %v983 = vpack.c.b16 %v911, %v903
        %v984 = vpack.c.b16 %v912, %v904
        %v985 = vpack.c.b16 %v913, %v905
        %v986 = vpack.c.b16 %v914, %v906
        %v987 = vpack.c.b16 %v915, %v907
        %v988 = vpack.c.b16 %v916, %v908
        %v989 = vpack.c.b16 %v917, %v909
        %v990 = vpack.c.b16 %v926, %v918
        %v991 = vpack.c.b16 %v927, %v919
        %v992 = vpack.c.b16 %v928, %v920
        %v993 = vpack.c.b16 %v929, %v921
        %v994 = vpack.c.b16 %v930, %v922
        %v995 = vpack.c.b16 %v931, %v923
        %v996 = vpack.c.b16 %v932, %v924
        %v997 = vpack.c.b16 %v933, %v925
        %v1190 = vunpack.c.l.b16 %v602
        %v1191 = vunpack.c.h.b16 %v602
        %v1192 = vunpack.c.l.b16 %v603
        %v1193 = vunpack.c.h.b16 %v603
        %v1194 = vunpack.c.l.b16 %v604
        %v1195 = vunpack.c.h.b16 %v604
        %v1196 = vunpack.c.l.b16 %v605
        %v1197 = vunpack.c.h.b16 %v605
        %v1198 = vunpack.c.l.b16 %v606
        %v1199 = vunpack.c.h.b16 %v606
        %v1200 = vunpack.c.l.b16 %v607
        %v1201 = vunpack.c.h.b16 %v607
        %v1202 = vunpack.c.l.b16 %v608
        %v1203 = vunpack.c.h.b16 %v608
        %v1204 = vunpack.c.l.b16 %v609
        %v1205 = vunpack.c.h.b16 %v609
        %v1206 = vunpack.c.l.b16 %v610
        %v1207 = vunpack.c.h.b16 %v610
        %v1208 = vunpack.c.l.b16 %v611
        %v1209 = vunpack.c.h.b16 %v611
        %v1210 = vunpack.c.l.b16 %v612
        %v1211 = vunpack.c.h.b16 %v612
        %v1212 = vunpack.c.l.b16 %v613
        %v1213 = vunpack.c.h.b16 %v613
        %v1214 = vunpack.c.l.b16 %v614
        %v1215 = vunpack.c.h.b16 %v614
        %v1216 = vunpack.c.l.b16 %v615
        %v1217 = vunpack.c.h.b16 %v615
        %v1218 = vunpack.c.l.b16 %v616
        %v1219 = vunpack.c.h.b16 %v616
        %v1220 = vunpack.c.l.b16 %v617
        %v1221 = vunpack.c.h.b16 %v617
        %v1222 = vunpack.c.l.b16 %v618
        %v1223 = vunpack.c.h.b16 %v618
        %v1224 = vunpack.c.l.b16 %v619
        %v1225 = vunpack.c.h.b16 %v619
        %v1226 = vunpack.c.l.b16 %v620
        %v1227 = vunpack.c.h.b16 %v620
        %v1228 = vunpack.c.l.b16 %v621
        %v1229 = vunpack.c.h.b16 %v621
        %v1230 = vunpack.c.l.b16 %v622
        %v1231 = vunpack.c.h.b16 %v622
        %v1232 = vunpack.c.l.b16 %v623
        %v1233 = vunpack.c.h.b16 %v623
        %v1234 = vunpack.c.l.b16 %v624
        %v1235 = vunpack.c.h.b16 %v624
        %v1236 = vunpack.c.l.b16 %v625
        %v1237 = vunpack.c.h.b16 %v625
        %v1238 = vunpack.c.l.b16 %v626
        %v1239 = vunpack.c.h.b16 %v626
        %v1240 = vunpack.c.l.b16 %v627
        %v1241 = vunpack.c.h.b16 %v627
        %v1242 = vunpack.c.l.b16 %v628
        %v1243 = vunpack.c.h.b16 %v628
        %v1244 = vunpack.c.l.b16 %v629
        %v1245 = vunpack.c.h.b16 %v629
        %v1246 = vunpack.c.l.b16 %v630
        %v1247 = vunpack.c.h.b16 %v630
        %v1248 = vunpack.c.l.b16 %v631
        %v1249 = vunpack.c.h.b16 %v631
        %v1250 = vunpack.c.l.b16 %v632
        %v1251 = vunpack.c.h.b16 %v632
        %v1252 = vunpack.c.l.b16 %v633
        %v1253 = vunpack.c.h.b16 %v633
        %v1254 = vunpack.c.l.b16 %v634
        %v1255 = vunpack.c.h.b16 %v634
        %v1256 = vunpack.c.l.b16 %v635
        %v1257 = vunpack.c.h.b16 %v635
        %v1258 = vunpack.c.l.b16 %v636
        %v1259 = vunpack.c.h.b16 %v636
        %v1260 = vunpack.c.l.b16 %v637
        %v1261 = vunpack.c.h.b16 %v637
        %v1262 = vunpack.c.l.b16 %v638
        %v1263 = vunpack.c.h.b16 %v638
        %v1264 = vunpack.c.l.b16 %v639
        %v1265 = vunpack.c.h.b16 %v639
        %v1266 = vunpack.c.l.b16 %v640
        %v1267 = vunpack.c.h.b16 %v640
        %v1268 = vunpack.c.l.b16 %v641
        %v1269 = vunpack.c.h.b16 %v641
        %v1270 = vunpack.c.l.b16 %v642
        %v1271 = vunpack.c.h.b16 %v642
        %v1272 = vunpack.c.l.b16 %v643
        %v1273 = vunpack.c.h.b16 %v643
        %v1274 = vunpack.c.l.b16 %v644
        %v1275 = vunpack.c.h.b16 %v644
        %v1276 = vunpack.c.l.b16 %v645
        %v1277 = vunpack.c.h.b16 %v645
        %v1278 = vunpack.c.l.b16 %v646
        %v1279 = vunpack.c.h.b16 %v646
        %v1280 = vunpack.c.l.b16 %v647
        %v1281 = vunpack.c.h.b16 %v647
        %v1282 = vunpack.c.l.b16 %v648
        %v1283 = vunpack.c.h.b16 %v648
        %v1284 = vunpack.c.l.b16 %v649
        %v1285 = vunpack.c.h.b16 %v649
        %v1286 = vunpack.c.l.b16 %v650
        %v1287 = vunpack.c.h.b16 %v650
        %v1288 = vunpack.c.l.b16 %v651
        %v1289 = vunpack.c.h.b16 %v651
        %v1290 = vunpack.c.l.b16 %v652
        %v1291 = vunpack.c.h.b16 %v652
        %v1292 = vunpack.c.l.b16 %v653
        %v1293 = vunpack.c.h.b16 %v653
        %v1294 = vunpack.c.l.b16 %v654
        %v1295 = vunpack.c.h.b16 %v654
        %v1296 = vunpack.c.l.b16 %v655
        %v1297 = vunpack.c.h.b16 %v655
        %v1298 = vunpack.c.l.b16 %v656
        %v1299 = vunpack.c.h.b16 %v656
        %v1300 = vunpack.c.l.b16 %v657
        %v1301 = vunpack.c.h.b16 %v657
        %v1302 = vunpack.c.l.b16 %v658
        %v1303 = vunpack.c.h.b16 %v658
        %v1304 = vunpack.c.l.b16 %v659
        %v1305 = vunpack.c.h.b16 %v659
        %v1306 = vunpack.c.l.b16 %v660
        %v1307 = vunpack.c.h.b16 %v660
        %v1308 = vunpack.c.l.b16 %v661
        %v1309 = vunpack.c.h.b16 %v661
        %v1310 = vunpack.c.l.b16 %v662
        %v1311 = vunpack.c.h.b16 %v662
        %v1312 = vunpack.c.l.b16 %v663
        %v1313 = vunpack.c.h.b16 %v663
        %v1314 = vunpack.c.l.b16 %v664
        %v1315 = vunpack.c.h.b16 %v664
        %v1316 = vunpack.c.l.b16 %v665
        %v1317 = vunpack.c.h.b16 %v665
        %v1318 = vunpack.c.l.b16 %v666
        %v1319 = vunpack.c.h.b16 %v666
        %v1320 = vunpack.c.l.b16 %v667
        %v1321 = vunpack.c.h.b16 %v667
        %v1322 = vunpack.c.l.b16 %v668
        %v1323 = vunpack.c.h.b16 %v668
        %v1324 = vunpack.c.l.b16 %v669
        %v1325 = vunpack.c.h.b16 %v669
        %v1326 = vunpack.c.l.b16 %v670
        %v1327 = vunpack.c.h.b16 %v670
        %v1328 = vunpack.c.l.b16 %v671
        %v1329 = vunpack.c.h.b16 %v671
        %v1330 = vunpack.c.l.b16 %v672
        %v1331 = vunpack.c.h.b16 %v672
        %v1332 = vunpack.c.l.b16 %v673
        %v1333 = vunpack.c.h.b16 %v673
        %v1334 = vunpack.c.l.b16 %v674
        %v1335 = vunpack.c.h.b16 %v674
        %v1336 = vunpack.c.l.b16 %v675
        %v1337 = vunpack.c.h.b16 %v675
        %v1338 = vunpack.c.l.b16 %v676
        %v1339 = vunpack.c.h.b16 %v676
        %v1340 = vunpack.c.l.b16 %v677
        %v1341 = vunpack.c.h.b16 %v677
        %v1342 = vunpack.c.l.b16 %v678
        %v1343 = vunpack.c.h.b16 %v678
        %v1344 = vunpack.c.l.b16 %v679
        %v1345 = vunpack.c.h.b16 %v679
        %v1346 = vunpack.c.l.b16 %v680
        %v1347 = vunpack.c.h.b16 %v680
        %v1348 = vunpack.c.l.b16 %v681
        %v1349 = vunpack.c.h.b16 %v681
        %v1350 = vunpack.c.l.b16 %v682
        %v1351 = vunpack.c.h.b16 %v682
        %v1352 = vunpack.c.l.b16 %v683
        %v1353 = vunpack.c.h.b16 %v683
        %v1354 = vunpack.c.l.b16 %v684
        %v1355 = vunpack.c.h.b16 %v684
        %v1356 = vunpack.c.l.b16 %v685
        %v1357 = vunpack.c.h.b16 %v685
        %v1358 = vunpack.c.l.b16 %v686
        %v1359 = vunpack.c.h.b16 %v686
        %v1360 = vunpack.c.l.b16 %v687
        %v1361 = vunpack.c.h.b16 %v687
        %v1362 = vunpack.c.l.b16 %v688
        %v1363 = vunpack.c.h.b16 %v688
        %v1364 = vunpack.c.l.b16 %v689
        %v1365 = vunpack.c.h.b16 %v689
        %v1366 = vunpack.c.l.b16 %v690
        %v1367 = vunpack.c.h.b16 %v690
        %v1368 = vunpack.c.l.b16 %v691
        %v1369 = vunpack.c.h.b16 %v691
        %v1370 = vunpack.c.l.b16 %v692
        %v1371 = vunpack.c.h.b16 %v692
        %v1372 = vunpack.c.l.b16 %v693
        %v1373 = vunpack.c.h.b16 %v693
        %v1374 = vunpack.c.l.b16 %v694
        %v1375 = vunpack.c.h.b16 %v694
        %v1376 = vunpack.c.l.b16 %v695
        %v1377 = vunpack.c.h.b16 %v695
        %v1378 = vunpack.c.l.b16 %v696
        %v1379 = vunpack.c.h.b16 %v696
        %v1380 = vunpack.c.l.b16 %v697
        %v1381 = vunpack.c.h.b16 %v697
        %v1382 = vunpack.c.l.b16 %v698
        %v1383 = vunpack.c.h.b16 %v698
        %v1384 = vunpack.c.l.b16 %v699
        %v1385 = vunpack.c.h.b16 %v699
        %v1386 = vunpack.c.l.b16 %v700
        %v1387 = vunpack.c.h.b16 %v700
        %v1388 = vunpack.c.l.b16 %v701
        %v1389 = vunpack.c.h.b16 %v701
        %v1390 = vunpack.c.l.b16 %v702
        %v1391 = vunpack.c.h.b16 %v702
        %v1392 = vunpack.c.l.b16 %v703
        %v1393 = vunpack.c.h.b16 %v703
        %v1394 = vunpack.c.l.b16 %v704
        %v1395 = vunpack.c.h.b16 %v704
        %v1396 = vunpack.c.l.b16 %v705
        %v1397 = vunpack.c.h.b16 %v705
        %v1398 = vunpack.c.l.b16 %v706
        %v1399 = vunpack.c.h.b16 %v706
        %v1400 = vunpack.c.l.b16 %v707
        %v1401 = vunpack.c.h.b16 %v707
        %v1402 = vunpack.c.l.b16 %v708
        %v1403 = vunpack.c.h.b16 %v708
        %v1404 = vunpack.c.l.b16 %v709
        %v1405 = vunpack.c.h.b16 %v709
        %v1406 = vunpack.c.l.b16 %v710
        %v1407 = vunpack.c.h.b16 %v710
        %v1408 = vunpack.c.l.b16 %v711
        %v1409 = vunpack.c.h.b16 %v711
        %v1410 = vunpack.c.l.b16 %v712
        %v1411 = vunpack.c.h.b16 %v712
        %v1412 = vunpack.c.l.b16 %v713
        %v1413 = vunpack.c.h.b16 %v713
        %v1414 = vunpack.c.l.b16 %v714
        %v1415 = vunpack.c.h.b16 %v714
        %v1416 = vunpack.c.l.b16 %v715
        %v1417 = vunpack.c.h.b16 %v715
        %v1418 = vunpack.c.l.b16 %v716
        %v1419 = vunpack.c.h.b16 %v716
        %v1420 = vunpack.c.l.b16 %v717
        %v1421 = vunpack.c.h.b16 %v717
        %v1422 = vunpack.c.l.b16 %v718
        %v1423 = vunpack.c.h.b16 %v718
        %v1424 = vunpack.c.l.b16 %v719
        %v1425 = vunpack.c.h.b16 %v719
        %v1426 = vunpack.c.l.b16 %v720
        %v1427 = vunpack.c.h.b16 %v720
        %v1428 = vunpack.c.l.b16 %v721
        %v1429 = vunpack.c.h.b16 %v721
        %v1430 = vunpack.c.l.b16 %v722
        %v1431 = vunpack.c.h.b16 %v722
        %v1432 = vunpack.c.l.b16 %v723
        %v1433 = vunpack.c.h.b16 %v723
        %v1434 = vunpack.c.l.b16 %v724
        %v1435 = vunpack.c.h.b16 %v724
        %v1436 = vunpack.c.l.b16 %v725
        %v1437 = vunpack.c.h.b16 %v725
        %v1438 = vunpack.c.l.b16 %v726
        %v1439 = vunpack.c.h.b16 %v726
        %v1440 = vunpack.c.l.b16 %v727
        %v1441 = vunpack.c.h.b16 %v727
        %v1442 = vunpack.c.l.b16 %v728
        %v1443 = vunpack.c.h.b16 %v728
        %v1444 = vunpack.c.l.b16 %v729
        %v1445 = vunpack.c.h.b16 %v729
        %v1446 = vpack.c.b16 %v1192, %v1190
        %v1447 = vpack.c.b16 %v1193, %v1191
        %v1448 = vpack.c.b16 %v1196, %v1194
        %v1449 = vpack.c.b16 %v1197, %v1195
        %v1450 = vpack.c.b16 %v1200, %v1198
        %v1451 = vpack.c.b16 %v1201, %v1199
        %v1452 = vpack.c.b16 %v1204, %v1202
        %v1453 = vpack.c.b16 %v1205, %v1203
        %v1454 = vpack.c.b16 %v1208, %v1206
        %v1455 = vpack.c.b16 %v1209, %v1207
        %v1456 = vpack.c.b16 %v1212, %v1210
        %v1457 = vpack.c.b16 %v1213, %v1211
        %v1458 = vpack.c.b16 %v1216, %v1214
        %v1459 = vpack.c.b16 %v1217, %v1215
        %v1460 = vpack.c.b16 %v1220, %v1218
        %v1461 = vpack.c.b16 %v1221, %v1219
        %v1462 = vpack.c.b16 %v1224, %v1222
        %v1463 = vpack.c.b16 %v1225, %v1223
        %v1464 = vpack.c.b16 %v1228, %v1226
        %v1465 = vpack.c.b16 %v1229, %v1227
        %v1466 = vpack.c.b16 %v1232, %v1230
        %v1467 = vpack.c.b16 %v1233, %v1231
        %v1468 = vpack.c.b16 %v1236, %v1234
        %v1469 = vpack.c.b16 %v1237, %v1235
        %v1470 = vpack.c.b16 %v1240, %v1238
        %v1471 = vpack.c.b16 %v1241, %v1239
        %v1472 = vpack.c.b16 %v1244, %v1242
        %v1473 = vpack.c.b16 %v1245, %v1243
        %v1474 = vpack.c.b16 %v1248, %v1246
        %v1475 = vpack.c.b16 %v1249, %v1247
        %v1476 = vpack.c.b16 %v1252, %v1250
        %v1477 = vpack.c.b16 %v1253, %v1251
        %v1478 = vpack.c.b16 %v1256, %v1254
        %v1479 = vpack.c.b16 %v1257, %v1255
        %v1480 = vpack.c.b16 %v1260, %v1258
        %v1481 = vpack.c.b16 %v1261, %v1259
        %v1482 = vpack.c.b16 %v1264, %v1262
        %v1483 = vpack.c.b16 %v1265, %v1263
        %v1484 = vpack.c.b16 %v1268, %v1266
        %v1485 = vpack.c.b16 %v1269, %v1267
        %v1486 = vpack.c.b16 %v1272, %v1270
        %v1487 = vpack.c.b16 %v1273, %v1271
        %v1488 = vpack.c.b16 %v1276, %v1274
        %v1489 = vpack.c.b16 %v1277, %v1275
        %v1490 = vpack.c.b16 %v1280, %v1278
        %v1491 = vpack.c.b16 %v1281, %v1279
        %v1492 = vpack.c.b16 %v1284, %v1282
        %v1493 = vpack.c.b16 %v1285, %v1283
        %v1494 = vpack.c.b16 %v1288, %v1286
        %v1495 = vpack.c.b16 %v1289, %v1287
        %v1496 = vpack.c.b16 %v1292, %v1290
        %v1497 = vpack.c.b16 %v1293, %v1291
        %v1498 = vpack.c.b16 %v1296, %v1294
        %v1499 = vpack.c.b16 %v1297, %v1295
        %v1500 = vpack.c.b16 %v1300, %v1298
        %v1501 = vpack.c.b16 %v1301, %v1299
        %v1502 = vpack.c.b16 %v1304, %v1302
        %v1503 = vpack.c.b16 %v1305, %v1303
        %v1504 = vpack.c.b16 %v1308, %v1306
        %v1505 = vpack.c.b16 %v1309, %v1307
        %v1506 = vpack.c.b16 %v1312, %v1310
        %v1507 = vpack.c.b16 %v1313, %v1311
        %v1508 = vpack.c.b16 %v1316, %v1314
        %v1509 = vpack.c.b16 %v1317, %v1315
        %v1510 = vpack.c.b16 %v1320, %v1318
        %v1511 = vpack.c.b16 %v1321, %v1319
        %v1512 = vpack.c.b16 %v1324, %v1322
        %v1513 = vpack.c.b16 %v1325, %v1323
        %v1514 = vpack.c.b16 %v1328, %v1326
        %v1515 = vpack.c.b16 %v1329, %v1327
        %v1516 = vpack.c.b16 %v1332, %v1330
        %v1517 = vpack.c.b16 %v1333, %v1331
        %v1518 = vpack.c.b16 %v1336, %v1334
        %v1519 = vpack.c.b16 %v1337, %v1335
        %v1520 = vpack.c.b16 %v1340, %v1338
        %v1521 = vpack.c.b16 %v1341, %v1339
        %v1522 = vpack.c.b16 %v1344, %v1342
        %v1523 = vpack.c.b16 %v1345, %v1343
        %v1524 = vpack.c.b16 %v1348, %v1346
        %v1525 = vpack.c.b16 %v1349, %v1347
        %v1526 = vpack.c.b16 %v1352, %v1350
        %v1527 = vpack.c.b16 %v1353, %v1351
        %v1528 = vpack.c.b16 %v1356, %v1354
        %v1529 = vpack.c.b16 %v1357, %v1355
        %v1530 = vpack.c.b16 %v1360, %v1358
        %v1531 = vpack.c.b16 %v1361, %v1359
        %v1532 = vpack.c.b16 %v1364, %v1362
        %v1533 = vpack.c.b16 %v1365, %v1363
        %v1534 = vpack.c.b16 %v1368, %v1366
        %v1535 = vpack.c.b16 %v1369, %v1367
        %v1536 = vpack.c.b16 %v1372, %v1370
        %v1537 = vpack.c.b16 %v1373, %v1371
        %v1538 = vpack.c.b16 %v1376, %v1374
        %v1539 = vpack.c.b16 %v1377, %v1375
        %v1540 = vpack.c.b16 %v1380, %v1378
        %v1541 = vpack.c.b16 %v1381, %v1379
        %v1542 = vpack.c.b16 %v1384, %v1382
        %v1543 = vpack.c.b16 %v1385, %v1383
        %v1544 = vpack.c.b16 %v1388, %v1386
        %v1545 = vpack.c.b16 %v1389, %v1387
        %v1546 = vpack.c.b16 %v1392, %v1390
        %v1547 = vpack.c.b16 %v1393, %v1391
        %v1548 = vpack.c.b16 %v1396, %v1394
        %v1549 = vpack.c.b16 %v1397, %v1395
        %v1550 = vpack.c.b16 %v1400, %v1398
        %v1551 = vpack.c.b16 %v1401, %v1399
        %v1552 = vpack.c.b16 %v1404, %v1402
        %v1553 = vpack.c.b16 %v1405, %v1403
        %v1554 = vpack.c.b16 %v1408, %v1406
        %v1555 = vpack.c.b16 %v1409, %v1407
        %v1556 = vpack.c.b16 %v1412, %v1410
        %v1557 = vpack.c.b16 %v1413, %v1411
        %v1558 = vpack.c.b16 %v1416, %v1414
        %v1559 = vpack.c.b16 %v1417, %v1415
        %v1560 = vpack.c.b16 %v1420, %v1418
        %v1561 = vpack.c.b16 %v1421, %v1419
        %v1562 = vpack.c.b16 %v1424, %v1422
        %v1563 = vpack.c.b16 %v1425, %v1423
        %v1564 = vpack.c.b16 %v1428, %v1426
        %v1565 = vpack.c.b16 %v1429, %v1427
        %v1566 = vpack.c.b16 %v1432, %v1430
        %v1567 = vpack.c.b16 %v1433, %v1431
        %v1568 = vpack.c.b16 %v1436, %v1434
        %v1569 = vpack.c.b16 %v1437, %v1435
        %v1570 = vpack.c.b16 %v1440, %v1438
        %v1571 = vpack.c.b16 %v1441, %v1439
        %v1572 = vpack.c.b16 %v1444, %v1442
        %v1573 = vpack.c.b16 %v1445, %v1443
        %1702 = vmatprep.subr.bf16.mxu0 %v1447
        %1703 = vmatpush1.bf16.msra.mxu0 %v1446
        %1704 = vmatprep.subr.bf16.mxu0 %v1449
        %1705 = vmatpush1.bf16.msra.mxu0 %v1448
        %1706 = vmatprep.subr.bf16.mxu0 %v1451
        %1707 = vmatpush1.bf16.msra.mxu0 %v1450
        %1708 = vmatprep.subr.bf16.mxu0 %v1453
        %1709 = vmatpush1.bf16.msra.mxu0 %v1452
        %1710 = vmatprep.subr.bf16.mxu0 %v1455
        %1711 = vmatpush1.bf16.msra.mxu0 %v1454
        %1712 = vmatprep.subr.bf16.mxu0 %v1457
        %1713 = vmatpush1.bf16.msra.mxu0 %v1456
        %1714 = vmatprep.subr.bf16.mxu0 %v1459
        %1715 = vmatpush1.bf16.msra.mxu0 %v1458
        %1716 = vmatprep.subr.bf16.mxu0 %v1461
        %1717 = vmatpush1.bf16.msra.mxu0 %v1460
        %1718 = vmatprep.subr.bf16.mxu0 %v1463
        %1719 = vmatpush1.bf16.msra.mxu0 %v1462
        %1720 = vmatprep.subr.bf16.mxu0 %v1465
        %1721 = vmatpush1.bf16.msra.mxu0 %v1464
        %1722 = vmatprep.subr.bf16.mxu0 %v1467
        %1723 = vmatpush1.bf16.msra.mxu0 %v1466
        %1724 = vmatprep.subr.bf16.mxu0 %v1469
        %1725 = vmatpush1.bf16.msra.mxu0 %v1468
        %1726 = vmatprep.subr.bf16.mxu0 %v1471
        %1727 = vmatpush1.bf16.msra.mxu0 %v1470
        %1728 = vmatprep.subr.bf16.mxu0 %v1473
        %1729 = vmatpush1.bf16.msra.mxu0 %v1472
        %1730 = vmatprep.subr.bf16.mxu0 %v1475
        %1731 = vmatpush1.bf16.msra.mxu0 %v1474
        %1732 = vmatprep.subr.bf16.mxu0 %v1477
        %1733 = vmatpush1.bf16.msra.mxu0 %v1476
        %1734 = vmatprep.mubr.bf16.mxu0 %v935
        %1735 = vmatmul.mubr.bf16.gmra.mrb[0].mxu0 %v934
        %v1736 = vpop.f32.mrb[0].mxu0
        %v1737 = vadd.f32 %v735, %v1736
        %v1738 = vpop.f32.mrb[0].mxu0
        %v1739 = vadd.f32 %v739, %v1738
        %v1740 = vpop.f32.mrb[0].mxu0
        %v1741 = vadd.f32 %v735, %v1740
        %v1742 = vpop.f32.mrb[0].mxu0
        %v1743 = vadd.f32 %v739, %v1742
        %1744 = vmatprep.mubr.bf16.mxu0 %v943
        %1745 = vmatmul.mubr.bf16.gmra.mrb[0].mxu0 %v942
        %v1746 = vpop.f32.mrb[0].mxu0
        %v1747 = vadd.f32 %v735, %v1746
        %v1748 = vpop.f32.mrb[0].mxu0
        %v1749 = vadd.f32 %v739, %v1748
        %v1750 = vpop.f32.mrb[0].mxu0
        %v1751 = vadd.f32 %v735, %v1750
        %v1752 = vpop.f32.mrb[0].mxu0
        %v1753 = vadd.f32 %v739, %v1752
        %1754 = vmatprep.mubr.bf16.mxu0 %v951
        %1755 = vmatmul.mubr.bf16.gmra.mrb[0].mxu0 %v950
        %v1756 = vpop.f32.mrb[0].mxu0
        %v1757 = vadd.f32 %v735, %v1756
        %v1758 = vpop.f32.mrb[0].mxu0
        %v1759 = vadd.f32 %v739, %v1758
        %v1760 = vpop.f32.mrb[0].mxu0
        %v1761 = vadd.f32 %v735, %v1760
        %v1762 = vpop.f32.mrb[0].mxu0
        %v1763 = vadd.f32 %v739, %v1762
        %1764 = vmatprep.mubr.bf16.mxu0 %v959
        %1765 = vmatmul.mubr.bf16.gmra.mrb[0].mxu0 %v958
        %v1766 = vpop.f32.mrb[0].mxu0
        %v1767 = vadd.f32 %v735, %v1766
        %v1768 = vpop.f32.mrb[0].mxu0
        %v1769 = vadd.f32 %v739, %v1768
        %v1770 = vpop.f32.mrb[0].mxu0
        %v1771 = vadd.f32 %v735, %v1770
        %v1772 = vpop.f32.mrb[0].mxu0
        %v1773 = vadd.f32 %v739, %v1772
        %1774 = vmatprep.mubr.bf16.mxu0 %v967
        %1775 = vmatmul.mubr.bf16.gmra.mrb[0].mxu0 %v966
        %v1776 = vpop.f32.mrb[0].mxu0
        %v1777 = vadd.f32 %v735, %v1776
        %v1778 = vpop.f32.mrb[0].mxu0
        %v1779 = vadd.f32 %v739, %v1778
        %v1780 = vpop.f32.mrb[0].mxu0
        %v1781 = vadd.f32 %v735, %v1780
        %v1782 = vpop.f32.mrb[0].mxu0
        %v1783 = vadd.f32 %v739, %v1782
        %1784 = vmatprep.mubr.bf16.mxu0 %v975
        %1785 = vmatmul.mubr.bf16.gmra.mrb[0].mxu0 %v974
        %v1786 = vpop.f32.mrb[0].mxu0
        %v1787 = vadd.f32 %v735, %v1786
        %v1788 = vpop.f32.mrb[0].mxu0
        %v1789 = vadd.f32 %v739, %v1788
        %v1790 = vpop.f32.mrb[0].mxu0
        %v1791 = vadd.f32 %v735, %v1790
        %v1792 = vpop.f32.mrb[0].mxu0
        %v1793 = vadd.f32 %v739, %v1792
        %1794 = vmatprep.mubr.bf16.mxu0 %v983
        %1795 = vmatmul.mubr.bf16.gmra.mrb[0].mxu0 %v982
        %v1796 = vpop.f32.mrb[0].mxu0
        %v1797 = vadd.f32 %v735, %v1796
        %v1798 = vpop.f32.mrb[0].mxu0
        %v1799 = vadd.f32 %v739, %v1798
        %v1800 = vpop.f32.mrb[0].mxu0
        %v1801 = vadd.f32 %v735, %v1800
        %v1802 = vpop.f32.mrb[0].mxu0
        %v1803 = vadd.f32 %v739, %v1802
        %1804 = vmatprep.mubr.bf16.mxu0 %v991
        %1805 = vmatmul.mubr.bf16.gmra.mrb[0].mxu0 %v990
        %v1806 = vpop.f32.mrb[0].mxu0
        %v1807 = vadd.f32 %v735, %v1806
        %v1808 = vpop.f32.mrb[0].mxu0
        %v1809 = vadd.f32 %v739, %v1808
        %v1810 = vpop.f32.mrb[0].mxu0
        %v1811 = vadd.f32 %v735, %v1810
        %v1812 = vpop.f32.mrb[0].mxu0
        %v1813 = vadd.f32 %v739, %v1812
        %1814 = vdwg.mxu0
        %1815 = vmatprep.subr.bf16.mxu0 %v1479
        %1816 = vmatpush1.bf16.msra.mxu0 %v1478
        %1817 = vmatprep.subr.bf16.mxu0 %v1481
        %1818 = vmatpush1.bf16.msra.mxu0 %v1480
        %1819 = vmatprep.subr.bf16.mxu0 %v1483
        %1820 = vmatpush1.bf16.msra.mxu0 %v1482
        %1821 = vmatprep.subr.bf16.mxu0 %v1485
        %1822 = vmatpush1.bf16.msra.mxu0 %v1484
        %1823 = vmatprep.subr.bf16.mxu0 %v1487
        %1824 = vmatpush1.bf16.msra.mxu0 %v1486
        %1825 = vmatprep.subr.bf16.mxu0 %v1489
        %1826 = vmatpush1.bf16.msra.mxu0 %v1488
        %1827 = vmatprep.subr.bf16.mxu0 %v1491
        %1828 = vmatpush1.bf16.msra.mxu0 %v1490
        %1829 = vmatprep.subr.bf16.mxu0 %v1493
        %1830 = vmatpush1.bf16.msra.mxu0 %v1492
        %1831 = vmatprep.subr.bf16.mxu0 %v1495
        %1832 = vmatpush1.bf16.msra.mxu0 %v1494
        %1833 = vmatprep.subr.bf16.mxu0 %v1497
        %1834 = vmatpush1.bf16.msra.mxu0 %v1496
        %1835 = vmatprep.subr.bf16.mxu0 %v1499
        %1836 = vmatpush1.bf16.msra.mxu0 %v1498
        %1837 = vmatprep.subr.bf16.mxu0 %v1501
        %1838 = vmatpush1.bf16.msra.mxu0 %v1500
        %1839 = vmatprep.subr.bf16.mxu0 %v1503
        %1840 = vmatpush1.bf16.msra.mxu0 %v1502
        %1841 = vmatprep.subr.bf16.mxu0 %v1505
        %1842 = vmatpush1.bf16.msra.mxu0 %v1504
        %1843 = vmatprep.subr.bf16.mxu0 %v1507
        %1844 = vmatpush1.bf16.msra.mxu0 %v1506
        %1845 = vmatprep.subr.bf16.mxu0 %v1509
        %1846 = vmatpush1.bf16.msra.mxu0 %v1508
        %1847 = vmatprep.mubr.bf16.mxu0 %v937
        %1848 = vmatmul.mubr.bf16.gmra.mrb[0].mxu0 %v936
        %v1849 = vpop.f32.mrb[0].mxu0
        %v1850 = vadd.f32 %v1737, %v1849
        %v1851 = vpop.f32.mrb[0].mxu0
        %v1852 = vadd.f32 %v1739, %v1851
        %v1853 = vpop.f32.mrb[0].mxu0
        %v1854 = vadd.f32 %v1741, %v1853
        %v1855 = vpop.f32.mrb[0].mxu0
        %v1856 = vadd.f32 %v1743, %v1855
        %1857 = vmatprep.mubr.bf16.mxu0 %v945
        %1858 = vmatmul.mubr.bf16.gmra.mrb[0].mxu0 %v944
        %v1859 = vpop.f32.mrb[0].mxu0
        %v1860 = vadd.f32 %v1747, %v1859
        %v1861 = vpop.f32.mrb[0].mxu0
        %v1862 = vadd.f32 %v1749, %v1861
        %v1863 = vpop.f32.mrb[0].mxu0
        %v1864 = vadd.f32 %v1751, %v1863
        %v1865 = vpop.f32.mrb[0].mxu0
        %v1866 = vadd.f32 %v1753, %v1865
        %1867 = vmatprep.mubr.bf16.mxu0 %v953
        %1868 = vmatmul.mubr.bf16.gmra.mrb[0].mxu0 %v952
        %v1869 = vpop.f32.mrb[0].mxu0
        %v1870 = vadd.f32 %v1757, %v1869
        %v1871 = vpop.f32.mrb[0].mxu0
        %v1872 = vadd.f32 %v1759, %v1871
        %v1873 = vpop.f32.mrb[0].mxu0
        %v1874 = vadd.f32 %v1761, %v1873
        %v1875 = vpop.f32.mrb[0].mxu0
        %v1876 = vadd.f32 %v1763, %v1875
        %1877 = vmatprep.mubr.bf16.mxu0 %v961
        %1878 = vmatmul.mubr.bf16.gmra.mrb[0].mxu0 %v960
        %v1879 = vpop.f32.mrb[0].mxu0
        %v1880 = vadd.f32 %v1767, %v1879
        %v1881 = vpop.f32.mrb[0].mxu0
        %v1882 = vadd.f32 %v1769, %v1881
        %v1883 = vpop.f32.mrb[0].mxu0
        %v1884 = vadd.f32 %v1771, %v1883
        %v1885 = vpop.f32.mrb[0].mxu0
        %v1886 = vadd.f32 %v1773, %v1885
        %1887 = vmatprep.mubr.bf16.mxu0 %v969
        %1888 = vmatmul.mubr.bf16.gmra.mrb[0].mxu0 %v968
        %v1889 = vpop.f32.mrb[0].mxu0
        %v1890 = vadd.f32 %v1777, %v1889
        %v1891 = vpop.f32.mrb[0].mxu0
        %v1892 = vadd.f32 %v1779, %v1891
        %v1893 = vpop.f32.mrb[0].mxu0
        %v1894 = vadd.f32 %v1781, %v1893
        %v1895 = vpop.f32.mrb[0].mxu0
        %v1896 = vadd.f32 %v1783, %v1895
        %1897 = vmatprep.mubr.bf16.mxu0 %v977
        %1898 = vmatmul.mubr.bf16.gmra.mrb[0].mxu0 %v976
        %v1899 = vpop.f32.mrb[0].mxu0
        %v1900 = vadd.f32 %v1787, %v1899
        %v1901 = vpop.f32.mrb[0].mxu0
        %v1902 = vadd.f32 %v1789, %v1901
        %v1903 = vpop.f32.mrb[0].mxu0
        %v1904 = vadd.f32 %v1791, %v1903
        %v1905 = vpop.f32.mrb[0].mxu0
        %v1906 = vadd.f32 %v1793, %v1905
        %1907 = vmatprep.mubr.bf16.mxu0 %v985
        %1908 = vmatmul.mubr.bf16.gmra.mrb[0].mxu0 %v984
        %v1909 = vpop.f32.mrb[0].mxu0
        %v1910 = vadd.f32 %v1797, %v1909
        %v1911 = vpop.f32.mrb[0].mxu0
        %v1912 = vadd.f32 %v1799, %v1911
        %v1913 = vpop.f32.mrb[0].mxu0
        %v1914 = vadd.f32 %v1801, %v1913
        %v1915 = vpop.f32.mrb[0].mxu0
        %v1916 = vadd.f32 %v1803, %v1915
        %1917 = vmatprep.mubr.bf16.mxu0 %v993
        %1918 = vmatmul.mubr.bf16.gmra.mrb[0].mxu0 %v992
        %v1919 = vpop.f32.mrb[0].mxu0
        %v1920 = vadd.f32 %v1807, %v1919
        %v1921 = vpop.f32.mrb[0].mxu0
        %v1922 = vadd.f32 %v1809, %v1921
        %v1923 = vpop.f32.mrb[0].mxu0
        %v1924 = vadd.f32 %v1811, %v1923
        %v1925 = vpop.f32.mrb[0].mxu0
        %v1926 = vadd.f32 %v1813, %v1925
        %1927 = vdwg.mxu0
        %1928 = vmatprep.subr.bf16.mxu0 %v1511
        %1929 = vmatpush1.bf16.msra.mxu0 %v1510
        %1930 = vmatprep.subr.bf16.mxu0 %v1513
        %1931 = vmatpush1.bf16.msra.mxu0 %v1512
        %1932 = vmatprep.subr.bf16.mxu0 %v1515
        %1933 = vmatpush1.bf16.msra.mxu0 %v1514
        %1934 = vmatprep.subr.bf16.mxu0 %v1517
        %1935 = vmatpush1.bf16.msra.mxu0 %v1516
        %1936 = vmatprep.subr.bf16.mxu0 %v1519
        %1937 = vmatpush1.bf16.msra.mxu0 %v1518
        %1938 = vmatprep.subr.bf16.mxu0 %v1521
        %1939 = vmatpush1.bf16.msra.mxu0 %v1520
        %1940 = vmatprep.subr.bf16.mxu0 %v1523
        %1941 = vmatpush1.bf16.msra.mxu0 %v1522
        %1942 = vmatprep.subr.bf16.mxu0 %v1525
        %1943 = vmatpush1.bf16.msra.mxu0 %v1524
        %1944 = vmatprep.subr.bf16.mxu0 %v1527
        %1945 = vmatpush1.bf16.msra.mxu0 %v1526
        %1946 = vmatprep.subr.bf16.mxu0 %v1529
        %1947 = vmatpush1.bf16.msra.mxu0 %v1528
        %1948 = vmatprep.subr.bf16.mxu0 %v1531
        %1949 = vmatpush1.bf16.msra.mxu0 %v1530
        %1950 = vmatprep.subr.bf16.mxu0 %v1533
        %1951 = vmatpush1.bf16.msra.mxu0 %v1532
        %1952 = vmatprep.subr.bf16.mxu0 %v1535
        %1953 = vmatpush1.bf16.msra.mxu0 %v1534
        %1954 = vmatprep.subr.bf16.mxu0 %v1537
        %1955 = vmatpush1.bf16.msra.mxu0 %v1536
        %1956 = vmatprep.subr.bf16.mxu0 %v1539
        %1957 = vmatpush1.bf16.msra.mxu0 %v1538
        %1958 = vmatprep.subr.bf16.mxu0 %v1541
        %1959 = vmatpush1.bf16.msra.mxu0 %v1540
        %1960 = vmatprep.mubr.bf16.mxu0 %v939
        %1961 = vmatmul.mubr.bf16.gmra.mrb[0].mxu0 %v938
        %v1962 = vpop.f32.mrb[0].mxu0
        %v1963 = vadd.f32 %v1850, %v1962
        %v1964 = vpop.f32.mrb[0].mxu0
        %v1965 = vadd.f32 %v1852, %v1964
        %v1966 = vpop.f32.mrb[0].mxu0
        %v1967 = vadd.f32 %v1854, %v1966
        %v1968 = vpop.f32.mrb[0].mxu0
        %v1969 = vadd.f32 %v1856, %v1968
        %1970 = vmatprep.mubr.bf16.mxu0 %v947
        %1971 = vmatmul.mubr.bf16.gmra.mrb[0].mxu0 %v946
        %v1972 = vpop.f32.mrb[0].mxu0
        %v1973 = vadd.f32 %v1860, %v1972
        %v1974 = vpop.f32.mrb[0].mxu0
        %v1975 = vadd.f32 %v1862, %v1974
        %v1976 = vpop.f32.mrb[0].mxu0
        %v1977 = vadd.f32 %v1864, %v1976
        %v1978 = vpop.f32.mrb[0].mxu0
        %v1979 = vadd.f32 %v1866, %v1978
        %1980 = vmatprep.mubr.bf16.mxu0 %v955
        %1981 = vmatmul.mubr.bf16.gmra.mrb[0].mxu0 %v954
        %v1982 = vpop.f32.mrb[0].mxu0
        %v1983 = vadd.f32 %v1870, %v1982
        %v1984 = vpop.f32.mrb[0].mxu0
        %v1985 = vadd.f32 %v1872, %v1984
        %v1986 = vpop.f32.mrb[0].mxu0
        %v1987 = vadd.f32 %v1874, %v1986
        %v1988 = vpop.f32.mrb[0].mxu0
        %v1989 = vadd.f32 %v1876, %v1988
        %1990 = vmatprep.mubr.bf16.mxu0 %v963
        %1991 = vmatmul.mubr.bf16.gmra.mrb[0].mxu0 %v962
        %v1992 = vpop.f32.mrb[0].mxu0
        %v1993 = vadd.f32 %v1880, %v1992
        %v1994 = vpop.f32.mrb[0].mxu0
        %v1995 = vadd.f32 %v1882, %v1994
        %v1996 = vpop.f32.mrb[0].mxu0
        %v1997 = vadd.f32 %v1884, %v1996
        %v1998 = vpop.f32.mrb[0].mxu0
        %v1999 = vadd.f32 %v1886, %v1998
        %2000 = vmatprep.mubr.bf16.mxu0 %v971
        %2001 = vmatmul.mubr.bf16.gmra.mrb[0].mxu0 %v970
        %v2002 = vpop.f32.mrb[0].mxu0
        %v2003 = vadd.f32 %v1890, %v2002
        %v2004 = vpop.f32.mrb[0].mxu0
        %v2005 = vadd.f32 %v1892, %v2004
        %v2006 = vpop.f32.mrb[0].mxu0
        %v2007 = vadd.f32 %v1894, %v2006
        %v2008 = vpop.f32.mrb[0].mxu0
        %v2009 = vadd.f32 %v1896, %v2008
        %2010 = vmatprep.mubr.bf16.mxu0 %v979
        %2011 = vmatmul.mubr.bf16.gmra.mrb[0].mxu0 %v978
        %v2012 = vpop.f32.mrb[0].mxu0
        %v2013 = vadd.f32 %v1900, %v2012
        %v2014 = vpop.f32.mrb[0].mxu0
        %v2015 = vadd.f32 %v1902, %v2014
        %v2016 = vpop.f32.mrb[0].mxu0
        %v2017 = vadd.f32 %v1904, %v2016
        %v2018 = vpop.f32.mrb[0].mxu0
        %v2019 = vadd.f32 %v1906, %v2018
        %2020 = vmatprep.mubr.bf16.mxu0 %v987
        %2021 = vmatmul.mubr.bf16.gmra.mrb[0].mxu0 %v986
        %v2022 = vpop.f32.mrb[0].mxu0
        %v2023 = vadd.f32 %v1910, %v2022
        %v2024 = vpop.f32.mrb[0].mxu0
        %v2025 = vadd.f32 %v1912, %v2024
        %v2026 = vpop.f32.mrb[0].mxu0
        %v2027 = vadd.f32 %v1914, %v2026
        %v2028 = vpop.f32.mrb[0].mxu0
        %v2029 = vadd.f32 %v1916, %v2028
        %2030 = vmatprep.mubr.bf16.mxu0 %v995
        %2031 = vmatmul.mubr.bf16.gmra.mrb[0].mxu0 %v994
        %v2032 = vpop.f32.mrb[0].mxu0
        %v2033 = vadd.f32 %v1920, %v2032
        %v2034 = vpop.f32.mrb[0].mxu0
        %v2035 = vadd.f32 %v1922, %v2034
        %v2036 = vpop.f32.mrb[0].mxu0
        %v2037 = vadd.f32 %v1924, %v2036
        %v2038 = vpop.f32.mrb[0].mxu0
        %v2039 = vadd.f32 %v1926, %v2038
        %2040 = vdwg.mxu0
        %2041 = vmatprep.subr.bf16.mxu0 %v1543
        %2042 = vmatpush1.bf16.msra.mxu0 %v1542
        %2043 = vmatprep.subr.bf16.mxu0 %v1545
        %2044 = vmatpush1.bf16.msra.mxu0 %v1544
        %2045 = vmatprep.subr.bf16.mxu0 %v1547
        %2046 = vmatpush1.bf16.msra.mxu0 %v1546
        %2047 = vmatprep.subr.bf16.mxu0 %v1549
        %2048 = vmatpush1.bf16.msra.mxu0 %v1548
        %2049 = vmatprep.subr.bf16.mxu0 %v1551
        %2050 = vmatpush1.bf16.msra.mxu0 %v1550
        %2051 = vmatprep.subr.bf16.mxu0 %v1553
        %2052 = vmatpush1.bf16.msra.mxu0 %v1552
        %2053 = vmatprep.subr.bf16.mxu0 %v1555
        %2054 = vmatpush1.bf16.msra.mxu0 %v1554
        %2055 = vmatprep.subr.bf16.mxu0 %v1557
        %2056 = vmatpush1.bf16.msra.mxu0 %v1556
        %2057 = vmatprep.subr.bf16.mxu0 %v1559
        %2058 = vmatpush1.bf16.msra.mxu0 %v1558
        %2059 = vmatprep.subr.bf16.mxu0 %v1561
        %2060 = vmatpush1.bf16.msra.mxu0 %v1560
        %2061 = vmatprep.subr.bf16.mxu0 %v1563
        %2062 = vmatpush1.bf16.msra.mxu0 %v1562
        %2063 = vmatprep.subr.bf16.mxu0 %v1565
        %2064 = vmatpush1.bf16.msra.mxu0 %v1564
        %2065 = vmatprep.subr.bf16.mxu0 %v1567
        %2066 = vmatpush1.bf16.msra.mxu0 %v1566
        %2067 = vmatprep.subr.bf16.mxu0 %v1569
        %2068 = vmatpush1.bf16.msra.mxu0 %v1568
        %2069 = vmatprep.subr.bf16.mxu0 %v1571
        %2070 = vmatpush1.bf16.msra.mxu0 %v1570
        %2071 = vmatprep.subr.bf16.mxu0 %v1573
        %2072 = vmatpush1.bf16.msra.mxu0 %v1572
        %2073 = vmatprep.mubr.bf16.mxu0 %v941
        %2074 = vmatmul.mubr.bf16.gmra.mrb[0].mxu0 %v940
        %v2075 = vpop.f32.mrb[0].mxu0
        %v2076 = vadd.f32 %v1963, %v2075
        %v2077 = vpop.f32.mrb[0].mxu0
        %v2078 = vadd.f32 %v1965, %v2077
        %v2079 = vpop.f32.mrb[0].mxu0
        %v2080 = vadd.f32 %v1967, %v2079
        %v2081 = vpop.f32.mrb[0].mxu0
        %v2082 = vadd.f32 %v1969, %v2081
        %2083 = vmatprep.mubr.bf16.mxu0 %v949
        %2084 = vmatmul.mubr.bf16.gmra.mrb[0].mxu0 %v948
        %v2085 = vpop.f32.mrb[0].mxu0
        %v2086 = vadd.f32 %v1973, %v2085
        %v2087 = vpop.f32.mrb[0].mxu0
        %v2088 = vadd.f32 %v1975, %v2087
        %v2089 = vpop.f32.mrb[0].mxu0
        %v2090 = vadd.f32 %v1977, %v2089
        %v2091 = vpop.f32.mrb[0].mxu0
        %v2092 = vadd.f32 %v1979, %v2091
        %2093 = vmatprep.mubr.bf16.mxu0 %v957
        %2094 = vmatmul.mubr.bf16.gmra.mrb[0].mxu0 %v956
        %v2095 = vpop.f32.mrb[0].mxu0
        %v2096 = vadd.f32 %v1983, %v2095
        %v2097 = vpop.f32.mrb[0].mxu0
        %v2098 = vadd.f32 %v1985, %v2097
        %v2099 = vpop.f32.mrb[0].mxu0
        %v2100 = vadd.f32 %v1987, %v2099
        %v2101 = vpop.f32.mrb[0].mxu0
        %v2102 = vadd.f32 %v1989, %v2101
        %2103 = vmatprep.mubr.bf16.mxu0 %v965
        %2104 = vmatmul.mubr.bf16.gmra.mrb[0].mxu0 %v964
        %v2105 = vpop.f32.mrb[0].mxu0
        %v2106 = vadd.f32 %v1993, %v2105
        %v2107 = vpop.f32.mrb[0].mxu0
        %v2108 = vadd.f32 %v1995, %v2107
        %v2109 = vpop.f32.mrb[0].mxu0
        %v2110 = vadd.f32 %v1997, %v2109
        %v2111 = vpop.f32.mrb[0].mxu0
        %v2112 = vadd.f32 %v1999, %v2111
        %2113 = vmatprep.mubr.bf16.mxu0 %v973
        %2114 = vmatmul.mubr.bf16.gmra.mrb[0].mxu0 %v972
        %v2115 = vpop.f32.mrb[0].mxu0
        %v2116 = vadd.f32 %v2003, %v2115
        %v2117 = vpop.f32.mrb[0].mxu0
        %v2118 = vadd.f32 %v2005, %v2117
        %v2119 = vpop.f32.mrb[0].mxu0
        %v2120 = vadd.f32 %v2007, %v2119
        %v2121 = vpop.f32.mrb[0].mxu0
        %v2122 = vadd.f32 %v2009, %v2121
        %2123 = vmatprep.mubr.bf16.mxu0 %v981
        %2124 = vmatmul.mubr.bf16.gmra.mrb[0].mxu0 %v980
        %v2125 = vpop.f32.mrb[0].mxu0
        %v2126 = vadd.f32 %v2013, %v2125
        %v2127 = vpop.f32.mrb[0].mxu0
        %v2128 = vadd.f32 %v2015, %v2127
        %v2129 = vpop.f32.mrb[0].mxu0
        %v2130 = vadd.f32 %v2017, %v2129
        %v2131 = vpop.f32.mrb[0].mxu0
        %v2132 = vadd.f32 %v2019, %v2131
        %2133 = vmatprep.mubr.bf16.mxu0 %v989
        %2134 = vmatmul.mubr.bf16.gmra.mrb[0].mxu0 %v988
        %v2135 = vpop.f32.mrb[0].mxu0
        %v2136 = vadd.f32 %v2023, %v2135
        %v2137 = vpop.f32.mrb[0].mxu0
        %v2138 = vadd.f32 %v2025, %v2137
        %v2139 = vpop.f32.mrb[0].mxu0
        %v2140 = vadd.f32 %v2027, %v2139
        %v2141 = vpop.f32.mrb[0].mxu0
        %v2142 = vadd.f32 %v2029, %v2141
        %2143 = vmatprep.mubr.bf16.mxu0 %v997
        %2144 = vmatmul.mubr.bf16.gmra.mrb[0].mxu0 %v996
        %v2145 = vpop.f32.mrb[0].mxu0
        %v2146 = vadd.f32 %v2033, %v2145
        %v2147 = vpop.f32.mrb[0].mxu0
        %v2148 = vadd.f32 %v2035, %v2147
        %v2149 = vpop.f32.mrb[0].mxu0
        %v2150 = vadd.f32 %v2037, %v2149
        %v2151 = vpop.f32.mrb[0].mxu0
        %v2152 = vadd.f32 %v2039, %v2151
        %2153 = vdwg.mxu0
        %v2154 = vmax.f32 %v2076, 0.0
        %v2155 = vmax.f32 %v2078, 0.0
        %v2156 = vmax.f32 %v2080, 0.0
        %v2157 = vmax.f32 %v2082, 0.0
        %v2158 = vmax.f32 %v2086, 0.0
        %v2159 = vmax.f32 %v2088, 0.0
        %v2160 = vmax.f32 %v2090, 0.0
        %v2161 = vmax.f32 %v2092, 0.0
        %v2162 = vmax.f32 %v2096, 0.0
        %v2163 = vmax.f32 %v2098, 0.0
        %v2164 = vmax.f32 %v2100, 0.0
        %v2165 = vmax.f32 %v2102, 0.0
        %v2166 = vmax.f32 %v2106, 0.0
        %v2167 = vmax.f32 %v2108, 0.0
        %v2168 = vmax.f32 %v2110, 0.0
        %v2169 = vmax.f32 %v2112, 0.0
        %v2170 = vmax.f32 %v2116, 0.0
        %v2171 = vmax.f32 %v2118, 0.0
        %v2172 = vmax.f32 %v2120, 0.0
        %v2173 = vmax.f32 %v2122, 0.0
        %v2174 = vmax.f32 %v2126, 0.0
        %v2175 = vmax.f32 %v2128, 0.0
        %v2176 = vmax.f32 %v2130, 0.0
        %v2177 = vmax.f32 %v2132, 0.0
        %v2178 = vmax.f32 %v2136, 0.0
        %v2179 = vmax.f32 %v2138, 0.0
        %v2180 = vmax.f32 %v2140, 0.0
        %v2181 = vmax.f32 %v2142, 0.0
        %v2182 = vmax.f32 %v2146, 0.0
        %v2183 = vmax.f32 %v2148, 0.0
        %v2184 = vmax.f32 %v2150, 0.0
        %v2185 = vmax.f32 %v2152, 0.0
        %v2186 = vpack.c.bf16 %v2156, %v2154
        %v2187 = vpack.c.bf16 %v2157, %v2155
        %v2188 = vpack.c.bf16 %v2160, %v2158
        %v2189 = vpack.c.bf16 %v2161, %v2159
        %v2190 = vpack.c.bf16 %v2164, %v2162
        %v2191 = vpack.c.bf16 %v2165, %v2163
        %v2192 = vpack.c.bf16 %v2168, %v2166
        %v2193 = vpack.c.bf16 %v2169, %v2167
        %v2194 = vpack.c.bf16 %v2172, %v2170
        %v2195 = vpack.c.bf16 %v2173, %v2171
        %v2196 = vpack.c.bf16 %v2176, %v2174
        %v2197 = vpack.c.bf16 %v2177, %v2175
        %v2198 = vpack.c.bf16 %v2180, %v2178
        %v2199 = vpack.c.bf16 %v2181, %v2179
        %v2200 = vpack.c.bf16 %v2184, %v2182
        %v2201 = vpack.c.bf16 %v2185, %v2183
        %v2202 = vld [vmem:[%s4] sm:$0xf]
        %v2203 = vld [vmem:[%s4 + $0x4] sm:$0xf]
        %v2204 = vld [vmem:[%s4 + $0x8] sm:$0xf]
        %v2205 = vld [vmem:[%s4 + $0xc] sm:$0xf]
        %v2206 = vld [vmem:[%s4 + $0x10] sm:$0xf]
        %v2207 = vld [vmem:[%s4 + $0x14] sm:$0xf]
        %v2208 = vld [vmem:[%s4 + $0x18] sm:$0xf]
        %v2209 = vld [vmem:[%s4 + $0x1c] sm:$0xf]
        %v2210 = vld [vmem:[%s4 + $0x20] sm:$0xf]
        %v2211 = vld [vmem:[%s4 + $0x24] sm:$0xf]
        %v2212 = vld [vmem:[%s4 + $0x28] sm:$0xf]
        %v2213 = vld [vmem:[%s4 + $0x2c] sm:$0xf]
        %v2214 = vld [vmem:[%s4 + $0x30] sm:$0xf]
        %v2215 = vld [vmem:[%s4 + $0x34] sm:$0xf]
        %v2216 = vld [vmem:[%s4 + $0x38] sm:$0xf]
        %v2217 = vld [vmem:[%s4 + $0x3c] sm:$0xf]
        %v2218 = vld [vmem:[%s4 + $0x40] sm:$0xf]
        %v2219 = vld [vmem:[%s4 + $0x44] sm:$0xf]
        %v2220 = vld [vmem:[%s4 + $0x48] sm:$0xf]
        %v2221 = vld [vmem:[%s4 + $0x4c] sm:$0xf]
        %v2222 = vld [vmem:[%s4 + $0x50] sm:$0xf]
        %v2223 = vld [vmem:[%s4 + $0x54] sm:$0xf]
        %v2224 = vld [vmem:[%s4 + $0x58] sm:$0xf]
        %v2225 = vld [vmem:[%s4 + $0x5c] sm:$0xf]
        %v2226 = vld [vmem:[%s4 + $0x60] sm:$0xf]
        %v2227 = vld [vmem:[%s4 + $0x64] sm:$0xf]
        %v2228 = vld [vmem:[%s4 + $0x68] sm:$0xf]
        %v2229 = vld [vmem:[%s4 + $0x6c] sm:$0xf]
        %v2230 = vld [vmem:[%s4 + $0x70] sm:$0xf]
        %v2231 = vld [vmem:[%s4 + $0x74] sm:$0xf]
        %v2232 = vld [vmem:[%s4 + $0x78] sm:$0xf]
        %v2233 = vld [vmem:[%s4 + $0x7c] sm:$0xf]
        %v2234 = vld [vmem:[%s5] sm:$0x1]
        %v2236 = vlaneseq
        %v2237 = vshrl.u32 %v2236, 7
        %v2238 = vsub.s32 0, %v2237
        %v2239 = vrot.slane %v2234, %v2238
        %v2273 = vunpack.c.l.b16 %v2202
        %v2274 = vunpack.c.l.b16 %v2203
        %v2275 = vunpack.c.l.b16 %v2204
        %v2276 = vunpack.c.l.b16 %v2205
        %v2277 = vunpack.c.l.b16 %v2206
        %v2278 = vunpack.c.l.b16 %v2207
        %v2279 = vunpack.c.l.b16 %v2208
        %v2280 = vunpack.c.l.b16 %v2209
        %v2281 = vunpack.c.l.b16 %v2210
        %v2282 = vunpack.c.l.b16 %v2211
        %v2283 = vunpack.c.l.b16 %v2212
        %v2284 = vunpack.c.l.b16 %v2213
        %v2285 = vunpack.c.l.b16 %v2214
        %v2286 = vunpack.c.l.b16 %v2215
        %v2287 = vunpack.c.l.b16 %v2216
        %v2288 = vunpack.c.l.b16 %v2217
        %v2289 = vunpack.c.l.b16 %v2218
        %v2290 = vunpack.c.l.b16 %v2219
        %v2291 = vunpack.c.l.b16 %v2220
        %v2292 = vunpack.c.l.b16 %v2221
        %v2293 = vunpack.c.l.b16 %v2222
        %v2294 = vunpack.c.l.b16 %v2223
        %v2295 = vunpack.c.l.b16 %v2224
        %v2296 = vunpack.c.l.b16 %v2225
        %v2297 = vunpack.c.l.b16 %v2226
        %v2298 = vunpack.c.l.b16 %v2227
        %v2299 = vunpack.c.l.b16 %v2228
        %v2300 = vunpack.c.l.b16 %v2229
        %v2301 = vunpack.c.l.b16 %v2230
        %v2302 = vunpack.c.l.b16 %v2231
        %v2303 = vunpack.c.l.b16 %v2232
        %v2304 = vunpack.c.l.b16 %v2233
        %v2305 = vpack.c.b16 %v2274, %v2273
        %v2306 = vpack.c.b16 %v2276, %v2275
        %v2307 = vpack.c.b16 %v2278, %v2277
        %v2308 = vpack.c.b16 %v2280, %v2279
        %v2309 = vpack.c.b16 %v2282, %v2281
        %v2310 = vpack.c.b16 %v2284, %v2283
        %v2311 = vpack.c.b16 %v2286, %v2285
        %v2312 = vpack.c.b16 %v2288, %v2287
        %v2313 = vpack.c.b16 %v2290, %v2289
        %v2314 = vpack.c.b16 %v2292, %v2291
        %v2315 = vpack.c.b16 %v2294, %v2293
        %v2316 = vpack.c.b16 %v2296, %v2295
        %v2317 = vpack.c.b16 %v2298, %v2297
        %v2318 = vpack.c.b16 %v2300, %v2299
        %v2319 = vpack.c.b16 %v2302, %v2301
        %v2320 = vpack.c.b16 %v2304, %v2303
        %2337 = vmatprep.subr.bf16.mxu0 0
        %2338 = vmatpush1.bf16.msra.mxu0 %v2305
        %2339 = vmatprep.subr.bf16.mxu0 0
        %2340 = vmatpush1.bf16.msra.mxu0 %v2306
        %2341 = vmatprep.subr.bf16.mxu0 0
        %2342 = vmatpush1.bf16.msra.mxu0 %v2307
        %2343 = vmatprep.subr.bf16.mxu0 0
        %2344 = vmatpush1.bf16.msra.mxu0 %v2308
        %2345 = vmatprep.subr.bf16.mxu0 0
        %2346 = vmatpush1.bf16.msra.mxu0 %v2309
        %2347 = vmatprep.subr.bf16.mxu0 0
        %2348 = vmatpush1.bf16.msra.mxu0 %v2310
        %2349 = vmatprep.subr.bf16.mxu0 0
        %2350 = vmatpush1.bf16.msra.mxu0 %v2311
        %2351 = vmatprep.subr.bf16.mxu0 0
        %2352 = vmatpush1.bf16.msra.mxu0 %v2312
        %2353 = vmatprep.subr.bf16.mxu0 0
        %2354 = vmatpush1.bf16.msra.mxu0 %v2313
        %2355 = vmatprep.subr.bf16.mxu0 0
        %2356 = vmatpush1.bf16.msra.mxu0 %v2314
        %2357 = vmatprep.subr.bf16.mxu0 0
        %2358 = vmatpush1.bf16.msra.mxu0 %v2315
        %2359 = vmatprep.subr.bf16.mxu0 0
        %2360 = vmatpush1.bf16.msra.mxu0 %v2316
        %2361 = vmatprep.subr.bf16.mxu0 0
        %2362 = vmatpush1.bf16.msra.mxu0 %v2317
        %2363 = vmatprep.subr.bf16.mxu0 0
        %2364 = vmatpush1.bf16.msra.mxu0 %v2318
        %2365 = vmatprep.subr.bf16.mxu0 0
        %2366 = vmatpush1.bf16.msra.mxu0 %v2319
        %2367 = vmatprep.subr.bf16.mxu0 0
        %2368 = vmatpush1.bf16.msra.mxu0 %v2320
        %2369 = vmatprep.mubr.bf16.mxu0 %v2187
        %2370 = vmatmul.mubr.bf16.gmra.mrb[0].mxu0 %v2186
        %v2371 = vpop.f32.mrb[0].mxu0
        %v2372 = vadd.f32 %v2239, %v2371
        %v2373 = vpop.f32.mrb[0].mxu0
        %v2374 = vpop.f32.mrb[0].mxu0
        %v2375 = vadd.f32 %v2239, %v2374
        %v2376 = vpop.f32.mrb[0].mxu0
        %2377 = vmatprep.mubr.bf16.mxu0 %v2189
        %2378 = vmatmul.mubr.bf16.gmra.mrb[0].mxu0 %v2188
        %v2379 = vpop.f32.mrb[0].mxu0
        %v2380 = vadd.f32 %v2239, %v2379
        %v2381 = vpop.f32.mrb[0].mxu0
        %v2382 = vpop.f32.mrb[0].mxu0
        %v2383 = vadd.f32 %v2239, %v2382
        %v2384 = vpop.f32.mrb[0].mxu0
        %2385 = vmatprep.mubr.bf16.mxu0 %v2191
        %2386 = vmatmul.mubr.bf16.gmra.mrb[0].mxu0 %v2190
        %v2387 = vpop.f32.mrb[0].mxu0
        %v2388 = vadd.f32 %v2239, %v2387
        %v2389 = vpop.f32.mrb[0].mxu0
        %v2390 = vpop.f32.mrb[0].mxu0
        %v2391 = vadd.f32 %v2239, %v2390
        %v2392 = vpop.f32.mrb[0].mxu0
        %2393 = vmatprep.mubr.bf16.mxu0 %v2193
        %2394 = vmatmul.mubr.bf16.gmra.mrb[0].mxu0 %v2192
        %v2395 = vpop.f32.mrb[0].mxu0
        %v2396 = vadd.f32 %v2239, %v2395
        %v2397 = vpop.f32.mrb[0].mxu0
        %v2398 = vpop.f32.mrb[0].mxu0
        %v2399 = vadd.f32 %v2239, %v2398
        %v2400 = vpop.f32.mrb[0].mxu0
        %2401 = vmatprep.mubr.bf16.mxu0 %v2195
        %2402 = vmatmul.mubr.bf16.gmra.mrb[0].mxu0 %v2194
        %v2403 = vpop.f32.mrb[0].mxu0
        %v2404 = vadd.f32 %v2239, %v2403
        %v2405 = vpop.f32.mrb[0].mxu0
        %v2406 = vpop.f32.mrb[0].mxu0
        %v2407 = vadd.f32 %v2239, %v2406
        %v2408 = vpop.f32.mrb[0].mxu0
        %2409 = vmatprep.mubr.bf16.mxu0 %v2197
        %2410 = vmatmul.mubr.bf16.gmra.mrb[0].mxu0 %v2196
        %v2411 = vpop.f32.mrb[0].mxu0
        %v2412 = vadd.f32 %v2239, %v2411
        %v2413 = vpop.f32.mrb[0].mxu0
        %v2414 = vpop.f32.mrb[0].mxu0
        %v2415 = vadd.f32 %v2239, %v2414
        %v2416 = vpop.f32.mrb[0].mxu0
        %2417 = vmatprep.mubr.bf16.mxu0 %v2199
        %2418 = vmatmul.mubr.bf16.gmra.mrb[0].mxu0 %v2198
        %v2419 = vpop.f32.mrb[0].mxu0
        %v2420 = vadd.f32 %v2239, %v2419
        %v2421 = vpop.f32.mrb[0].mxu0
        %v2422 = vpop.f32.mrb[0].mxu0
        %v2423 = vadd.f32 %v2239, %v2422
        %v2424 = vpop.f32.mrb[0].mxu0
        %2425 = vmatprep.mubr.bf16.mxu0 %v2201
        %2426 = vmatmul.mubr.bf16.gmra.mrb[0].mxu0 %v2200
        %v2427 = vpop.f32.mrb[0].mxu0
        %v2428 = vadd.f32 %v2239, %v2427
        %v2429 = vpop.f32.mrb[0].mxu0
        %v2430 = vpop.f32.mrb[0].mxu0
        %v2431 = vadd.f32 %v2239, %v2430
        %v2432 = vpop.f32.mrb[0].mxu0
        %2433 = vdwg.mxu0
        %v2434 = vmax.f32 %v2372, 0.0
        %v2435 = vmax.f32 %v2375, 0.0
        %v2436 = vmax.f32 %v2380, 0.0
        %v2437 = vmax.f32 %v2383, 0.0
        %v2438 = vmax.f32 %v2388, 0.0
        %v2439 = vmax.f32 %v2391, 0.0
        %v2440 = vmax.f32 %v2396, 0.0
        %v2441 = vmax.f32 %v2399, 0.0
        %v2442 = vmax.f32 %v2404, 0.0
        %v2443 = vmax.f32 %v2407, 0.0
        %v2444 = vmax.f32 %v2412, 0.0
        %v2445 = vmax.f32 %v2415, 0.0
        %v2446 = vmax.f32 %v2420, 0.0
        %v2447 = vmax.f32 %v2423, 0.0
        %v2448 = vmax.f32 %v2428, 0.0
        %v2449 = vmax.f32 %v2431, 0.0
        %v2450 = vpack.c.bf16 %v2435, %v2434
        %v2451 = vpack.c.bf16 %v2437, %v2436
        %v2452 = vpack.c.bf16 %v2439, %v2438
        %v2453 = vpack.c.bf16 %v2441, %v2440
        %v2454 = vpack.c.bf16 %v2443, %v2442
        %v2455 = vpack.c.bf16 %v2445, %v2444
        %v2456 = vpack.c.bf16 %v2447, %v2446
        %v2457 = vpack.c.bf16 %v2449, %v2448
        %v2458 = vld [vmem:[%s6] sm:$0xff]
        %v2459 = vld [vmem:[%s6 + $0x8] sm:$0xff]
        %v2460 = vld [vmem:[%s6 + $0x10] sm:$0xff]
        %v2461 = vld [vmem:[%s6 + $0x18] sm:$0xff]
        %v2462 = vld [vmem:[%s6 + $0x20] sm:$0xff]
        %v2463 = vld [vmem:[%s6 + $0x28] sm:$0xff]
        %v2464 = vld [vmem:[%s6 + $0x30] sm:$0xff]
        %v2465 = vld [vmem:[%s6 + $0x38] sm:$0xff]
        %v2466 = vld [vmem:[%s6 + $0x40] sm:$0xff]
        %v2467 = vld [vmem:[%s6 + $0x48] sm:$0xff]
        %v2468 = vld [vmem:[%s6 + $0x50] sm:$0xff]
        %v2469 = vld [vmem:[%s6 + $0x58] sm:$0xff]
        %v2470 = vld [vmem:[%s6 + $0x60] sm:$0xff]
        %v2471 = vld [vmem:[%s6 + $0x68] sm:$0xff]
        %v2472 = vld [vmem:[%s6 + $0x70] sm:$0xff]
        %v2473 = vld [vmem:[%s6 + $0x78] sm:$0xff]
        %v2474 = vld [vmem:[%s7] sm:$0x3]
        %v2476 = vlaneseq
        %v2477 = vshrl.u32 %v2476, 7
        %v2478 = vsub.s32 0, %v2477
        %v2479 = vrot.slane %v2474, %v2478
        %v2480 = vlaneseq
        %v2481 = vshrl.u32 %v2480, 7
        %v2482 = vsub.s32 1, %v2481
        %v2483 = vrot.slane %v2474, %v2482
        %v2502 = vunpack.c.l.b16 %v2458
        %v2503 = vunpack.c.h.b16 %v2458
        %v2504 = vunpack.c.l.b16 %v2459
        %v2505 = vunpack.c.h.b16 %v2459
        %v2506 = vunpack.c.l.b16 %v2460
        %v2507 = vunpack.c.h.b16 %v2460
        %v2508 = vunpack.c.l.b16 %v2461
        %v2509 = vunpack.c.h.b16 %v2461
        %v2510 = vunpack.c.l.b16 %v2462
        %v2511 = vunpack.c.h.b16 %v2462
        %v2512 = vunpack.c.l.b16 %v2463
        %v2513 = vunpack.c.h.b16 %v2463
        %v2514 = vunpack.c.l.b16 %v2464
        %v2515 = vunpack.c.h.b16 %v2464
        %v2516 = vunpack.c.l.b16 %v2465
        %v2517 = vunpack.c.h.b16 %v2465
        %v2518 = vunpack.c.l.b16 %v2466
        %v2519 = vunpack.c.h.b16 %v2466
        %v2520 = vunpack.c.l.b16 %v2467
        %v2521 = vunpack.c.h.b16 %v2467
        %v2522 = vunpack.c.l.b16 %v2468
        %v2523 = vunpack.c.h.b16 %v2468
        %v2524 = vunpack.c.l.b16 %v2469
        %v2525 = vunpack.c.h.b16 %v2469
        %v2526 = vunpack.c.l.b16 %v2470
        %v2527 = vunpack.c.h.b16 %v2470
        %v2528 = vunpack.c.l.b16 %v2471
        %v2529 = vunpack.c.h.b16 %v2471
        %v2530 = vunpack.c.l.b16 %v2472
        %v2531 = vunpack.c.h.b16 %v2472
        %v2532 = vunpack.c.l.b16 %v2473
        %v2533 = vunpack.c.h.b16 %v2473
        %v2534 = vpack.c.b16 %v2504, %v2502
        %v2535 = vpack.c.b16 %v2505, %v2503
        %v2536 = vpack.c.b16 %v2508, %v2506
        %v2537 = vpack.c.b16 %v2509, %v2507
        %v2538 = vpack.c.b16 %v2512, %v2510
        %v2539 = vpack.c.b16 %v2513, %v2511
        %v2540 = vpack.c.b16 %v2516, %v2514
        %v2541 = vpack.c.b16 %v2517, %v2515
        %v2542 = vpack.c.b16 %v2520, %v2518
        %v2543 = vpack.c.b16 %v2521, %v2519
        %v2544 = vpack.c.b16 %v2524, %v2522
        %v2545 = vpack.c.b16 %v2525, %v2523
        %v2546 = vpack.c.b16 %v2528, %v2526
        %v2547 = vpack.c.b16 %v2529, %v2527
        %v2548 = vpack.c.b16 %v2532, %v2530
        %v2549 = vpack.c.b16 %v2533, %v2531
        %2566 = vmatprep.subr.bf16.mxu0 %v2535
        %2567 = vmatpush1.bf16.msra.mxu0 %v2534
        %2568 = vmatprep.subr.bf16.mxu0 %v2537
        %2569 = vmatpush1.bf16.msra.mxu0 %v2536
        %2570 = vmatprep.subr.bf16.mxu0 %v2539
        %2571 = vmatpush1.bf16.msra.mxu0 %v2538
        %2572 = vmatprep.subr.bf16.mxu0 %v2541
        %2573 = vmatpush1.bf16.msra.mxu0 %v2540
        %2574 = vmatprep.subr.bf16.mxu0 %v2543
        %2575 = vmatpush1.bf16.msra.mxu0 %v2542
        %2576 = vmatprep.subr.bf16.mxu0 %v2545
        %2577 = vmatpush1.bf16.msra.mxu0 %v2544
        %2578 = vmatprep.subr.bf16.mxu0 %v2547
        %2579 = vmatpush1.bf16.msra.mxu0 %v2546
        %2580 = vmatprep.subr.bf16.mxu0 %v2549
        %2581 = vmatpush1.bf16.msra.mxu0 %v2548
        %2582 = vmatprep.subr.bf16.mxu0 0
        %2583 = vmatpush1.bf16.msra.mxu0 0
        %2584 = vmatprep.subr.bf16.mxu0 0
        %2585 = vmatpush1.bf16.msra.mxu0 0
        %2586 = vmatprep.subr.bf16.mxu0 0
        %2587 = vmatpush1.bf16.msra.mxu0 0
        %2588 = vmatprep.subr.bf16.mxu0 0
        %2589 = vmatpush1.bf16.msra.mxu0 0
        %2590 = vmatprep.subr.bf16.mxu0 0
        %2591 = vmatpush1.bf16.msra.mxu0 0
        %2592 = vmatprep.subr.bf16.mxu0 0
        %2593 = vmatpush1.bf16.msra.mxu0 0
        %2594 = vmatprep.subr.bf16.mxu0 0
        %2595 = vmatpush1.bf16.msra.mxu0 0
        %2596 = vmatprep.subr.bf16.mxu0 0
        %2597 = vmatpush1.bf16.msra.mxu0 0
        %2598 = vmatprep.mubr.bf16.mxu0 0
        %2599 = vmatmul.mubr.bf16.gmra.mrb[0].mxu0 %v2450
        %v2600 = vpop.f32.mrb[0].mxu0
        %v2601 = vadd.f32 %v2479, %v2600
        %v2602 = vpop.f32.mrb[0].mxu0
        %v2603 = vadd.f32 %v2483, %v2602
        %v2604 = vpop.f32.mrb[0].mxu0
        %v2605 = vadd.f32 %v2479, %v2604
        %v2606 = vpop.f32.mrb[0].mxu0
        %v2607 = vadd.f32 %v2483, %v2606
        %2608 = vmatprep.mubr.bf16.mxu0 0
        %2609 = vmatmul.mubr.bf16.gmra.mrb[0].mxu0 %v2451
        %v2610 = vpop.f32.mrb[0].mxu0
        %v2611 = vadd.f32 %v2479, %v2610
        %v2612 = vpop.f32.mrb[0].mxu0
        %v2613 = vadd.f32 %v2483, %v2612
        %v2614 = vpop.f32.mrb[0].mxu0
        %v2615 = vadd.f32 %v2479, %v2614
        %v2616 = vpop.f32.mrb[0].mxu0
        %v2617 = vadd.f32 %v2483, %v2616
        %2618 = vmatprep.mubr.bf16.mxu0 0
        %2619 = vmatmul.mubr.bf16.gmra.mrb[0].mxu0 %v2452
        %v2620 = vpop.f32.mrb[0].mxu0
        %v2621 = vadd.f32 %v2479, %v2620
        %v2622 = vpop.f32.mrb[0].mxu0
        %v2623 = vadd.f32 %v2483, %v2622
        %v2624 = vpop.f32.mrb[0].mxu0
        %v2625 = vadd.f32 %v2479, %v2624
        %v2626 = vpop.f32.mrb[0].mxu0
        %v2627 = vadd.f32 %v2483, %v2626
        %2628 = vmatprep.mubr.bf16.mxu0 0
        %2629 = vmatmul.mubr.bf16.gmra.mrb[0].mxu0 %v2453
        %v2630 = vpop.f32.mrb[0].mxu0
        %v2631 = vadd.f32 %v2479, %v2630
        %v2632 = vpop.f32.mrb[0].mxu0
        %v2633 = vadd.f32 %v2483, %v2632
        %v2634 = vpop.f32.mrb[0].mxu0
        %v2635 = vadd.f32 %v2479, %v2634
        %v2636 = vpop.f32.mrb[0].mxu0
        %v2637 = vadd.f32 %v2483, %v2636
        %2638 = vmatprep.mubr.bf16.mxu0 0
        %2639 = vmatmul.mubr.bf16.gmra.mrb[0].mxu0 %v2454
        %v2640 = vpop.f32.mrb[0].mxu0
        %v2641 = vadd.f32 %v2479, %v2640
        %v2642 = vpop.f32.mrb[0].mxu0
        %v2643 = vadd.f32 %v2483, %v2642
        %v2644 = vpop.f32.mrb[0].mxu0
        %v2645 = vadd.f32 %v2479, %v2644
        %v2646 = vpop.f32.mrb[0].mxu0
        %v2647 = vadd.f32 %v2483, %v2646
        %2648 = vmatprep.mubr.bf16.mxu0 0
        %2649 = vmatmul.mubr.bf16.gmra.mrb[0].mxu0 %v2455
        %v2650 = vpop.f32.mrb[0].mxu0
        %v2651 = vadd.f32 %v2479, %v2650
        %v2652 = vpop.f32.mrb[0].mxu0
        %v2653 = vadd.f32 %v2483, %v2652
        %v2654 = vpop.f32.mrb[0].mxu0
        %v2655 = vadd.f32 %v2479, %v2654
        %v2656 = vpop.f32.mrb[0].mxu0
        %v2657 = vadd.f32 %v2483, %v2656
        %2658 = vmatprep.mubr.bf16.mxu0 0
        %2659 = vmatmul.mubr.bf16.gmra.mrb[0].mxu0 %v2456
        %v2660 = vpop.f32.mrb[0].mxu0
        %v2661 = vadd.f32 %v2479, %v2660
        %v2662 = vpop.f32.mrb[0].mxu0
        %v2663 = vadd.f32 %v2483, %v2662
        %v2664 = vpop.f32.mrb[0].mxu0
        %v2665 = vadd.f32 %v2479, %v2664
        %v2666 = vpop.f32.mrb[0].mxu0
        %v2667 = vadd.f32 %v2483, %v2666
        %2668 = vmatprep.mubr.bf16.mxu0 0
        %2669 = vmatmul.mubr.bf16.gmra.mrb[0].mxu0 %v2457
        %v2670 = vpop.f32.mrb[0].mxu0
        %v2671 = vadd.f32 %v2479, %v2670
        %v2672 = vpop.f32.mrb[0].mxu0
        %v2673 = vadd.f32 %v2483, %v2672
        %v2674 = vpop.f32.mrb[0].mxu0
        %v2675 = vadd.f32 %v2479, %v2674
        %v2676 = vpop.f32.mrb[0].mxu0
        %v2677 = vadd.f32 %v2483, %v2676
        %2678 = vdwg.mxu0
        %v2679 = vmul.f32 %v2603, 0.5
        %v2680 = vmul.f32 %v2607, 0.5
        %v2681 = vmul.f32 %v2613, 0.5
        %v2682 = vmul.f32 %v2617, 0.5
        %v2683 = vmul.f32 %v2623, 0.5
        %v2684 = vmul.f32 %v2627, 0.5
        %v2685 = vmul.f32 %v2633, 0.5
        %v2686 = vmul.f32 %v2637, 0.5
        %v2687 = vmul.f32 %v2643, 0.5
        %v2688 = vmul.f32 %v2647, 0.5
        %v2689 = vmul.f32 %v2653, 0.5
        %v2690 = vmul.f32 %v2657, 0.5
        %v2691 = vmul.f32 %v2663, 0.5
        %v2692 = vmul.f32 %v2667, 0.5
        %v2693 = vmul.f32 %v2673, 0.5
        %v2694 = vmul.f32 %v2677, 0.5
        %v2695 = vmul.f32 %v2679, 1.442695
        %v2696 = vpow.pop %v2695
        %v2697 = vmul.f32 %v2680, 1.442695
        %v2698 = vpow.pop %v2697
        %v2699 = vmul.f32 %v2681, 1.442695
        %v2700 = vpow.pop %v2699
        %v2701 = vmul.f32 %v2682, 1.442695
        %v2702 = vpow.pop %v2701
        %v2703 = vmul.f32 %v2683, 1.442695
        %v2704 = vpow.pop %v2703
        %v2705 = vmul.f32 %v2684, 1.442695
        %v2706 = vpow.pop %v2705
        %v2707 = vmul.f32 %v2685, 1.442695
        %v2708 = vpow.pop %v2707
        %v2709 = vmul.f32 %v2686, 1.442695
        %v2710 = vpow.pop %v2709
        %v2711 = vmul.f32 %v2687, 1.442695
        %v2712 = vpow.pop %v2711
        %v2713 = vmul.f32 %v2688, 1.442695
        %v2714 = vpow.pop %v2713
        %v2715 = vmul.f32 %v2689, 1.442695
        %v2716 = vpow.pop %v2715
        %v2717 = vmul.f32 %v2690, 1.442695
        %v2718 = vpow.pop %v2717
        %v2719 = vmul.f32 %v2691, 1.442695
        %v2720 = vpow.pop %v2719
        %v2721 = vmul.f32 %v2692, 1.442695
        %v2722 = vpow.pop %v2721
        %v2723 = vmul.f32 %v2693, 1.442695
        %v2724 = vpow.pop %v2723
        %v2725 = vmul.f32 %v2694, 1.442695
        %v2726 = vpow.pop %v2725
        %v2727 = vld [vmem:[%s527] sm:$0xff]
        %v2728 = vld [vmem:[%s527 + $0x8] sm:$0xff]
        %v2729 = vld [vmem:[%s527 + $0x10] sm:$0xff]
        %v2730 = vld [vmem:[%s527 + $0x18] sm:$0xff]
        %v2731 = vld [vmem:[%s527 + $0x20] sm:$0xff]
        %v2732 = vld [vmem:[%s527 + $0x28] sm:$0xff]
        %v2733 = vld [vmem:[%s527 + $0x30] sm:$0xff]
        %v2734 = vld [vmem:[%s527 + $0x38] sm:$0xff]
        %v2735 = vld [vmem:[%s527 + $0x40] sm:$0xff]
        %v2736 = vld [vmem:[%s527 + $0x48] sm:$0xff]
        %v2737 = vld [vmem:[%s527 + $0x50] sm:$0xff]
        %v2738 = vld [vmem:[%s527 + $0x58] sm:$0xff]
        %v2739 = vld [vmem:[%s527 + $0x60] sm:$0xff]
        %v2740 = vld [vmem:[%s527 + $0x68] sm:$0xff]
        %v2741 = vld [vmem:[%s527 + $0x70] sm:$0xff]
        %v2742 = vld [vmem:[%s527 + $0x78] sm:$0xff]
        %v2743 = vmul.f32 %v2727, %v2696
        %v2744 = vmul.f32 %v2728, %v2698
        %v2745 = vmul.f32 %v2729, %v2700
        %v2746 = vmul.f32 %v2730, %v2702
        %v2747 = vmul.f32 %v2731, %v2704
        %v2748 = vmul.f32 %v2732, %v2706
        %v2749 = vmul.f32 %v2733, %v2708
        %v2750 = vmul.f32 %v2734, %v2710
        %v2751 = vmul.f32 %v2735, %v2712
        %v2752 = vmul.f32 %v2736, %v2714
        %v2753 = vmul.f32 %v2737, %v2716
        %v2754 = vmul.f32 %v2738, %v2718
        %v2755 = vmul.f32 %v2739, %v2720
        %v2756 = vmul.f32 %v2740, %v2722
        %v2757 = vmul.f32 %v2741, %v2724
        %v2758 = vmul.f32 %v2742, %v2726
        %v2759 = vadd.f32 %v2743, %v2601
        %v2760 = vadd.f32 %v2744, %v2605
        %v2761 = vadd.f32 %v2745, %v2611
        %v2762 = vadd.f32 %v2746, %v2615
        %v2763 = vadd.f32 %v2747, %v2621
        %v2764 = vadd.f32 %v2748, %v2625
        %v2765 = vadd.f32 %v2749, %v2631
        %v2766 = vadd.f32 %v2750, %v2635
        %v2767 = vadd.f32 %v2751, %v2641
        %v2768 = vadd.f32 %v2752, %v2645
        %v2769 = vadd.f32 %v2753, %v2651
        %v2770 = vadd.f32 %v2754, %v2655
        %v2771 = vadd.f32 %v2755, %v2661
        %v2772 = vadd.f32 %v2756, %v2665
        %v2773 = vadd.f32 %v2757, %v2671
        %v2774 = vadd.f32 %v2758, %v2675
        %v2775 = vpack.c.bf16 %v2760, %v2759
        %v2776 = vpack.c.bf16 %v2762, %v2761
        %v2777 = vpack.c.bf16 %v2764, %v2763
        %v2778 = vpack.c.bf16 %v2766, %v2765
        %v2779 = vpack.c.bf16 %v2768, %v2767
        %v2780 = vpack.c.bf16 %v2770, %v2769
        %v2781 = vpack.c.bf16 %v2772, %v2771
        %v2782 = vpack.c.bf16 %v2774, %v2773
        %v2783 = vld [vmem:[%s8] sm:$0xf]
        %v2784 = vld [vmem:[%s8 + $0x4] sm:$0xf]
        %v2785 = vld [vmem:[%s8 + $0x8] sm:$0xf]
        %v2786 = vld [vmem:[%s8 + $0xc] sm:$0xf]
        %v2787 = vld [vmem:[%s8 + $0x10] sm:$0xf]
        %v2788 = vld [vmem:[%s8 + $0x14] sm:$0xf]
        %v2789 = vld [vmem:[%s8 + $0x18] sm:$0xf]
        %v2790 = vld [vmem:[%s8 + $0x1c] sm:$0xf]
        %v2791 = vld [vmem:[%s8 + $0x20] sm:$0xf]
        %v2792 = vld [vmem:[%s8 + $0x24] sm:$0xf]
        %v2793 = vld [vmem:[%s8 + $0x28] sm:$0xf]
        %v2794 = vld [vmem:[%s8 + $0x2c] sm:$0xf]
        %v2795 = vld [vmem:[%s8 + $0x30] sm:$0xf]
        %v2796 = vld [vmem:[%s8 + $0x34] sm:$0xf]
        %v2797 = vld [vmem:[%s8 + $0x38] sm:$0xf]
        %v2798 = vld [vmem:[%s8 + $0x3c] sm:$0xf]
        %v2799 = vld [vmem:[%s9] sm:$0x1]
        %v2801 = vlaneseq
        %v2802 = vshrl.u32 %v2801, 7
        %v2803 = vsub.s32 0, %v2802
        %v2804 = vrot.slane %v2799, %v2803
        %v2822 = vunpack.c.l.b16 %v2783
        %v2823 = vunpack.c.l.b16 %v2784
        %v2824 = vunpack.c.l.b16 %v2785
        %v2825 = vunpack.c.l.b16 %v2786
        %v2826 = vunpack.c.l.b16 %v2787
        %v2827 = vunpack.c.l.b16 %v2788
        %v2828 = vunpack.c.l.b16 %v2789
        %v2829 = vunpack.c.l.b16 %v2790
        %v2830 = vunpack.c.l.b16 %v2791
        %v2831 = vunpack.c.l.b16 %v2792
        %v2832 = vunpack.c.l.b16 %v2793
        %v2833 = vunpack.c.l.b16 %v2794
        %v2834 = vunpack.c.l.b16 %v2795
        %v2835 = vunpack.c.l.b16 %v2796
        %v2836 = vunpack.c.l.b16 %v2797
        %v2837 = vunpack.c.l.b16 %v2798
        %v2838 = vpack.c.b16 %v2823, %v2822
        %v2839 = vpack.c.b16 %v2825, %v2824
        %v2840 = vpack.c.b16 %v2827, %v2826
        %v2841 = vpack.c.b16 %v2829, %v2828
        %v2842 = vpack.c.b16 %v2831, %v2830
        %v2843 = vpack.c.b16 %v2833, %v2832
        %v2844 = vpack.c.b16 %v2835, %v2834
        %v2845 = vpack.c.b16 %v2837, %v2836
        %2854 = vmatprep.subr.bf16.mxu0 0
        %2855 = vmatpush1.bf16.msra.mxu0 %v2838
        %2856 = vmatprep.subr.bf16.mxu0 0
        %2857 = vmatpush1.bf16.msra.mxu0 %v2839
        %2858 = vmatprep.subr.bf16.mxu0 0
        %2859 = vmatpush1.bf16.msra.mxu0 %v2840
        %2860 = vmatprep.subr.bf16.mxu0 0
        %2861 = vmatpush1.bf16.msra.mxu0 %v2841
        %2862 = vmatprep.subr.bf16.mxu0 0
        %2863 = vmatpush1.bf16.msra.mxu0 %v2842
        %2864 = vmatprep.subr.bf16.mxu0 0
        %2865 = vmatpush1.bf16.msra.mxu0 %v2843
        %2866 = vmatprep.subr.bf16.mxu0 0
        %2867 = vmatpush1.bf16.msra.mxu0 %v2844
        %2868 = vmatprep.subr.bf16.mxu0 0
        %2869 = vmatpush1.bf16.msra.mxu0 %v2845
        %2870 = vmatprep.subr.bf16.mxu0 0
        %2871 = vmatpush1.bf16.msra.mxu0 0
        %2872 = vmatprep.subr.bf16.mxu0 0
        %2873 = vmatpush1.bf16.msra.mxu0 0
        %2874 = vmatprep.subr.bf16.mxu0 0
        %2875 = vmatpush1.bf16.msra.mxu0 0
        %2876 = vmatprep.subr.bf16.mxu0 0
        %2877 = vmatpush1.bf16.msra.mxu0 0
        %2878 = vmatprep.subr.bf16.mxu0 0
        %2879 = vmatpush1.bf16.msra.mxu0 0
        %2880 = vmatprep.subr.bf16.mxu0 0
        %2881 = vmatpush1.bf16.msra.mxu0 0
        %2882 = vmatprep.subr.bf16.mxu0 0
        %2883 = vmatpush1.bf16.msra.mxu0 0
        %2884 = vmatprep.subr.bf16.mxu0 0
        %2885 = vmatpush1.bf16.msra.mxu0 0
        %2886 = vmatprep.mubr.bf16.mxu0 0
        %2887 = vmatmul.mubr.bf16.gmra.mrb[0].mxu0 %v2775
        %v2888 = vpop.f32.mrb[0].mxu0
        %v2889 = vadd.f32 %v2804, %v2888
        %v2890 = vpop.f32.mrb[0].mxu0
        %v2891 = vpop.f32.mrb[0].mxu0
        %v2892 = vadd.f32 %v2804, %v2891
        %v2893 = vpop.f32.mrb[0].mxu0
        %2894 = vmatprep.mubr.bf16.mxu0 0
        %2895 = vmatmul.mubr.bf16.gmra.mrb[0].mxu0 %v2776
        %v2896 = vpop.f32.mrb[0].mxu0
        %v2897 = vadd.f32 %v2804, %v2896
        %v2898 = vpop.f32.mrb[0].mxu0
        %v2899 = vpop.f32.mrb[0].mxu0
        %v2900 = vadd.f32 %v2804, %v2899
        %v2901 = vpop.f32.mrb[0].mxu0
        %2902 = vmatprep.mubr.bf16.mxu0 0
        %2903 = vmatmul.mubr.bf16.gmra.mrb[0].mxu0 %v2777
        %v2904 = vpop.f32.mrb[0].mxu0
        %v2905 = vadd.f32 %v2804, %v2904
        %v2906 = vpop.f32.mrb[0].mxu0
        %v2907 = vpop.f32.mrb[0].mxu0
        %v2908 = vadd.f32 %v2804, %v2907
        %v2909 = vpop.f32.mrb[0].mxu0
        %2910 = vmatprep.mubr.bf16.mxu0 0
        %2911 = vmatmul.mubr.bf16.gmra.mrb[0].mxu0 %v2778
        %v2912 = vpop.f32.mrb[0].mxu0
        %v2913 = vadd.f32 %v2804, %v2912
        %v2914 = vpop.f32.mrb[0].mxu0
        %v2915 = vpop.f32.mrb[0].mxu0
        %v2916 = vadd.f32 %v2804, %v2915
        %v2917 = vpop.f32.mrb[0].mxu0
        %2918 = vmatprep.mubr.bf16.mxu0 0
        %2919 = vmatmul.mubr.bf16.gmra.mrb[0].mxu0 %v2779
        %v2920 = vpop.f32.mrb[0].mxu0
        %v2921 = vadd.f32 %v2804, %v2920
        %v2922 = vpop.f32.mrb[0].mxu0
        %v2923 = vpop.f32.mrb[0].mxu0
        %v2924 = vadd.f32 %v2804, %v2923
        %v2925 = vpop.f32.mrb[0].mxu0
        %2926 = vmatprep.mubr.bf16.mxu0 0
        %2927 = vmatmul.mubr.bf16.gmra.mrb[0].mxu0 %v2780
        %v2928 = vpop.f32.mrb[0].mxu0
        %v2929 = vadd.f32 %v2804, %v2928
        %v2930 = vpop.f32.mrb[0].mxu0
        %v2931 = vpop.f32.mrb[0].mxu0
        %v2932 = vadd.f32 %v2804, %v2931
        %v2933 = vpop.f32.mrb[0].mxu0
        %2934 = vmatprep.mubr.bf16.mxu0 0
        %2935 = vmatmul.mubr.bf16.gmra.mrb[0].mxu0 %v2781
        %v2936 = vpop.f32.mrb[0].mxu0
        %v2937 = vadd.f32 %v2804, %v2936
        %v2938 = vpop.f32.mrb[0].mxu0
        %v2939 = vpop.f32.mrb[0].mxu0
        %v2940 = vadd.f32 %v2804, %v2939
        %v2941 = vpop.f32.mrb[0].mxu0
        %2942 = vmatprep.mubr.bf16.mxu0 0
        %2943 = vmatmul.mubr.bf16.gmra.mrb[0].mxu0 %v2782
        %v2944 = vpop.f32.mrb[0].mxu0
        %v2945 = vadd.f32 %v2804, %v2944
        %v2946 = vpop.f32.mrb[0].mxu0
        %v2947 = vpop.f32.mrb[0].mxu0
        %v2948 = vadd.f32 %v2804, %v2947
        %v2949 = vpop.f32.mrb[0].mxu0
        %2950 = vdwg.mxu0
        %v2951 = vmax.f32 %v2889, 0.0
        %v2952 = vmax.f32 %v2892, 0.0
        %v2953 = vmax.f32 %v2897, 0.0
        %v2954 = vmax.f32 %v2900, 0.0
        %v2955 = vmax.f32 %v2905, 0.0
        %v2956 = vmax.f32 %v2908, 0.0
        %v2957 = vmax.f32 %v2913, 0.0
        %v2958 = vmax.f32 %v2916, 0.0
        %v2959 = vmax.f32 %v2921, 0.0
        %v2960 = vmax.f32 %v2924, 0.0
        %v2961 = vmax.f32 %v2929, 0.0
        %v2962 = vmax.f32 %v2932, 0.0
        %v2963 = vmax.f32 %v2937, 0.0
        %v2964 = vmax.f32 %v2940, 0.0
        %v2965 = vmax.f32 %v2945, 0.0
        %v2966 = vmax.f32 %v2948, 0.0
        %v2967 = vpack.c.bf16 %v2952, %v2951
        %v2968 = vpack.c.bf16 %v2954, %v2953
        %v2969 = vpack.c.bf16 %v2956, %v2955
        %v2970 = vpack.c.bf16 %v2958, %v2957
        %v2971 = vpack.c.bf16 %v2960, %v2959
        %v2972 = vpack.c.bf16 %v2962, %v2961
        %v2973 = vpack.c.bf16 %v2964, %v2963
        %v2974 = vpack.c.bf16 %v2966, %v2965
        %v2975 = vld [vmem:[%s10] sm:$0xff]
        %v2976 = vld [vmem:[%s10 + $0x8] sm:$0xff]
        %v2977 = vld [vmem:[%s10 + $0x10] sm:$0xff]
        %v2978 = vld [vmem:[%s10 + $0x18] sm:$0xff]
        %v2979 = vld [vmem:[%s10 + $0x20] sm:$0xff]
        %v2980 = vld [vmem:[%s10 + $0x28] sm:$0xff]
        %v2981 = vld [vmem:[%s10 + $0x30] sm:$0xff]
        %v2982 = vld [vmem:[%s10 + $0x38] sm:$0xff]
        %v2983 = vld [vmem:[%s10 + $0x40] sm:$0xff]
        %v2984 = vld [vmem:[%s10 + $0x48] sm:$0xff]
        %v2985 = vld [vmem:[%s10 + $0x50] sm:$0xff]
        %v2986 = vld [vmem:[%s10 + $0x58] sm:$0xff]
        %v2987 = vld [vmem:[%s10 + $0x60] sm:$0xff]
        %v2988 = vld [vmem:[%s10 + $0x68] sm:$0xff]
        %v2989 = vld [vmem:[%s10 + $0x70] sm:$0xff]
        %v2990 = vld [vmem:[%s10 + $0x78] sm:$0xff]
        %v2991 = vld [vmem:[%s11] sm:$0x3]
        %v2993 = vlaneseq
        %v2994 = vshrl.u32 %v2993, 7
        %v2995 = vsub.s32 0, %v2994
        %v2996 = vrot.slane %v2991, %v2995
        %v2997 = vlaneseq
        %v2998 = vshrl.u32 %v2997, 7
        %v2999 = vsub.s32 1, %v2998
        %v3000 = vrot.slane %v2991, %v2999
        %v3019 = vunpack.c.l.b16 %v2975
        %v3020 = vunpack.c.h.b16 %v2975
        %v3021 = vunpack.c.l.b16 %v2976
        %v3022 = vunpack.c.h.b16 %v2976
        %v3023 = vunpack.c.l.b16 %v2977
        %v3024 = vunpack.c.h.b16 %v2977
        %v3025 = vunpack.c.l.b16 %v2978
        %v3026 = vunpack.c.h.b16 %v2978
        %v3027 = vunpack.c.l.b16 %v2979
        %v3028 = vunpack.c.h.b16 %v2979
        %v3029 = vunpack.c.l.b16 %v2980
        %v3030 = vunpack.c.h.b16 %v2980
        %v3031 = vunpack.c.l.b16 %v2981
        %v3032 = vunpack.c.h.b16 %v2981
        %v3033 = vunpack.c.l.b16 %v2982
        %v3034 = vunpack.c.h.b16 %v2982
        %v3035 = vunpack.c.l.b16 %v2983
        %v3036 = vunpack.c.h.b16 %v2983
        %v3037 = vunpack.c.l.b16 %v2984
        %v3038 = vunpack.c.h.b16 %v2984
        %v3039 = vunpack.c.l.b16 %v2985
        %v3040 = vunpack.c.h.b16 %v2985
        %v3041 = vunpack.c.l.b16 %v2986
        %v3042 = vunpack.c.h.b16 %v2986
        %v3043 = vunpack.c.l.b16 %v2987
        %v3044 = vunpack.c.h.b16 %v2987
        %v3045 = vunpack.c.l.b16 %v2988
        %v3046 = vunpack.c.h.b16 %v2988
        %v3047 = vunpack.c.l.b16 %v2989
        %v3048 = vunpack.c.h.b16 %v2989
        %v3049 = vunpack.c.l.b16 %v2990
        %v3050 = vunpack.c.h.b16 %v2990
        %v3051 = vpack.c.b16 %v3021, %v3019
        %v3052 = vpack.c.b16 %v3022, %v3020
        %v3053 = vpack.c.b16 %v3025, %v3023
        %v3054 = vpack.c.b16 %v3026, %v3024
        %v3055 = vpack.c.b16 %v3029, %v3027
        %v3056 = vpack.c.b16 %v3030, %v3028
        %v3057 = vpack.c.b16 %v3033, %v3031
        %v3058 = vpack.c.b16 %v3034, %v3032
        %v3059 = vpack.c.b16 %v3037, %v3035
        %v3060 = vpack.c.b16 %v3038, %v3036
        %v3061 = vpack.c.b16 %v3041, %v3039
        %v3062 = vpack.c.b16 %v3042, %v3040
        %v3063 = vpack.c.b16 %v3045, %v3043
        %v3064 = vpack.c.b16 %v3046, %v3044
        %v3065 = vpack.c.b16 %v3049, %v3047
        %v3066 = vpack.c.b16 %v3050, %v3048
        %3083 = vmatprep.subr.bf16.mxu0 %v3052
        %3084 = vmatpush1.bf16.msra.mxu0 %v3051
        %3085 = vmatprep.subr.bf16.mxu0 %v3054
        %3086 = vmatpush1.bf16.msra.mxu0 %v3053
        %3087 = vmatprep.subr.bf16.mxu0 %v3056
        %3088 = vmatpush1.bf16.msra.mxu0 %v3055
        %3089 = vmatprep.subr.bf16.mxu0 %v3058
        %3090 = vmatpush1.bf16.msra.mxu0 %v3057
        %3091 = vmatprep.subr.bf16.mxu0 %v3060
        %3092 = vmatpush1.bf16.msra.mxu0 %v3059
        %3093 = vmatprep.subr.bf16.mxu0 %v3062
        %3094 = vmatpush1.bf16.msra.mxu0 %v3061
        %3095 = vmatprep.subr.bf16.mxu0 %v3064
        %3096 = vmatpush1.bf16.msra.mxu0 %v3063
        %3097 = vmatprep.subr.bf16.mxu0 %v3066
        %3098 = vmatpush1.bf16.msra.mxu0 %v3065
        %3099 = vmatprep.subr.bf16.mxu0 0
        %3100 = vmatpush1.bf16.msra.mxu0 0
        %3101 = vmatprep.subr.bf16.mxu0 0
        %3102 = vmatpush1.bf16.msra.mxu0 0
        %3103 = vmatprep.subr.bf16.mxu0 0
        %3104 = vmatpush1.bf16.msra.mxu0 0
        %3105 = vmatprep.subr.bf16.mxu0 0
        %3106 = vmatpush1.bf16.msra.mxu0 0
        %3107 = vmatprep.subr.bf16.mxu0 0
        %3108 = vmatpush1.bf16.msra.mxu0 0
        %3109 = vmatprep.subr.bf16.mxu0 0
        %3110 = vmatpush1.bf16.msra.mxu0 0
        %3111 = vmatprep.subr.bf16.mxu0 0
        %3112 = vmatpush1.bf16.msra.mxu0 0
        %3113 = vmatprep.subr.bf16.mxu0 0
        %3114 = vmatpush1.bf16.msra.mxu0 0
        %3115 = vmatprep.mubr.bf16.mxu0 0
        %3116 = vmatmul.mubr.bf16.gmra.mrb[0].mxu0 %v2967
        %v3117 = vpop.f32.mrb[0].mxu0
        %v3118 = vadd.f32 %v2996, %v3117
        %v3119 = vpop.f32.mrb[0].mxu0
        %v3120 = vadd.f32 %v3000, %v3119
        %v3121 = vpop.f32.mrb[0].mxu0
        %v3122 = vadd.f32 %v2996, %v3121
        %v3123 = vpop.f32.mrb[0].mxu0
        %v3124 = vadd.f32 %v3000, %v3123
        %3125 = vmatprep.mubr.bf16.mxu0 0
        %3126 = vmatmul.mubr.bf16.gmra.mrb[0].mxu0 %v2968
        %v3127 = vpop.f32.mrb[0].mxu0
        %v3128 = vadd.f32 %v2996, %v3127
        %v3129 = vpop.f32.mrb[0].mxu0
        %v3130 = vadd.f32 %v3000, %v3129
        %v3131 = vpop.f32.mrb[0].mxu0
        %v3132 = vadd.f32 %v2996, %v3131
        %v3133 = vpop.f32.mrb[0].mxu0
        %v3134 = vadd.f32 %v3000, %v3133
        %3135 = vmatprep.mubr.bf16.mxu0 0
        %3136 = vmatmul.mubr.bf16.gmra.mrb[0].mxu0 %v2969
        %v3137 = vpop.f32.mrb[0].mxu0
        %v3138 = vadd.f32 %v2996, %v3137
        %v3139 = vpop.f32.mrb[0].mxu0
        %v3140 = vadd.f32 %v3000, %v3139
        %v3141 = vpop.f32.mrb[0].mxu0
        %v3142 = vadd.f32 %v2996, %v3141
        %v3143 = vpop.f32.mrb[0].mxu0
        %v3144 = vadd.f32 %v3000, %v3143
        %3145 = vmatprep.mubr.bf16.mxu0 0
        %3146 = vmatmul.mubr.bf16.gmra.mrb[0].mxu0 %v2970
        %v3147 = vpop.f32.mrb[0].mxu0
        %v3148 = vadd.f32 %v2996, %v3147
        %v3149 = vpop.f32.mrb[0].mxu0
        %v3150 = vadd.f32 %v3000, %v3149
        %v3151 = vpop.f32.mrb[0].mxu0
        %v3152 = vadd.f32 %v2996, %v3151
        %v3153 = vpop.f32.mrb[0].mxu0
        %v3154 = vadd.f32 %v3000, %v3153
        %3155 = vmatprep.mubr.bf16.mxu0 0
        %3156 = vmatmul.mubr.bf16.gmra.mrb[0].mxu0 %v2971
        %v3157 = vpop.f32.mrb[0].mxu0
        %v3158 = vadd.f32 %v2996, %v3157
        %v3159 = vpop.f32.mrb[0].mxu0
        %v3160 = vadd.f32 %v3000, %v3159
        %v3161 = vpop.f32.mrb[0].mxu0
        %v3162 = vadd.f32 %v2996, %v3161
        %v3163 = vpop.f32.mrb[0].mxu0
        %v3164 = vadd.f32 %v3000, %v3163
        %3165 = vmatprep.mubr.bf16.mxu0 0
        %3166 = vmatmul.mubr.bf16.gmra.mrb[0].mxu0 %v2972
        %v3167 = vpop.f32.mrb[0].mxu0
        %v3168 = vadd.f32 %v2996, %v3167
        %v3169 = vpop.f32.mrb[0].mxu0
        %v3170 = vadd.f32 %v3000, %v3169
        %v3171 = vpop.f32.mrb[0].mxu0
        %v3172 = vadd.f32 %v2996, %v3171
        %v3173 = vpop.f32.mrb[0].mxu0
        %v3174 = vadd.f32 %v3000, %v3173
        %3175 = vmatprep.mubr.bf16.mxu0 0
        %3176 = vmatmul.mubr.bf16.gmra.mrb[0].mxu0 %v2973
        %v3177 = vpop.f32.mrb[0].mxu0
        %v3178 = vadd.f32 %v2996, %v3177
        %v3179 = vpop.f32.mrb[0].mxu0
        %v3180 = vadd.f32 %v3000, %v3179
        %v3181 = vpop.f32.mrb[0].mxu0
        %v3182 = vadd.f32 %v2996, %v3181
        %v3183 = vpop.f32.mrb[0].mxu0
        %v3184 = vadd.f32 %v3000, %v3183
        %3185 = vmatprep.mubr.bf16.mxu0 0
        %3186 = vmatmul.mubr.bf16.gmra.mrb[0].mxu0 %v2974
        %v3187 = vpop.f32.mrb[0].mxu0
        %v3188 = vadd.f32 %v2996, %v3187
        %v3189 = vpop.f32.mrb[0].mxu0
        %v3190 = vadd.f32 %v3000, %v3189
        %v3191 = vpop.f32.mrb[0].mxu0
        %v3192 = vadd.f32 %v2996, %v3191
        %v3193 = vpop.f32.mrb[0].mxu0
        %v3194 = vadd.f32 %v3000, %v3193
        %3195 = vdwg.mxu0
        %v3196 = vmax.f32 %v3118, 0.0
        %v3197 = vmax.f32 %v3120, 0.0
        %v3198 = vmax.f32 %v3122, 0.0
        %v3199 = vmax.f32 %v3124, 0.0
        %v3200 = vmax.f32 %v3128, 0.0
        %v3201 = vmax.f32 %v3130, 0.0
        %v3202 = vmax.f32 %v3132, 0.0
        %v3203 = vmax.f32 %v3134, 0.0
        %v3204 = vmax.f32 %v3138, 0.0
        %v3205 = vmax.f32 %v3140, 0.0
        %v3206 = vmax.f32 %v3142, 0.0
        %v3207 = vmax.f32 %v3144, 0.0
        %v3208 = vmax.f32 %v3148, 0.0
        %v3209 = vmax.f32 %v3150, 0.0
        %v3210 = vmax.f32 %v3152, 0.0
        %v3211 = vmax.f32 %v3154, 0.0
        %v3212 = vmax.f32 %v3158, 0.0
        %v3213 = vmax.f32 %v3160, 0.0
        %v3214 = vmax.f32 %v3162, 0.0
        %v3215 = vmax.f32 %v3164, 0.0
        %v3216 = vmax.f32 %v3168, 0.0
        %v3217 = vmax.f32 %v3170, 0.0
        %v3218 = vmax.f32 %v3172, 0.0
        %v3219 = vmax.f32 %v3174, 0.0
        %v3220 = vmax.f32 %v3178, 0.0
        %v3221 = vmax.f32 %v3180, 0.0
        %v3222 = vmax.f32 %v3182, 0.0
        %v3223 = vmax.f32 %v3184, 0.0
        %v3224 = vmax.f32 %v3188, 0.0
        %v3225 = vmax.f32 %v3190, 0.0
        %v3226 = vmax.f32 %v3192, 0.0
        %v3227 = vmax.f32 %v3194, 0.0
        %v3228 = vpack.c.bf16 %v3198, %v3196
        %v3229 = vpack.c.bf16 %v3199, %v3197
        %v3230 = vpack.c.bf16 %v3202, %v3200
        %v3231 = vpack.c.bf16 %v3203, %v3201
        %v3232 = vpack.c.bf16 %v3206, %v3204
        %v3233 = vpack.c.bf16 %v3207, %v3205
        %v3234 = vpack.c.bf16 %v3210, %v3208
        %v3235 = vpack.c.bf16 %v3211, %v3209
        %v3236 = vpack.c.bf16 %v3214, %v3212
        %v3237 = vpack.c.bf16 %v3215, %v3213
        %v3238 = vpack.c.bf16 %v3218, %v3216
        %v3239 = vpack.c.bf16 %v3219, %v3217
        %v3240 = vpack.c.bf16 %v3222, %v3220
        %v3241 = vpack.c.bf16 %v3223, %v3221
        %v3242 = vpack.c.bf16 %v3226, %v3224
        %v3243 = vpack.c.bf16 %v3227, %v3225
        %v3244 = vld [vmem:[%s12] sm:$0xff]
        %v3245 = vld [vmem:[%s12 + $0x8] sm:$0xff]
        %v3246 = vld [vmem:[%s12 + $0x10] sm:$0xff]
        %v3247 = vld [vmem:[%s12 + $0x18] sm:$0xff]
        %v3248 = vld [vmem:[%s12 + $0x20] sm:$0xff]
        %v3249 = vld [vmem:[%s12 + $0x28] sm:$0xff]
        %v3250 = vld [vmem:[%s12 + $0x30] sm:$0xff]
        %v3251 = vld [vmem:[%s12 + $0x38] sm:$0xff]
        %v3252 = vld [vmem:[%s12 + $0x40] sm:$0xff]
        %v3253 = vld [vmem:[%s12 + $0x48] sm:$0xff]
        %v3254 = vld [vmem:[%s12 + $0x50] sm:$0xff]
        %v3255 = vld [vmem:[%s12 + $0x58] sm:$0xff]
        %v3256 = vld [vmem:[%s12 + $0x60] sm:$0xff]
        %v3257 = vld [vmem:[%s12 + $0x68] sm:$0xff]
        %v3258 = vld [vmem:[%s12 + $0x70] sm:$0xff]
        %v3259 = vld [vmem:[%s12 + $0x78] sm:$0xff]
        %v3260 = vld [vmem:[%s12 + $0x80] sm:$0xff]
        %v3261 = vld [vmem:[%s12 + $0x88] sm:$0xff]
        %v3262 = vld [vmem:[%s12 + $0x90] sm:$0xff]
        %v3263 = vld [vmem:[%s12 + $0x98] sm:$0xff]
        %v3264 = vld [vmem:[%s12 + $0xa0] sm:$0xff]
        %v3265 = vld [vmem:[%s12 + $0xa8] sm:$0xff]
        %v3266 = vld [vmem:[%s12 + $0xb0] sm:$0xff]
        %v3267 = vld [vmem:[%s12 + $0xb8] sm:$0xff]
        %v3268 = vld [vmem:[%s12 + $0xc0] sm:$0xff]
        %v3269 = vld [vmem:[%s12 + $0xc8] sm:$0xff]
        %v3270 = vld [vmem:[%s12 + $0xd0] sm:$0xff]
        %v3271 = vld [vmem:[%s12 + $0xd8] sm:$0xff]
        %v3272 = vld [vmem:[%s12 + $0xe0] sm:$0xff]
        %v3273 = vld [vmem:[%s12 + $0xe8] sm:$0xff]
        %v3274 = vld [vmem:[%s12 + $0xf0] sm:$0xff]
        %v3275 = vld [vmem:[%s12 + $0xf8] sm:$0xff]
        %v3276 = vld [vmem:[%s12 + $0x100] sm:$0xff]
        %v3277 = vld [vmem:[%s12 + $0x108] sm:$0xff]
        %v3278 = vld [vmem:[%s12 + $0x110] sm:$0xff]
        %v3279 = vld [vmem:[%s12 + $0x118] sm:$0xff]
        %v3280 = vld [vmem:[%s12 + $0x120] sm:$0xff]
        %v3281 = vld [vmem:[%s12 + $0x128] sm:$0xff]
        %v3282 = vld [vmem:[%s12 + $0x130] sm:$0xff]
        %v3283 = vld [vmem:[%s12 + $0x138] sm:$0xff]
        %v3284 = vld [vmem:[%s12 + $0x140] sm:$0xff]
        %v3285 = vld [vmem:[%s12 + $0x148] sm:$0xff]
        %v3286 = vld [vmem:[%s12 + $0x150] sm:$0xff]
        %v3287 = vld [vmem:[%s12 + $0x158] sm:$0xff]
        %v3288 = vld [vmem:[%s12 + $0x160] sm:$0xff]
        %v3289 = vld [vmem:[%s12 + $0x168] sm:$0xff]
        %v3290 = vld [vmem:[%s12 + $0x170] sm:$0xff]
        %v3291 = vld [vmem:[%s12 + $0x178] sm:$0xff]
        %v3292 = vld [vmem:[%s12 + $0x180] sm:$0xff]
        %v3293 = vld [vmem:[%s12 + $0x188] sm:$0xff]
        %v3294 = vld [vmem:[%s12 + $0x190] sm:$0xff]
        %v3295 = vld [vmem:[%s12 + $0x198] sm:$0xff]
        %v3296 = vld [vmem:[%s12 + $0x1a0] sm:$0xff]
        %v3297 = vld [vmem:[%s12 + $0x1a8] sm:$0xff]
        %v3298 = vld [vmem:[%s12 + $0x1b0] sm:$0xff]
        %v3299 = vld [vmem:[%s12 + $0x1b8] sm:$0xff]
        %v3300 = vld [vmem:[%s12 + $0x1c0] sm:$0xff]
        %v3301 = vld [vmem:[%s12 + $0x1c8] sm:$0xff]
        %v3302 = vld [vmem:[%s12 + $0x1d0] sm:$0xff]
        %v3303 = vld [vmem:[%s12 + $0x1d8] sm:$0xff]
        %v3304 = vld [vmem:[%s12 + $0x1e0] sm:$0xff]
        %v3305 = vld [vmem:[%s12 + $0x1e8] sm:$0xff]
        %v3306 = vld [vmem:[%s12 + $0x1f0] sm:$0xff]
        %v3307 = vld [vmem:[%s12 + $0x1f8] sm:$0xff]
        %v3308 = vld [vmem:[%s12 + $0x200] sm:$0xff]
        %v3309 = vld [vmem:[%s12 + $0x208] sm:$0xff]
        %v3310 = vld [vmem:[%s12 + $0x210] sm:$0xff]
        %v3311 = vld [vmem:[%s12 + $0x218] sm:$0xff]
        %v3312 = vld [vmem:[%s12 + $0x220] sm:$0xff]
        %v3313 = vld [vmem:[%s12 + $0x228] sm:$0xff]
        %v3314 = vld [vmem:[%s12 + $0x230] sm:$0xff]
        %v3315 = vld [vmem:[%s12 + $0x238] sm:$0xff]
        %v3316 = vld [vmem:[%s12 + $0x240] sm:$0xff]
        %v3317 = vld [vmem:[%s12 + $0x248] sm:$0xff]
        %v3318 = vld [vmem:[%s12 + $0x250] sm:$0xff]
        %v3319 = vld [vmem:[%s12 + $0x258] sm:$0xff]
        %v3320 = vld [vmem:[%s12 + $0x260] sm:$0xff]
        %v3321 = vld [vmem:[%s12 + $0x268] sm:$0xff]
        %v3322 = vld [vmem:[%s12 + $0x270] sm:$0xff]
        %v3323 = vld [vmem:[%s12 + $0x278] sm:$0xff]
        %v3324 = vld [vmem:[%s12 + $0x280] sm:$0xff]
        %v3325 = vld [vmem:[%s12 + $0x288] sm:$0xff]
        %v3326 = vld [vmem:[%s12 + $0x290] sm:$0xff]
        %v3327 = vld [vmem:[%s12 + $0x298] sm:$0xff]
        %v3328 = vld [vmem:[%s12 + $0x2a0] sm:$0xff]
        %v3329 = vld [vmem:[%s12 + $0x2a8] sm:$0xff]
        %v3330 = vld [vmem:[%s12 + $0x2b0] sm:$0xff]
        %v3331 = vld [vmem:[%s12 + $0x2b8] sm:$0xff]
        %v3332 = vld [vmem:[%s12 + $0x2c0] sm:$0xff]
        %v3333 = vld [vmem:[%s12 + $0x2c8] sm:$0xff]
        %v3334 = vld [vmem:[%s12 + $0x2d0] sm:$0xff]
        %v3335 = vld [vmem:[%s12 + $0x2d8] sm:$0xff]
        %v3336 = vld [vmem:[%s12 + $0x2e0] sm:$0xff]
        %v3337 = vld [vmem:[%s12 + $0x2e8] sm:$0xff]
        %v3338 = vld [vmem:[%s12 + $0x2f0] sm:$0xff]
        %v3339 = vld [vmem:[%s12 + $0x2f8] sm:$0xff]
        %v3340 = vld [vmem:[%s12 + $0x300] sm:$0xff]
        %v3341 = vld [vmem:[%s12 + $0x308] sm:$0xff]
        %v3342 = vld [vmem:[%s12 + $0x310] sm:$0xff]
        %v3343 = vld [vmem:[%s12 + $0x318] sm:$0xff]
        %v3344 = vld [vmem:[%s12 + $0x320] sm:$0xff]
        %v3345 = vld [vmem:[%s12 + $0x328] sm:$0xff]
        %v3346 = vld [vmem:[%s12 + $0x330] sm:$0xff]
        %v3347 = vld [vmem:[%s12 + $0x338] sm:$0xff]
        %v3348 = vld [vmem:[%s12 + $0x340] sm:$0xff]
        %v3349 = vld [vmem:[%s12 + $0x348] sm:$0xff]
        %v3350 = vld [vmem:[%s12 + $0x350] sm:$0xff]
        %v3351 = vld [vmem:[%s12 + $0x358] sm:$0xff]
        %v3352 = vld [vmem:[%s12 + $0x360] sm:$0xff]
        %v3353 = vld [vmem:[%s12 + $0x368] sm:$0xff]
        %v3354 = vld [vmem:[%s12 + $0x370] sm:$0xff]
        %v3355 = vld [vmem:[%s12 + $0x378] sm:$0xff]
        %v3356 = vld [vmem:[%s12 + $0x380] sm:$0xff]
        %v3357 = vld [vmem:[%s12 + $0x388] sm:$0xff]
        %v3358 = vld [vmem:[%s12 + $0x390] sm:$0xff]
        %v3359 = vld [vmem:[%s12 + $0x398] sm:$0xff]
        %v3360 = vld [vmem:[%s12 + $0x3a0] sm:$0xff]
        %v3361 = vld [vmem:[%s12 + $0x3a8] sm:$0xff]
        %v3362 = vld [vmem:[%s12 + $0x3b0] sm:$0xff]
        %v3363 = vld [vmem:[%s12 + $0x3b8] sm:$0xff]
        %v3364 = vld [vmem:[%s12 + $0x3c0] sm:$0xff]
        %v3365 = vld [vmem:[%s12 + $0x3c8] sm:$0xff]
        %v3366 = vld [vmem:[%s12 + $0x3d0] sm:$0xff]
        %v3367 = vld [vmem:[%s12 + $0x3d8] sm:$0xff]
        %v3368 = vld [vmem:[%s12 + $0x3e0] sm:$0xff]
        %v3369 = vld [vmem:[%s12 + $0x3e8] sm:$0xff]
        %v3370 = vld [vmem:[%s12 + $0x3f0] sm:$0xff]
        %v3371 = vld [vmem:[%s12 + $0x3f8] sm:$0xff]
        %v3372 = vld [vmem:[%s13] sm:$0xff]
        %v3374 = vlaneseq
        %v3375 = vshrl.u32 %v3374, 7
        %v3376 = vsub.s32 0, %v3375
        %v3377 = vrot.slane %v3372, %v3376
        %v3378 = vlaneseq
        %v3379 = vshrl.u32 %v3378, 7
        %v3380 = vsub.s32 1, %v3379
        %v3381 = vrot.slane %v3372, %v3380
        %v3382 = vlaneseq
        %v3383 = vshrl.u32 %v3382, 7
        %v3384 = vsub.s32 2, %v3383
        %v3385 = vrot.slane %v3372, %v3384
        %v3386 = vlaneseq
        %v3387 = vshrl.u32 %v3386, 7
        %v3388 = vsub.s32 3, %v3387
        %v3389 = vrot.slane %v3372, %v3388
        %v3390 = vlaneseq
        %v3391 = vshrl.u32 %v3390, 7
        %v3392 = vsub.s32 4, %v3391
        %v3393 = vrot.slane %v3372, %v3392
        %v3394 = vlaneseq
        %v3395 = vshrl.u32 %v3394, 7
        %v3396 = vsub.s32 5, %v3395
        %v3397 = vrot.slane %v3372, %v3396
        %v3398 = vlaneseq
        %v3399 = vshrl.u32 %v3398, 7
        %v3400 = vsub.s32 6, %v3399
        %v3401 = vrot.slane %v3372, %v3400
        %v3402 = vlaneseq
        %v3403 = vshrl.u32 %v3402, 7
        %v3404 = vsub.s32 7, %v3403
        %v3405 = vrot.slane %v3372, %v3404
        %v3542 = vunpack.c.l.b16 %v3244
        %v3543 = vunpack.c.h.b16 %v3244
        %v3544 = vunpack.c.l.b16 %v3245
        %v3545 = vunpack.c.h.b16 %v3245
        %v3546 = vunpack.c.l.b16 %v3246
        %v3547 = vunpack.c.h.b16 %v3246
        %v3548 = vunpack.c.l.b16 %v3247
        %v3549 = vunpack.c.h.b16 %v3247
        %v3550 = vunpack.c.l.b16 %v3248
        %v3551 = vunpack.c.h.b16 %v3248
        %v3552 = vunpack.c.l.b16 %v3249
        %v3553 = vunpack.c.h.b16 %v3249
        %v3554 = vunpack.c.l.b16 %v3250
        %v3555 = vunpack.c.h.b16 %v3250
        %v3556 = vunpack.c.l.b16 %v3251
        %v3557 = vunpack.c.h.b16 %v3251
        %v3558 = vunpack.c.l.b16 %v3252
        %v3559 = vunpack.c.h.b16 %v3252
        %v3560 = vunpack.c.l.b16 %v3253
        %v3561 = vunpack.c.h.b16 %v3253
        %v3562 = vunpack.c.l.b16 %v3254
        %v3563 = vunpack.c.h.b16 %v3254
        %v3564 = vunpack.c.l.b16 %v3255
        %v3565 = vunpack.c.h.b16 %v3255
        %v3566 = vunpack.c.l.b16 %v3256
        %v3567 = vunpack.c.h.b16 %v3256
        %v3568 = vunpack.c.l.b16 %v3257
        %v3569 = vunpack.c.h.b16 %v3257
        %v3570 = vunpack.c.l.b16 %v3258
        %v3571 = vunpack.c.h.b16 %v3258
        %v3572 = vunpack.c.l.b16 %v3259
        %v3573 = vunpack.c.h.b16 %v3259
        %v3574 = vunpack.c.l.b16 %v3260
        %v3575 = vunpack.c.h.b16 %v3260
        %v3576 = vunpack.c.l.b16 %v3261
        %v3577 = vunpack.c.h.b16 %v3261
        %v3578 = vunpack.c.l.b16 %v3262
        %v3579 = vunpack.c.h.b16 %v3262
        %v3580 = vunpack.c.l.b16 %v3263
        %v3581 = vunpack.c.h.b16 %v3263
        %v3582 = vunpack.c.l.b16 %v3264
        %v3583 = vunpack.c.h.b16 %v3264
        %v3584 = vunpack.c.l.b16 %v3265
        %v3585 = vunpack.c.h.b16 %v3265
        %v3586 = vunpack.c.l.b16 %v3266
        %v3587 = vunpack.c.h.b16 %v3266
        %v3588 = vunpack.c.l.b16 %v3267
        %v3589 = vunpack.c.h.b16 %v3267
        %v3590 = vunpack.c.l.b16 %v3268
        %v3591 = vunpack.c.h.b16 %v3268
        %v3592 = vunpack.c.l.b16 %v3269
        %v3593 = vunpack.c.h.b16 %v3269
        %v3594 = vunpack.c.l.b16 %v3270
        %v3595 = vunpack.c.h.b16 %v3270
        %v3596 = vunpack.c.l.b16 %v3271
        %v3597 = vunpack.c.h.b16 %v3271
        %v3598 = vunpack.c.l.b16 %v3272
        %v3599 = vunpack.c.h.b16 %v3272
        %v3600 = vunpack.c.l.b16 %v3273
        %v3601 = vunpack.c.h.b16 %v3273
        %v3602 = vunpack.c.l.b16 %v3274
        %v3603 = vunpack.c.h.b16 %v3274
        %v3604 = vunpack.c.l.b16 %v3275
        %v3605 = vunpack.c.h.b16 %v3275
        %v3606 = vunpack.c.l.b16 %v3276
        %v3607 = vunpack.c.h.b16 %v3276
        %v3608 = vunpack.c.l.b16 %v3277
        %v3609 = vunpack.c.h.b16 %v3277
        %v3610 = vunpack.c.l.b16 %v3278
        %v3611 = vunpack.c.h.b16 %v3278
        %v3612 = vunpack.c.l.b16 %v3279
        %v3613 = vunpack.c.h.b16 %v3279
        %v3614 = vunpack.c.l.b16 %v3280
        %v3615 = vunpack.c.h.b16 %v3280
        %v3616 = vunpack.c.l.b16 %v3281
        %v3617 = vunpack.c.h.b16 %v3281
        %v3618 = vunpack.c.l.b16 %v3282
        %v3619 = vunpack.c.h.b16 %v3282
        %v3620 = vunpack.c.l.b16 %v3283
        %v3621 = vunpack.c.h.b16 %v3283
        %v3622 = vunpack.c.l.b16 %v3284
        %v3623 = vunpack.c.h.b16 %v3284
        %v3624 = vunpack.c.l.b16 %v3285
        %v3625 = vunpack.c.h.b16 %v3285
        %v3626 = vunpack.c.l.b16 %v3286
        %v3627 = vunpack.c.h.b16 %v3286
        %v3628 = vunpack.c.l.b16 %v3287
        %v3629 = vunpack.c.h.b16 %v3287
        %v3630 = vunpack.c.l.b16 %v3288
        %v3631 = vunpack.c.h.b16 %v3288
        %v3632 = vunpack.c.l.b16 %v3289
        %v3633 = vunpack.c.h.b16 %v3289
        %v3634 = vunpack.c.l.b16 %v3290
        %v3635 = vunpack.c.h.b16 %v3290
        %v3636 = vunpack.c.l.b16 %v3291
        %v3637 = vunpack.c.h.b16 %v3291
        %v3638 = vunpack.c.l.b16 %v3292
        %v3639 = vunpack.c.h.b16 %v3292
        %v3640 = vunpack.c.l.b16 %v3293
        %v3641 = vunpack.c.h.b16 %v3293
        %v3642 = vunpack.c.l.b16 %v3294
        %v3643 = vunpack.c.h.b16 %v3294
        %v3644 = vunpack.c.l.b16 %v3295
        %v3645 = vunpack.c.h.b16 %v3295
        %v3646 = vunpack.c.l.b16 %v3296
        %v3647 = vunpack.c.h.b16 %v3296
        %v3648 = vunpack.c.l.b16 %v3297
        %v3649 = vunpack.c.h.b16 %v3297
        %v3650 = vunpack.c.l.b16 %v3298
        %v3651 = vunpack.c.h.b16 %v3298
        %v3652 = vunpack.c.l.b16 %v3299
        %v3653 = vunpack.c.h.b16 %v3299
        %v3654 = vunpack.c.l.b16 %v3300
        %v3655 = vunpack.c.h.b16 %v3300
        %v3656 = vunpack.c.l.b16 %v3301
        %v3657 = vunpack.c.h.b16 %v3301
        %v3658 = vunpack.c.l.b16 %v3302
        %v3659 = vunpack.c.h.b16 %v3302
        %v3660 = vunpack.c.l.b16 %v3303
        %v3661 = vunpack.c.h.b16 %v3303
        %v3662 = vunpack.c.l.b16 %v3304
        %v3663 = vunpack.c.h.b16 %v3304
        %v3664 = vunpack.c.l.b16 %v3305
        %v3665 = vunpack.c.h.b16 %v3305
        %v3666 = vunpack.c.l.b16 %v3306
        %v3667 = vunpack.c.h.b16 %v3306
        %v3668 = vunpack.c.l.b16 %v3307
        %v3669 = vunpack.c.h.b16 %v3307
        %v3670 = vunpack.c.l.b16 %v3308
        %v3671 = vunpack.c.h.b16 %v3308
        %v3672 = vunpack.c.l.b16 %v3309
        %v3673 = vunpack.c.h.b16 %v3309
        %v3674 = vunpack.c.l.b16 %v3310
        %v3675 = vunpack.c.h.b16 %v3310
        %v3676 = vunpack.c.l.b16 %v3311
        %v3677 = vunpack.c.h.b16 %v3311
        %v3678 = vunpack.c.l.b16 %v3312
        %v3679 = vunpack.c.h.b16 %v3312
        %v3680 = vunpack.c.l.b16 %v3313
        %v3681 = vunpack.c.h.b16 %v3313
        %v3682 = vunpack.c.l.b16 %v3314
        %v3683 = vunpack.c.h.b16 %v3314
        %v3684 = vunpack.c.l.b16 %v3315
        %v3685 = vunpack.c.h.b16 %v3315
        %v3686 = vunpack.c.l.b16 %v3316
        %v3687 = vunpack.c.h.b16 %v3316
        %v3688 = vunpack.c.l.b16 %v3317
        %v3689 = vunpack.c.h.b16 %v3317
        %v3690 = vunpack.c.l.b16 %v3318
        %v3691 = vunpack.c.h.b16 %v3318
        %v3692 = vunpack.c.l.b16 %v3319
        %v3693 = vunpack.c.h.b16 %v3319
        %v3694 = vunpack.c.l.b16 %v3320
        %v3695 = vunpack.c.h.b16 %v3320
        %v3696 = vunpack.c.l.b16 %v3321
        %v3697 = vunpack.c.h.b16 %v3321
        %v3698 = vunpack.c.l.b16 %v3322
        %v3699 = vunpack.c.h.b16 %v3322
        %v3700 = vunpack.c.l.b16 %v3323
        %v3701 = vunpack.c.h.b16 %v3323
        %v3702 = vunpack.c.l.b16 %v3324
        %v3703 = vunpack.c.h.b16 %v3324
        %v3704 = vunpack.c.l.b16 %v3325
        %v3705 = vunpack.c.h.b16 %v3325
        %v3706 = vunpack.c.l.b16 %v3326
        %v3707 = vunpack.c.h.b16 %v3326
        %v3708 = vunpack.c.l.b16 %v3327
        %v3709 = vunpack.c.h.b16 %v3327
        %v3710 = vunpack.c.l.b16 %v3328
        %v3711 = vunpack.c.h.b16 %v3328
        %v3712 = vunpack.c.l.b16 %v3329
        %v3713 = vunpack.c.h.b16 %v3329
        %v3714 = vunpack.c.l.b16 %v3330
        %v3715 = vunpack.c.h.b16 %v3330
        %v3716 = vunpack.c.l.b16 %v3331
        %v3717 = vunpack.c.h.b16 %v3331
        %v3718 = vunpack.c.l.b16 %v3332
        %v3719 = vunpack.c.h.b16 %v3332
        %v3720 = vunpack.c.l.b16 %v3333
        %v3721 = vunpack.c.h.b16 %v3333
        %v3722 = vunpack.c.l.b16 %v3334
        %v3723 = vunpack.c.h.b16 %v3334
        %v3724 = vunpack.c.l.b16 %v3335
        %v3725 = vunpack.c.h.b16 %v3335
        %v3726 = vunpack.c.l.b16 %v3336
        %v3727 = vunpack.c.h.b16 %v3336
        %v3728 = vunpack.c.l.b16 %v3337
        %v3729 = vunpack.c.h.b16 %v3337
        %v3730 = vunpack.c.l.b16 %v3338
        %v3731 = vunpack.c.h.b16 %v3338
        %v3732 = vunpack.c.l.b16 %v3339
        %v3733 = vunpack.c.h.b16 %v3339
        %v3734 = vunpack.c.l.b16 %v3340
        %v3735 = vunpack.c.h.b16 %v3340
        %v3736 = vunpack.c.l.b16 %v3341
        %v3737 = vunpack.c.h.b16 %v3341
        %v3738 = vunpack.c.l.b16 %v3342
        %v3739 = vunpack.c.h.b16 %v3342
        %v3740 = vunpack.c.l.b16 %v3343
        %v3741 = vunpack.c.h.b16 %v3343
        %v3742 = vunpack.c.l.b16 %v3344
        %v3743 = vunpack.c.h.b16 %v3344
        %v3744 = vunpack.c.l.b16 %v3345
        %v3745 = vunpack.c.h.b16 %v3345
        %v3746 = vunpack.c.l.b16 %v3346
        %v3747 = vunpack.c.h.b16 %v3346
        %v3748 = vunpack.c.l.b16 %v3347
        %v3749 = vunpack.c.h.b16 %v3347
        %v3750 = vunpack.c.l.b16 %v3348
        %v3751 = vunpack.c.h.b16 %v3348
        %v3752 = vunpack.c.l.b16 %v3349
        %v3753 = vunpack.c.h.b16 %v3349
        %v3754 = vunpack.c.l.b16 %v3350
        %v3755 = vunpack.c.h.b16 %v3350
        %v3756 = vunpack.c.l.b16 %v3351
        %v3757 = vunpack.c.h.b16 %v3351
        %v3758 = vunpack.c.l.b16 %v3352
        %v3759 = vunpack.c.h.b16 %v3352
        %v3760 = vunpack.c.l.b16 %v3353
        %v3761 = vunpack.c.h.b16 %v3353
        %v3762 = vunpack.c.l.b16 %v3354
        %v3763 = vunpack.c.h.b16 %v3354
        %v3764 = vunpack.c.l.b16 %v3355
        %v3765 = vunpack.c.h.b16 %v3355
        %v3766 = vunpack.c.l.b16 %v3356
        %v3767 = vunpack.c.h.b16 %v3356
        %v3768 = vunpack.c.l.b16 %v3357
        %v3769 = vunpack.c.h.b16 %v3357
        %v3770 = vunpack.c.l.b16 %v3358
        %v3771 = vunpack.c.h.b16 %v3358
        %v3772 = vunpack.c.l.b16 %v3359
        %v3773 = vunpack.c.h.b16 %v3359
        %v3774 = vunpack.c.l.b16 %v3360
        %v3775 = vunpack.c.h.b16 %v3360
        %v3776 = vunpack.c.l.b16 %v3361
        %v3777 = vunpack.c.h.b16 %v3361
        %v3778 = vunpack.c.l.b16 %v3362
        %v3779 = vunpack.c.h.b16 %v3362
        %v3780 = vunpack.c.l.b16 %v3363
        %v3781 = vunpack.c.h.b16 %v3363
        %v3782 = vunpack.c.l.b16 %v3364
        %v3783 = vunpack.c.h.b16 %v3364
        %v3784 = vunpack.c.l.b16 %v3365
        %v3785 = vunpack.c.h.b16 %v3365
        %v3786 = vunpack.c.l.b16 %v3366
        %v3787 = vunpack.c.h.b16 %v3366
        %v3788 = vunpack.c.l.b16 %v3367
        %v3789 = vunpack.c.h.b16 %v3367
        %v3790 = vunpack.c.l.b16 %v3368
        %v3791 = vunpack.c.h.b16 %v3368
        %v3792 = vunpack.c.l.b16 %v3369
        %v3793 = vunpack.c.h.b16 %v3369
        %v3794 = vunpack.c.l.b16 %v3370
        %v3795 = vunpack.c.h.b16 %v3370
        %v3796 = vunpack.c.l.b16 %v3371
        %v3797 = vunpack.c.h.b16 %v3371
        %v3798 = vpack.c.b16 %v3550, %v3542
        %v3799 = vpack.c.b16 %v3551, %v3543
        %v3800 = vpack.c.b16 %v3552, %v3544
        %v3801 = vpack.c.b16 %v3553, %v3545
        %v3802 = vpack.c.b16 %v3554, %v3546
        %v3803 = vpack.c.b16 %v3555, %v3547
        %v3804 = vpack.c.b16 %v3556, %v3548
        %v3805 = vpack.c.b16 %v3557, %v3549
        %v3806 = vpack.c.b16 %v3566, %v3558
        %v3807 = vpack.c.b16 %v3567, %v3559
        %v3808 = vpack.c.b16 %v3568, %v3560
        %v3809 = vpack.c.b16 %v3569, %v3561
        %v3810 = vpack.c.b16 %v3570, %v3562
        %v3811 = vpack.c.b16 %v3571, %v3563
        %v3812 = vpack.c.b16 %v3572, %v3564
        %v3813 = vpack.c.b16 %v3573, %v3565
        %v3814 = vpack.c.b16 %v3582, %v3574
        %v3815 = vpack.c.b16 %v3583, %v3575
        %v3816 = vpack.c.b16 %v3584, %v3576
        %v3817 = vpack.c.b16 %v3585, %v3577
        %v3818 = vpack.c.b16 %v3586, %v3578
        %v3819 = vpack.c.b16 %v3587, %v3579
        %v3820 = vpack.c.b16 %v3588, %v3580
        %v3821 = vpack.c.b16 %v3589, %v3581
        %v3822 = vpack.c.b16 %v3598, %v3590
        %v3823 = vpack.c.b16 %v3599, %v3591
        %v3824 = vpack.c.b16 %v3600, %v3592
        %v3825 = vpack.c.b16 %v3601, %v3593
        %v3826 = vpack.c.b16 %v3602, %v3594
        %v3827 = vpack.c.b16 %v3603, %v3595
        %v3828 = vpack.c.b16 %v3604, %v3596
        %v3829 = vpack.c.b16 %v3605, %v3597
        %v3830 = vpack.c.b16 %v3614, %v3606
        %v3831 = vpack.c.b16 %v3615, %v3607
        %v3832 = vpack.c.b16 %v3616, %v3608
        %v3833 = vpack.c.b16 %v3617, %v3609
        %v3834 = vpack.c.b16 %v3618, %v3610
        %v3835 = vpack.c.b16 %v3619, %v3611
        %v3836 = vpack.c.b16 %v3620, %v3612
        %v3837 = vpack.c.b16 %v3621, %v3613
        %v3838 = vpack.c.b16 %v3630, %v3622
        %v3839 = vpack.c.b16 %v3631, %v3623
        %v3840 = vpack.c.b16 %v3632, %v3624
        %v3841 = vpack.c.b16 %v3633, %v3625
        %v3842 = vpack.c.b16 %v3634, %v3626
        %v3843 = vpack.c.b16 %v3635, %v3627
        %v3844 = vpack.c.b16 %v3636, %v3628
        %v3845 = vpack.c.b16 %v3637, %v3629
        %v3846 = vpack.c.b16 %v3646, %v3638
        %v3847 = vpack.c.b16 %v3647, %v3639
        %v3848 = vpack.c.b16 %v3648, %v3640
        %v3849 = vpack.c.b16 %v3649, %v3641
        %v3850 = vpack.c.b16 %v3650, %v3642
        %v3851 = vpack.c.b16 %v3651, %v3643
        %v3852 = vpack.c.b16 %v3652, %v3644
        %v3853 = vpack.c.b16 %v3653, %v3645
        %v3854 = vpack.c.b16 %v3662, %v3654
        %v3855 = vpack.c.b16 %v3663, %v3655
        %v3856 = vpack.c.b16 %v3664, %v3656
        %v3857 = vpack.c.b16 %v3665, %v3657
        %v3858 = vpack.c.b16 %v3666, %v3658
        %v3859 = vpack.c.b16 %v3667, %v3659
        %v3860 = vpack.c.b16 %v3668, %v3660
        %v3861 = vpack.c.b16 %v3669, %v3661
        %v3862 = vpack.c.b16 %v3678, %v3670
        %v3863 = vpack.c.b16 %v3679, %v3671
        %v3864 = vpack.c.b16 %v3680, %v3672
        %v3865 = vpack.c.b16 %v3681, %v3673
        %v3866 = vpack.c.b16 %v3682, %v3674
        %v3867 = vpack.c.b16 %v3683, %v3675
        %v3868 = vpack.c.b16 %v3684, %v3676
        %v3869 = vpack.c.b16 %v3685, %v3677
        %v3870 = vpack.c.b16 %v3694, %v3686
        %v3871 = vpack.c.b16 %v3695, %v3687
        %v3872 = vpack.c.b16 %v3696, %v3688
        %v3873 = vpack.c.b16 %v3697, %v3689
        %v3874 = vpack.c.b16 %v3698, %v3690
        %v3875 = vpack.c.b16 %v3699, %v3691
        %v3876 = vpack.c.b16 %v3700, %v3692
        %v3877 = vpack.c.b16 %v3701, %v3693
        %v3878 = vpack.c.b16 %v3710, %v3702
        %v3879 = vpack.c.b16 %v3711, %v3703
        %v3880 = vpack.c.b16 %v3712, %v3704
        %v3881 = vpack.c.b16 %v3713, %v3705
        %v3882 = vpack.c.b16 %v3714, %v3706
        %v3883 = vpack.c.b16 %v3715, %v3707
        %v3884 = vpack.c.b16 %v3716, %v3708
        %v3885 = vpack.c.b16 %v3717, %v3709
        %v3886 = vpack.c.b16 %v3726, %v3718
        %v3887 = vpack.c.b16 %v3727, %v3719
        %v3888 = vpack.c.b16 %v3728, %v3720
        %v3889 = vpack.c.b16 %v3729, %v3721
        %v3890 = vpack.c.b16 %v3730, %v3722
        %v3891 = vpack.c.b16 %v3731, %v3723
        %v3892 = vpack.c.b16 %v3732, %v3724
        %v3893 = vpack.c.b16 %v3733, %v3725
        %v3894 = vpack.c.b16 %v3742, %v3734
        %v3895 = vpack.c.b16 %v3743, %v3735
        %v3896 = vpack.c.b16 %v3744, %v3736
        %v3897 = vpack.c.b16 %v3745, %v3737
        %v3898 = vpack.c.b16 %v3746, %v3738
        %v3899 = vpack.c.b16 %v3747, %v3739
        %v3900 = vpack.c.b16 %v3748, %v3740
        %v3901 = vpack.c.b16 %v3749, %v3741
        %v3902 = vpack.c.b16 %v3758, %v3750
        %v3903 = vpack.c.b16 %v3759, %v3751
        %v3904 = vpack.c.b16 %v3760, %v3752
        %v3905 = vpack.c.b16 %v3761, %v3753
        %v3906 = vpack.c.b16 %v3762, %v3754
        %v3907 = vpack.c.b16 %v3763, %v3755
        %v3908 = vpack.c.b16 %v3764, %v3756
        %v3909 = vpack.c.b16 %v3765, %v3757
        %v3910 = vpack.c.b16 %v3774, %v3766
        %v3911 = vpack.c.b16 %v3775, %v3767
        %v3912 = vpack.c.b16 %v3776, %v3768
        %v3913 = vpack.c.b16 %v3777, %v3769
        %v3914 = vpack.c.b16 %v3778, %v3770
        %v3915 = vpack.c.b16 %v3779, %v3771
        %v3916 = vpack.c.b16 %v3780, %v3772
        %v3917 = vpack.c.b16 %v3781, %v3773
        %v3918 = vpack.c.b16 %v3790, %v3782
        %v3919 = vpack.c.b16 %v3791, %v3783
        %v3920 = vpack.c.b16 %v3792, %v3784
        %v3921 = vpack.c.b16 %v3793, %v3785
        %v3922 = vpack.c.b16 %v3794, %v3786
        %v3923 = vpack.c.b16 %v3795, %v3787
        %v3924 = vpack.c.b16 %v3796, %v3788
        %v3925 = vpack.c.b16 %v3797, %v3789
        %4054 = vmatprep.subr.bf16.mxu0 %v3799
        %4055 = vmatpush1.bf16.msra.mxu0 %v3798
        %4056 = vmatprep.subr.bf16.mxu0 %v3807
        %4057 = vmatpush1.bf16.msra.mxu0 %v3806
        %4058 = vmatprep.subr.bf16.mxu0 %v3815
        %4059 = vmatpush1.bf16.msra.mxu0 %v3814
        %4060 = vmatprep.subr.bf16.mxu0 %v3823
        %4061 = vmatpush1.bf16.msra.mxu0 %v3822
        %4062 = vmatprep.subr.bf16.mxu0 %v3831
        %4063 = vmatpush1.bf16.msra.mxu0 %v3830
        %4064 = vmatprep.subr.bf16.mxu0 %v3839
        %4065 = vmatpush1.bf16.msra.mxu0 %v3838
        %4066 = vmatprep.subr.bf16.mxu0 %v3847
        %4067 = vmatpush1.bf16.msra.mxu0 %v3846
        %4068 = vmatprep.subr.bf16.mxu0 %v3855
        %4069 = vmatpush1.bf16.msra.mxu0 %v3854
        %4070 = vmatprep.subr.bf16.mxu0 %v3863
        %4071 = vmatpush1.bf16.msra.mxu0 %v3862
        %4072 = vmatprep.subr.bf16.mxu0 %v3871
        %4073 = vmatpush1.bf16.msra.mxu0 %v3870
        %4074 = vmatprep.subr.bf16.mxu0 %v3879
        %4075 = vmatpush1.bf16.msra.mxu0 %v3878
        %4076 = vmatprep.subr.bf16.mxu0 %v3887
        %4077 = vmatpush1.bf16.msra.mxu0 %v3886
        %4078 = vmatprep.subr.bf16.mxu0 %v3895
        %4079 = vmatpush1.bf16.msra.mxu0 %v3894
        %4080 = vmatprep.subr.bf16.mxu0 %v3903
        %4081 = vmatpush1.bf16.msra.mxu0 %v3902
        %4082 = vmatprep.subr.bf16.mxu0 %v3911
        %4083 = vmatpush1.bf16.msra.mxu0 %v3910
        %4084 = vmatprep.subr.bf16.mxu0 %v3919
        %4085 = vmatpush1.bf16.msra.mxu0 %v3918
        %4086 = vmatprep.mubr.bf16.mxu0 %v3229
        %4087 = vmatmul.mubr.bf16.gmra.mrb[0].mxu0 %v3228
        %v4088 = vpop.f32.mrb[0].mxu0
        %v4089 = vadd.f32 %v3377, %v4088
        %v4090 = vpop.f32.mrb[0].mxu0
        %v4091 = vadd.f32 %v3381, %v4090
        %v4092 = vpop.f32.mrb[0].mxu0
        %v4093 = vadd.f32 %v3377, %v4092
        %v4094 = vpop.f32.mrb[0].mxu0
        %v4095 = vadd.f32 %v3381, %v4094
        %4096 = vmatprep.mubr.bf16.mxu0 %v3231
        %4097 = vmatmul.mubr.bf16.gmra.mrb[0].mxu0 %v3230
        %v4098 = vpop.f32.mrb[0].mxu0
        %v4099 = vadd.f32 %v3377, %v4098
        %v4100 = vpop.f32.mrb[0].mxu0
        %v4101 = vadd.f32 %v3381, %v4100
        %v4102 = vpop.f32.mrb[0].mxu0
        %v4103 = vadd.f32 %v3377, %v4102
        %v4104 = vpop.f32.mrb[0].mxu0
        %v4105 = vadd.f32 %v3381, %v4104
        %4106 = vmatprep.mubr.bf16.mxu0 %v3233
        %4107 = vmatmul.mubr.bf16.gmra.mrb[0].mxu0 %v3232
        %v4108 = vpop.f32.mrb[0].mxu0
        %v4109 = vadd.f32 %v3377, %v4108
        %v4110 = vpop.f32.mrb[0].mxu0
        %v4111 = vadd.f32 %v3381, %v4110
        %v4112 = vpop.f32.mrb[0].mxu0
        %v4113 = vadd.f32 %v3377, %v4112
        %v4114 = vpop.f32.mrb[0].mxu0
        %v4115 = vadd.f32 %v3381, %v4114
        %4116 = vmatprep.mubr.bf16.mxu0 %v3235
        %4117 = vmatmul.mubr.bf16.gmra.mrb[0].mxu0 %v3234
        %v4118 = vpop.f32.mrb[0].mxu0
        %v4119 = vadd.f32 %v3377, %v4118
        %v4120 = vpop.f32.mrb[0].mxu0
        %v4121 = vadd.f32 %v3381, %v4120
        %v4122 = vpop.f32.mrb[0].mxu0
        %v4123 = vadd.f32 %v3377, %v4122
        %v4124 = vpop.f32.mrb[0].mxu0
        %v4125 = vadd.f32 %v3381, %v4124
        %4126 = vmatprep.mubr.bf16.mxu0 %v3237
        %4127 = vmatmul.mubr.bf16.gmra.mrb[0].mxu0 %v3236
        %v4128 = vpop.f32.mrb[0].mxu0
        %v4129 = vadd.f32 %v3377, %v4128
        %v4130 = vpop.f32.mrb[0].mxu0
        %v4131 = vadd.f32 %v3381, %v4130
        %v4132 = vpop.f32.mrb[0].mxu0
        %v4133 = vadd.f32 %v3377, %v4132
        %v4134 = vpop.f32.mrb[0].mxu0
        %v4135 = vadd.f32 %v3381, %v4134
        %4136 = vmatprep.mubr.bf16.mxu0 %v3239
        %4137 = vmatmul.mubr.bf16.gmra.mrb[0].mxu0 %v3238
        %v4138 = vpop.f32.mrb[0].mxu0
        %v4139 = vadd.f32 %v3377, %v4138
        %v4140 = vpop.f32.mrb[0].mxu0
        %v4141 = vadd.f32 %v3381, %v4140
        %v4142 = vpop.f32.mrb[0].mxu0
        %v4143 = vadd.f32 %v3377, %v4142
        %v4144 = vpop.f32.mrb[0].mxu0
        %v4145 = vadd.f32 %v3381, %v4144
        %4146 = vmatprep.mubr.bf16.mxu0 %v3241
        %4147 = vmatmul.mubr.bf16.gmra.mrb[0].mxu0 %v3240
        %v4148 = vpop.f32.mrb[0].mxu0
        %v4149 = vadd.f32 %v3377, %v4148
        %v4150 = vpop.f32.mrb[0].mxu0
        %v4151 = vadd.f32 %v3381, %v4150
        %v4152 = vpop.f32.mrb[0].mxu0
        %v4153 = vadd.f32 %v3377, %v4152
        %v4154 = vpop.f32.mrb[0].mxu0
        %v4155 = vadd.f32 %v3381, %v4154
        %4156 = vmatprep.mubr.bf16.mxu0 %v3243
        %4157 = vmatmul.mubr.bf16.gmra.mrb[0].mxu0 %v3242
        %v4158 = vpop.f32.mrb[0].mxu0
        %v4159 = vadd.f32 %v3377, %v4158
        %v4160 = vpop.f32.mrb[0].mxu0
        %v4161 = vadd.f32 %v3381, %v4160
        %v4162 = vpop.f32.mrb[0].mxu0
        %v4163 = vadd.f32 %v3377, %v4162
        %v4164 = vpop.f32.mrb[0].mxu0
        %v4165 = vadd.f32 %v3381, %v4164
        %4166 = vdwg.mxu0
        %4167 = vmatprep.subr.bf16.mxu0 %v3801
        %4168 = vmatpush1.bf16.msra.mxu0 %v3800
        %4169 = vmatprep.subr.bf16.mxu0 %v3809
        %4170 = vmatpush1.bf16.msra.mxu0 %v3808
        %4171 = vmatprep.subr.bf16.mxu0 %v3817
        %4172 = vmatpush1.bf16.msra.mxu0 %v3816
        %4173 = vmatprep.subr.bf16.mxu0 %v3825
        %4174 = vmatpush1.bf16.msra.mxu0 %v3824
        %4175 = vmatprep.subr.bf16.mxu0 %v3833
        %4176 = vmatpush1.bf16.msra.mxu0 %v3832
        %4177 = vmatprep.subr.bf16.mxu0 %v3841
        %4178 = vmatpush1.bf16.msra.mxu0 %v3840
        %4179 = vmatprep.subr.bf16.mxu0 %v3849
        %4180 = vmatpush1.bf16.msra.mxu0 %v3848
        %4181 = vmatprep.subr.bf16.mxu0 %v3857
        %4182 = vmatpush1.bf16.msra.mxu0 %v3856
        %4183 = vmatprep.subr.bf16.mxu0 %v3865
        %4184 = vmatpush1.bf16.msra.mxu0 %v3864
        %4185 = vmatprep.subr.bf16.mxu0 %v3873
        %4186 = vmatpush1.bf16.msra.mxu0 %v3872
        %4187 = vmatprep.subr.bf16.mxu0 %v3881
        %4188 = vmatpush1.bf16.msra.mxu0 %v3880
        %4189 = vmatprep.subr.bf16.mxu0 %v3889
        %4190 = vmatpush1.bf16.msra.mxu0 %v3888
        %4191 = vmatprep.subr.bf16.mxu0 %v3897
        %4192 = vmatpush1.bf16.msra.mxu0 %v3896
        %4193 = vmatprep.subr.bf16.mxu0 %v3905
        %4194 = vmatpush1.bf16.msra.mxu0 %v3904
        %4195 = vmatprep.subr.bf16.mxu0 %v3913
        %4196 = vmatpush1.bf16.msra.mxu0 %v3912
        %4197 = vmatprep.subr.bf16.mxu0 %v3921
        %4198 = vmatpush1.bf16.msra.mxu0 %v3920
        %4199 = vmatprep.mubr.bf16.mxu0 %v3229
        %4200 = vmatmul.mubr.bf16.gmra.mrb[0].mxu0 %v3228
        %v4201 = vpop.f32.mrb[0].mxu0
        %v4202 = vadd.f32 %v3385, %v4201
        %v4203 = vpop.f32.mrb[0].mxu0
        %v4204 = vadd.f32 %v3389, %v4203
        %v4205 = vpop.f32.mrb[0].mxu0
        %v4206 = vadd.f32 %v3385, %v4205
        %v4207 = vpop.f32.mrb[0].mxu0
        %v4208 = vadd.f32 %v3389, %v4207
        %4209 = vmatprep.mubr.bf16.mxu0 %v3231
        %4210 = vmatmul.mubr.bf16.gmra.mrb[0].mxu0 %v3230
        %v4211 = vpop.f32.mrb[0].mxu0
        %v4212 = vadd.f32 %v3385, %v4211
        %v4213 = vpop.f32.mrb[0].mxu0
        %v4214 = vadd.f32 %v3389, %v4213
        %v4215 = vpop.f32.mrb[0].mxu0
        %v4216 = vadd.f32 %v3385, %v4215
        %v4217 = vpop.f32.mrb[0].mxu0
        %v4218 = vadd.f32 %v3389, %v4217
        %4219 = vmatprep.mubr.bf16.mxu0 %v3233
        %4220 = vmatmul.mubr.bf16.gmra.mrb[0].mxu0 %v3232
        %v4221 = vpop.f32.mrb[0].mxu0
        %v4222 = vadd.f32 %v3385, %v4221
        %v4223 = vpop.f32.mrb[0].mxu0
        %v4224 = vadd.f32 %v3389, %v4223
        %v4225 = vpop.f32.mrb[0].mxu0
        %v4226 = vadd.f32 %v3385, %v4225
        %v4227 = vpop.f32.mrb[0].mxu0
        %v4228 = vadd.f32 %v3389, %v4227
        %4229 = vmatprep.mubr.bf16.mxu0 %v3235
        %4230 = vmatmul.mubr.bf16.gmra.mrb[0].mxu0 %v3234
        %v4231 = vpop.f32.mrb[0].mxu0
        %v4232 = vadd.f32 %v3385, %v4231
        %v4233 = vpop.f32.mrb[0].mxu0
        %v4234 = vadd.f32 %v3389, %v4233
        %v4235 = vpop.f32.mrb[0].mxu0
        %v4236 = vadd.f32 %v3385, %v4235
        %v4237 = vpop.f32.mrb[0].mxu0
        %v4238 = vadd.f32 %v3389, %v4237
        %4239 = vmatprep.mubr.bf16.mxu0 %v3237
        %4240 = vmatmul.mubr.bf16.gmra.mrb[0].mxu0 %v3236
        %v4241 = vpop.f32.mrb[0].mxu0
        %v4242 = vadd.f32 %v3385, %v4241
        %v4243 = vpop.f32.mrb[0].mxu0
        %v4244 = vadd.f32 %v3389, %v4243
        %v4245 = vpop.f32.mrb[0].mxu0
        %v4246 = vadd.f32 %v3385, %v4245
        %v4247 = vpop.f32.mrb[0].mxu0
        %v4248 = vadd.f32 %v3389, %v4247
        %4249 = vmatprep.mubr.bf16.mxu0 %v3239
        %4250 = vmatmul.mubr.bf16.gmra.mrb[0].mxu0 %v3238
        %v4251 = vpop.f32.mrb[0].mxu0
        %v4252 = vadd.f32 %v3385, %v4251
        %v4253 = vpop.f32.mrb[0].mxu0
        %v4254 = vadd.f32 %v3389, %v4253
        %v4255 = vpop.f32.mrb[0].mxu0
        %v4256 = vadd.f32 %v3385, %v4255
        %v4257 = vpop.f32.mrb[0].mxu0
        %v4258 = vadd.f32 %v3389, %v4257
        %4259 = vmatprep.mubr.bf16.mxu0 %v3241
        %4260 = vmatmul.mubr.bf16.gmra.mrb[0].mxu0 %v3240
        %v4261 = vpop.f32.mrb[0].mxu0
        %v4262 = vadd.f32 %v3385, %v4261
        %v4263 = vpop.f32.mrb[0].mxu0
        %v4264 = vadd.f32 %v3389, %v4263
        %v4265 = vpop.f32.mrb[0].mxu0
        %v4266 = vadd.f32 %v3385, %v4265
        %v4267 = vpop.f32.mrb[0].mxu0
        %v4268 = vadd.f32 %v3389, %v4267
        %4269 = vmatprep.mubr.bf16.mxu0 %v3243
        %4270 = vmatmul.mubr.bf16.gmra.mrb[0].mxu0 %v3242
        %v4271 = vpop.f32.mrb[0].mxu0
        %v4272 = vadd.f32 %v3385, %v4271
        %v4273 = vpop.f32.mrb[0].mxu0
        %v4274 = vadd.f32 %v3389, %v4273
        %v4275 = vpop.f32.mrb[0].mxu0
        %v4276 = vadd.f32 %v3385, %v4275
        %v4277 = vpop.f32.mrb[0].mxu0
        %v4278 = vadd.f32 %v3389, %v4277
        %4279 = vdwg.mxu0
        %4280 = vmatprep.subr.bf16.mxu0 %v3803
        %4281 = vmatpush1.bf16.msra.mxu0 %v3802
        %4282 = vmatprep.subr.bf16.mxu0 %v3811
        %4283 = vmatpush1.bf16.msra.mxu0 %v3810
        %4284 = vmatprep.subr.bf16.mxu0 %v3819
        %4285 = vmatpush1.bf16.msra.mxu0 %v3818
        %4286 = vmatprep.subr.bf16.mxu0 %v3827
        %4287 = vmatpush1.bf16.msra.mxu0 %v3826
        %4288 = vmatprep.subr.bf16.mxu0 %v3835
        %4289 = vmatpush1.bf16.msra.mxu0 %v3834
        %4290 = vmatprep.subr.bf16.mxu0 %v3843
        %4291 = vmatpush1.bf16.msra.mxu0 %v3842
        %4292 = vmatprep.subr.bf16.mxu0 %v3851
        %4293 = vmatpush1.bf16.msra.mxu0 %v3850
        %4294 = vmatprep.subr.bf16.mxu0 %v3859
        %4295 = vmatpush1.bf16.msra.mxu0 %v3858
        %4296 = vmatprep.subr.bf16.mxu0 %v3867
        %4297 = vmatpush1.bf16.msra.mxu0 %v3866
        %4298 = vmatprep.subr.bf16.mxu0 %v3875
        %4299 = vmatpush1.bf16.msra.mxu0 %v3874
        %4300 = vmatprep.subr.bf16.mxu0 %v3883
        %4301 = vmatpush1.bf16.msra.mxu0 %v3882
        %4302 = vmatprep.subr.bf16.mxu0 %v3891
        %4303 = vmatpush1.bf16.msra.mxu0 %v3890
        %4304 = vmatprep.subr.bf16.mxu0 %v3899
        %4305 = vmatpush1.bf16.msra.mxu0 %v3898
        %4306 = vmatprep.subr.bf16.mxu0 %v3907
        %4307 = vmatpush1.bf16.msra.mxu0 %v3906
        %4308 = vmatprep.subr.bf16.mxu0 %v3915
        %4309 = vmatpush1.bf16.msra.mxu0 %v3914
        %4310 = vmatprep.subr.bf16.mxu0 %v3923
        %4311 = vmatpush1.bf16.msra.mxu0 %v3922
        %4312 = vmatprep.mubr.bf16.mxu0 %v3229
        %4313 = vmatmul.mubr.bf16.gmra.mrb[0].mxu0 %v3228
        %v4314 = vpop.f32.mrb[0].mxu0
        %v4315 = vadd.f32 %v3393, %v4314
        %v4316 = vpop.f32.mrb[0].mxu0
        %v4317 = vadd.f32 %v3397, %v4316
        %v4318 = vpop.f32.mrb[0].mxu0
        %v4319 = vadd.f32 %v3393, %v4318
        %v4320 = vpop.f32.mrb[0].mxu0
        %v4321 = vadd.f32 %v3397, %v4320
        %4322 = vmatprep.mubr.bf16.mxu0 %v3231
        %4323 = vmatmul.mubr.bf16.gmra.mrb[0].mxu0 %v3230
        %v4324 = vpop.f32.mrb[0].mxu0
        %v4325 = vadd.f32 %v3393, %v4324
        %v4326 = vpop.f32.mrb[0].mxu0
        %v4327 = vadd.f32 %v3397, %v4326
        %v4328 = vpop.f32.mrb[0].mxu0
        %v4329 = vadd.f32 %v3393, %v4328
        %v4330 = vpop.f32.mrb[0].mxu0
        %v4331 = vadd.f32 %v3397, %v4330
        %4332 = vmatprep.mubr.bf16.mxu0 %v3233
        %4333 = vmatmul.mubr.bf16.gmra.mrb[0].mxu0 %v3232
        %v4334 = vpop.f32.mrb[0].mxu0
        %v4335 = vadd.f32 %v3393, %v4334
        %v4336 = vpop.f32.mrb[0].mxu0
        %v4337 = vadd.f32 %v3397, %v4336
        %v4338 = vpop.f32.mrb[0].mxu0
        %v4339 = vadd.f32 %v3393, %v4338
        %v4340 = vpop.f32.mrb[0].mxu0
        %v4341 = vadd.f32 %v3397, %v4340
        %4342 = vmatprep.mubr.bf16.mxu0 %v3235
        %4343 = vmatmul.mubr.bf16.gmra.mrb[0].mxu0 %v3234
        %v4344 = vpop.f32.mrb[0].mxu0
        %v4345 = vadd.f32 %v3393, %v4344
        %v4346 = vpop.f32.mrb[0].mxu0
        %v4347 = vadd.f32 %v3397, %v4346
        %v4348 = vpop.f32.mrb[0].mxu0
        %v4349 = vadd.f32 %v3393, %v4348
        %v4350 = vpop.f32.mrb[0].mxu0
        %v4351 = vadd.f32 %v3397, %v4350
        %4352 = vmatprep.mubr.bf16.mxu0 %v3237
        %4353 = vmatmul.mubr.bf16.gmra.mrb[0].mxu0 %v3236
        %v4354 = vpop.f32.mrb[0].mxu0
        %v4355 = vadd.f32 %v3393, %v4354
        %v4356 = vpop.f32.mrb[0].mxu0
        %v4357 = vadd.f32 %v3397, %v4356
        %v4358 = vpop.f32.mrb[0].mxu0
        %v4359 = vadd.f32 %v3393, %v4358
        %v4360 = vpop.f32.mrb[0].mxu0
        %v4361 = vadd.f32 %v3397, %v4360
        %4362 = vmatprep.mubr.bf16.mxu0 %v3239
        %4363 = vmatmul.mubr.bf16.gmra.mrb[0].mxu0 %v3238
        %v4364 = vpop.f32.mrb[0].mxu0
        %v4365 = vadd.f32 %v3393, %v4364
        %v4366 = vpop.f32.mrb[0].mxu0
        %v4367 = vadd.f32 %v3397, %v4366
        %v4368 = vpop.f32.mrb[0].mxu0
        %v4369 = vadd.f32 %v3393, %v4368
        %v4370 = vpop.f32.mrb[0].mxu0
        %v4371 = vadd.f32 %v3397, %v4370
        %4372 = vmatprep.mubr.bf16.mxu0 %v3241
        %4373 = vmatmul.mubr.bf16.gmra.mrb[0].mxu0 %v3240
        %v4374 = vpop.f32.mrb[0].mxu0
        %v4375 = vadd.f32 %v3393, %v4374
        %v4376 = vpop.f32.mrb[0].mxu0
        %v4377 = vadd.f32 %v3397, %v4376
        %v4378 = vpop.f32.mrb[0].mxu0
        %v4379 = vadd.f32 %v3393, %v4378
        %v4380 = vpop.f32.mrb[0].mxu0
        %v4381 = vadd.f32 %v3397, %v4380
        %4382 = vmatprep.mubr.bf16.mxu0 %v3243
        %4383 = vmatmul.mubr.bf16.gmra.mrb[0].mxu0 %v3242
        %v4384 = vpop.f32.mrb[0].mxu0
        %v4385 = vadd.f32 %v3393, %v4384
        %v4386 = vpop.f32.mrb[0].mxu0
        %v4387 = vadd.f32 %v3397, %v4386
        %v4388 = vpop.f32.mrb[0].mxu0
        %v4389 = vadd.f32 %v3393, %v4388
        %v4390 = vpop.f32.mrb[0].mxu0
        %v4391 = vadd.f32 %v3397, %v4390
        %4392 = vdwg.mxu0
        %4393 = vmatprep.subr.bf16.mxu0 %v3805
        %4394 = vmatpush1.bf16.msra.mxu0 %v3804
        %4395 = vmatprep.subr.bf16.mxu0 %v3813
        %4396 = vmatpush1.bf16.msra.mxu0 %v3812
        %4397 = vmatprep.subr.bf16.mxu0 %v3821
        %4398 = vmatpush1.bf16.msra.mxu0 %v3820
        %4399 = vmatprep.subr.bf16.mxu0 %v3829
        %4400 = vmatpush1.bf16.msra.mxu0 %v3828
        %4401 = vmatprep.subr.bf16.mxu0 %v3837
        %4402 = vmatpush1.bf16.msra.mxu0 %v3836
        %4403 = vmatprep.subr.bf16.mxu0 %v3845
        %4404 = vmatpush1.bf16.msra.mxu0 %v3844
        %4405 = vmatprep.subr.bf16.mxu0 %v3853
        %4406 = vmatpush1.bf16.msra.mxu0 %v3852
        %4407 = vmatprep.subr.bf16.mxu0 %v3861
        %4408 = vmatpush1.bf16.msra.mxu0 %v3860
        %4409 = vmatprep.subr.bf16.mxu0 %v3869
        %4410 = vmatpush1.bf16.msra.mxu0 %v3868
        %4411 = vmatprep.subr.bf16.mxu0 %v3877
        %4412 = vmatpush1.bf16.msra.mxu0 %v3876
        %4413 = vmatprep.subr.bf16.mxu0 %v3885
        %4414 = vmatpush1.bf16.msra.mxu0 %v3884
        %4415 = vmatprep.subr.bf16.mxu0 %v3893
        %4416 = vmatpush1.bf16.msra.mxu0 %v3892
        %4417 = vmatprep.subr.bf16.mxu0 %v3901
        %4418 = vmatpush1.bf16.msra.mxu0 %v3900
        %4419 = vmatprep.subr.bf16.mxu0 %v3909
        %4420 = vmatpush1.bf16.msra.mxu0 %v3908
        %4421 = vmatprep.subr.bf16.mxu0 %v3917
        %4422 = vmatpush1.bf16.msra.mxu0 %v3916
        %4423 = vmatprep.subr.bf16.mxu0 %v3925
        %4424 = vmatpush1.bf16.msra.mxu0 %v3924
        %4425 = vmatprep.mubr.bf16.mxu0 %v3229
        %4426 = vmatmul.mubr.bf16.gmra.mrb[0].mxu0 %v3228
        %v4427 = vpop.f32.mrb[0].mxu0
        %v4428 = vadd.f32 %v3401, %v4427
        %v4429 = vpop.f32.mrb[0].mxu0
        %v4430 = vadd.f32 %v3405, %v4429
        %v4431 = vpop.f32.mrb[0].mxu0
        %v4432 = vadd.f32 %v3401, %v4431
        %v4433 = vpop.f32.mrb[0].mxu0
        %v4434 = vadd.f32 %v3405, %v4433
        %4435 = vmatprep.mubr.bf16.mxu0 %v3231
        %4436 = vmatmul.mubr.bf16.gmra.mrb[0].mxu0 %v3230
        %v4437 = vpop.f32.mrb[0].mxu0
        %v4438 = vadd.f32 %v3401, %v4437
        %v4439 = vpop.f32.mrb[0].mxu0
        %v4440 = vadd.f32 %v3405, %v4439
        %v4441 = vpop.f32.mrb[0].mxu0
        %v4442 = vadd.f32 %v3401, %v4441
        %v4443 = vpop.f32.mrb[0].mxu0
        %v4444 = vadd.f32 %v3405, %v4443
        %4445 = vmatprep.mubr.bf16.mxu0 %v3233
        %4446 = vmatmul.mubr.bf16.gmra.mrb[0].mxu0 %v3232
        %v4447 = vpop.f32.mrb[0].mxu0
        %v4448 = vadd.f32 %v3401, %v4447
        %v4449 = vpop.f32.mrb[0].mxu0
        %v4450 = vadd.f32 %v3405, %v4449
        %v4451 = vpop.f32.mrb[0].mxu0
        %v4452 = vadd.f32 %v3401, %v4451
        %v4453 = vpop.f32.mrb[0].mxu0
        %v4454 = vadd.f32 %v3405, %v4453
        %4455 = vmatprep.mubr.bf16.mxu0 %v3235
        %4456 = vmatmul.mubr.bf16.gmra.mrb[0].mxu0 %v3234
        %v4457 = vpop.f32.mrb[0].mxu0
        %v4458 = vadd.f32 %v3401, %v4457
        %v4459 = vpop.f32.mrb[0].mxu0
        %v4460 = vadd.f32 %v3405, %v4459
        %v4461 = vpop.f32.mrb[0].mxu0
        %v4462 = vadd.f32 %v3401, %v4461
        %v4463 = vpop.f32.mrb[0].mxu0
        %v4464 = vadd.f32 %v3405, %v4463
        %4465 = vmatprep.mubr.bf16.mxu0 %v3237
        %4466 = vmatmul.mubr.bf16.gmra.mrb[0].mxu0 %v3236
        %v4467 = vpop.f32.mrb[0].mxu0
        %v4468 = vadd.f32 %v3401, %v4467
        %v4469 = vpop.f32.mrb[0].mxu0
        %v4470 = vadd.f32 %v3405, %v4469
        %v4471 = vpop.f32.mrb[0].mxu0
        %v4472 = vadd.f32 %v3401, %v4471
        %v4473 = vpop.f32.mrb[0].mxu0
        %v4474 = vadd.f32 %v3405, %v4473
        %4475 = vmatprep.mubr.bf16.mxu0 %v3239
        %4476 = vmatmul.mubr.bf16.gmra.mrb[0].mxu0 %v3238
        %v4477 = vpop.f32.mrb[0].mxu0
        %v4478 = vadd.f32 %v3401, %v4477
        %v4479 = vpop.f32.mrb[0].mxu0
        %v4480 = vadd.f32 %v3405, %v4479
        %v4481 = vpop.f32.mrb[0].mxu0
        %v4482 = vadd.f32 %v3401, %v4481
        %v4483 = vpop.f32.mrb[0].mxu0
        %v4484 = vadd.f32 %v3405, %v4483
        %4485 = vmatprep.mubr.bf16.mxu0 %v3241
        %4486 = vmatmul.mubr.bf16.gmra.mrb[0].mxu0 %v3240
        %v4487 = vpop.f32.mrb[0].mxu0
        %v4488 = vadd.f32 %v3401, %v4487
        %v4489 = vpop.f32.mrb[0].mxu0
        %v4490 = vadd.f32 %v3405, %v4489
        %v4491 = vpop.f32.mrb[0].mxu0
        %v4492 = vadd.f32 %v3401, %v4491
        %v4493 = vpop.f32.mrb[0].mxu0
        %v4494 = vadd.f32 %v3405, %v4493
        %4495 = vmatprep.mubr.bf16.mxu0 %v3243
        %4496 = vmatmul.mubr.bf16.gmra.mrb[0].mxu0 %v3242
        %v4497 = vpop.f32.mrb[0].mxu0
        %v4498 = vadd.f32 %v3401, %v4497
        %v4499 = vpop.f32.mrb[0].mxu0
        %v4500 = vadd.f32 %v3405, %v4499
        %v4501 = vpop.f32.mrb[0].mxu0
        %v4502 = vadd.f32 %v3401, %v4501
        %v4503 = vpop.f32.mrb[0].mxu0
        %v4504 = vadd.f32 %v3405, %v4503
        %4505 = vdwg.mxu0
        %v4506 = vxor.u32 %v4089, 2147483648
        %v4507 = vxor.u32 %v4091, 2147483648
        %v4508 = vxor.u32 %v4202, 2147483648
        %v4509 = vxor.u32 %v4204, 2147483648
        %v4510 = vxor.u32 %v4315, 2147483648
        %v4511 = vxor.u32 %v4317, 2147483648
        %v4512 = vxor.u32 %v4428, 2147483648
        %v4513 = vxor.u32 %v4430, 2147483648
        %v4514 = vxor.u32 %v4093, 2147483648
        %v4515 = vxor.u32 %v4095, 2147483648
        %v4516 = vxor.u32 %v4206, 2147483648
        %v4517 = vxor.u32 %v4208, 2147483648
        %v4518 = vxor.u32 %v4319, 2147483648
        %v4519 = vxor.u32 %v4321, 2147483648
        %v4520 = vxor.u32 %v4432, 2147483648
        %v4521 = vxor.u32 %v4434, 2147483648
        %v4522 = vxor.u32 %v4099, 2147483648
        %v4523 = vxor.u32 %v4101, 2147483648
        %v4524 = vxor.u32 %v4212, 2147483648
        %v4525 = vxor.u32 %v4214, 2147483648
        %v4526 = vxor.u32 %v4325, 2147483648
        %v4527 = vxor.u32 %v4327, 2147483648
        %v4528 = vxor.u32 %v4438, 2147483648
        %v4529 = vxor.u32 %v4440, 2147483648
        %v4530 = vxor.u32 %v4103, 2147483648
        %v4531 = vxor.u32 %v4105, 2147483648
        %v4532 = vxor.u32 %v4216, 2147483648
        %v4533 = vxor.u32 %v4218, 2147483648
        %v4534 = vxor.u32 %v4329, 2147483648
        %v4535 = vxor.u32 %v4331, 2147483648
        %v4536 = vxor.u32 %v4442, 2147483648
        %v4537 = vxor.u32 %v4444, 2147483648
        %v4538 = vxor.u32 %v4109, 2147483648
        %v4539 = vxor.u32 %v4111, 2147483648
        %v4540 = vxor.u32 %v4222, 2147483648
        %v4541 = vxor.u32 %v4224, 2147483648
        %v4542 = vxor.u32 %v4335, 2147483648
        %v4543 = vxor.u32 %v4337, 2147483648
        %v4544 = vxor.u32 %v4448, 2147483648
        %v4545 = vxor.u32 %v4450, 2147483648
        %v4546 = vxor.u32 %v4113, 2147483648
        %v4547 = vxor.u32 %v4115, 2147483648
        %v4548 = vxor.u32 %v4226, 2147483648
        %v4549 = vxor.u32 %v4228, 2147483648
        %v4550 = vxor.u32 %v4339, 2147483648
        %v4551 = vxor.u32 %v4341, 2147483648
        %v4552 = vxor.u32 %v4452, 2147483648
        %v4553 = vxor.u32 %v4454, 2147483648
        %v4554 = vxor.u32 %v4119, 2147483648
        %v4555 = vxor.u32 %v4121, 2147483648
        %v4556 = vxor.u32 %v4232, 2147483648
        %v4557 = vxor.u32 %v4234, 2147483648
        %v4558 = vxor.u32 %v4345, 2147483648
        %v4559 = vxor.u32 %v4347, 2147483648
        %v4560 = vxor.u32 %v4458, 2147483648
        %v4561 = vxor.u32 %v4460, 2147483648
        %v4562 = vxor.u32 %v4123, 2147483648
        %v4563 = vxor.u32 %v4125, 2147483648
        %v4564 = vxor.u32 %v4236, 2147483648
        %v4565 = vxor.u32 %v4238, 2147483648
        %v4566 = vxor.u32 %v4349, 2147483648
        %v4567 = vxor.u32 %v4351, 2147483648
        %v4568 = vxor.u32 %v4462, 2147483648
        %v4569 = vxor.u32 %v4464, 2147483648
        %v4570 = vxor.u32 %v4129, 2147483648
        %v4571 = vxor.u32 %v4131, 2147483648
        %v4572 = vxor.u32 %v4242, 2147483648
        %v4573 = vxor.u32 %v4244, 2147483648
        %v4574 = vxor.u32 %v4355, 2147483648
        %v4575 = vxor.u32 %v4357, 2147483648
        %v4576 = vxor.u32 %v4468, 2147483648
        %v4577 = vxor.u32 %v4470, 2147483648
        %v4578 = vxor.u32 %v4133, 2147483648
        %v4579 = vxor.u32 %v4135, 2147483648
        %v4580 = vxor.u32 %v4246, 2147483648
        %v4581 = vxor.u32 %v4248, 2147483648
        %v4582 = vxor.u32 %v4359, 2147483648
        %v4583 = vxor.u32 %v4361, 2147483648
        %v4584 = vxor.u32 %v4472, 2147483648
        %v4585 = vxor.u32 %v4474, 2147483648
        %v4586 = vxor.u32 %v4139, 2147483648
        %v4587 = vxor.u32 %v4141, 2147483648
        %v4588 = vxor.u32 %v4252, 2147483648
        %v4589 = vxor.u32 %v4254, 2147483648
        %v4590 = vxor.u32 %v4365, 2147483648
        %v4591 = vxor.u32 %v4367, 2147483648
        %v4592 = vxor.u32 %v4478, 2147483648
        %v4593 = vxor.u32 %v4480, 2147483648
        %v4594 = vxor.u32 %v4143, 2147483648
        %v4595 = vxor.u32 %v4145, 2147483648
        %v4596 = vxor.u32 %v4256, 2147483648
        %v4597 = vxor.u32 %v4258, 2147483648
        %v4598 = vxor.u32 %v4369, 2147483648
        %v4599 = vxor.u32 %v4371, 2147483648
        %v4600 = vxor.u32 %v4482, 2147483648
        %v4601 = vxor.u32 %v4484, 2147483648
        %v4602 = vxor.u32 %v4149, 2147483648
        %v4603 = vxor.u32 %v4151, 2147483648
        %v4604 = vxor.u32 %v4262, 2147483648
        %v4605 = vxor.u32 %v4264, 2147483648
        %v4606 = vxor.u32 %v4375, 2147483648
        %v4607 = vxor.u32 %v4377, 2147483648
        %v4608 = vxor.u32 %v4488, 2147483648
        %v4609 = vxor.u32 %v4490, 2147483648
        %v4610 = vxor.u32 %v4153, 2147483648
        %v4611 = vxor.u32 %v4155, 2147483648
        %v4612 = vxor.u32 %v4266, 2147483648
        %v4613 = vxor.u32 %v4268, 2147483648
        %v4614 = vxor.u32 %v4379, 2147483648
        %v4615 = vxor.u32 %v4381, 2147483648
        %v4616 = vxor.u32 %v4492, 2147483648
        %v4617 = vxor.u32 %v4494, 2147483648
        %v4618 = vxor.u32 %v4159, 2147483648
        %v4619 = vxor.u32 %v4161, 2147483648
        %v4620 = vxor.u32 %v4272, 2147483648
        %v4621 = vxor.u32 %v4274, 2147483648
        %v4622 = vxor.u32 %v4385, 2147483648
        %v4623 = vxor.u32 %v4387, 2147483648
        %v4624 = vxor.u32 %v4498, 2147483648
        %v4625 = vxor.u32 %v4500, 2147483648
        %v4626 = vxor.u32 %v4163, 2147483648
        %v4627 = vxor.u32 %v4165, 2147483648
        %v4628 = vxor.u32 %v4276, 2147483648
        %v4629 = vxor.u32 %v4278, 2147483648
        %v4630 = vxor.u32 %v4389, 2147483648
        %v4631 = vxor.u32 %v4391, 2147483648
        %v4632 = vxor.u32 %v4502, 2147483648
        %v4633 = vxor.u32 %v4504, 2147483648
        %v4634 = vmul.f32 %v4506, 1.442695
        %v4635 = vpow.pop %v4634
        %v4636 = vmul.f32 %v4507, 1.442695
        %v4637 = vpow.pop %v4636
        %v4638 = vmul.f32 %v4508, 1.442695
        %v4639 = vpow.pop %v4638
        %v4640 = vmul.f32 %v4509, 1.442695
        %v4641 = vpow.pop %v4640
        %v4642 = vmul.f32 %v4510, 1.442695
        %v4643 = vpow.pop %v4642
        %v4644 = vmul.f32 %v4511, 1.442695
        %v4645 = vpow.pop %v4644
        %v4646 = vmul.f32 %v4512, 1.442695
        %v4647 = vpow.pop %v4646
        %v4648 = vmul.f32 %v4513, 1.442695
        %v4649 = vpow.pop %v4648
        %v4650 = vmul.f32 %v4514, 1.442695
        %v4651 = vpow.pop %v4650
        %v4652 = vmul.f32 %v4515, 1.442695
        %v4653 = vpow.pop %v4652
        %v4654 = vmul.f32 %v4516, 1.442695
        %v4655 = vpow.pop %v4654
        %v4656 = vmul.f32 %v4517, 1.442695
        %v4657 = vpow.pop %v4656
        %v4658 = vmul.f32 %v4518, 1.442695
        %v4659 = vpow.pop %v4658
        %v4660 = vmul.f32 %v4519, 1.442695
        %v4661 = vpow.pop %v4660
        %v4662 = vmul.f32 %v4520, 1.442695
        %v4663 = vpow.pop %v4662
        %v4664 = vmul.f32 %v4521, 1.442695
        %v4665 = vpow.pop %v4664
        %v4666 = vmul.f32 %v4522, 1.442695
        %v4667 = vpow.pop %v4666
        %v4668 = vmul.f32 %v4523, 1.442695
        %v4669 = vpow.pop %v4668
        %v4670 = vmul.f32 %v4524, 1.442695
        %v4671 = vpow.pop %v4670
        %v4672 = vmul.f32 %v4525, 1.442695
        %v4673 = vpow.pop %v4672
        %v4674 = vmul.f32 %v4526, 1.442695
        %v4675 = vpow.pop %v4674
        %v4676 = vmul.f32 %v4527, 1.442695
        %v4677 = vpow.pop %v4676
        %v4678 = vmul.f32 %v4528, 1.442695
        %v4679 = vpow.pop %v4678
        %v4680 = vmul.f32 %v4529, 1.442695
        %v4681 = vpow.pop %v4680
        %v4682 = vmul.f32 %v4530, 1.442695
        %v4683 = vpow.pop %v4682
        %v4684 = vmul.f32 %v4531, 1.442695
        %v4685 = vpow.pop %v4684
        %v4686 = vmul.f32 %v4532, 1.442695
        %v4687 = vpow.pop %v4686
        %v4688 = vmul.f32 %v4533, 1.442695
        %v4689 = vpow.pop %v4688
        %v4690 = vmul.f32 %v4534, 1.442695
        %v4691 = vpow.pop %v4690
        %v4692 = vmul.f32 %v4535, 1.442695
        %v4693 = vpow.pop %v4692
        %v4694 = vmul.f32 %v4536, 1.442695
        %v4695 = vpow.pop %v4694
        %v4696 = vmul.f32 %v4537, 1.442695
        %v4697 = vpow.pop %v4696
        %v4698 = vmul.f32 %v4538, 1.442695
        %v4699 = vpow.pop %v4698
        %v4700 = vmul.f32 %v4539, 1.442695
        %v4701 = vpow.pop %v4700
        %v4702 = vmul.f32 %v4540, 1.442695
        %v4703 = vpow.pop %v4702
        %v4704 = vmul.f32 %v4541, 1.442695
        %v4705 = vpow.pop %v4704
        %v4706 = vmul.f32 %v4542, 1.442695
        %v4707 = vpow.pop %v4706
        %v4708 = vmul.f32 %v4543, 1.442695
        %v4709 = vpow.pop %v4708
        %v4710 = vmul.f32 %v4544, 1.442695
        %v4711 = vpow.pop %v4710
        %v4712 = vmul.f32 %v4545, 1.442695
        %v4713 = vpow.pop %v4712
        %v4714 = vmul.f32 %v4546, 1.442695
        %v4715 = vpow.pop %v4714
        %v4716 = vmul.f32 %v4547, 1.442695
        %v4717 = vpow.pop %v4716
        %v4718 = vmul.f32 %v4548, 1.442695
        %v4719 = vpow.pop %v4718
        %v4720 = vmul.f32 %v4549, 1.442695
        %v4721 = vpow.pop %v4720
        %v4722 = vmul.f32 %v4550, 1.442695
        %v4723 = vpow.pop %v4722
        %v4724 = vmul.f32 %v4551, 1.442695
        %v4725 = vpow.pop %v4724
        %v4726 = vmul.f32 %v4552, 1.442695
        %v4727 = vpow.pop %v4726
        %v4728 = vmul.f32 %v4553, 1.442695
        %v4729 = vpow.pop %v4728
        %v4730 = vmul.f32 %v4554, 1.442695
        %v4731 = vpow.pop %v4730
        %v4732 = vmul.f32 %v4555, 1.442695
        %v4733 = vpow.pop %v4732
        %v4734 = vmul.f32 %v4556, 1.442695
        %v4735 = vpow.pop %v4734
        %v4736 = vmul.f32 %v4557, 1.442695
        %v4737 = vpow.pop %v4736
        %v4738 = vmul.f32 %v4558, 1.442695
        %v4739 = vpow.pop %v4738
        %v4740 = vmul.f32 %v4559, 1.442695
        %v4741 = vpow.pop %v4740
        %v4742 = vmul.f32 %v4560, 1.442695
        %v4743 = vpow.pop %v4742
        %v4744 = vmul.f32 %v4561, 1.442695
        %v4745 = vpow.pop %v4744
        %v4746 = vmul.f32 %v4562, 1.442695
        %v4747 = vpow.pop %v4746
        %v4748 = vmul.f32 %v4563, 1.442695
        %v4749 = vpow.pop %v4748
        %v4750 = vmul.f32 %v4564, 1.442695
        %v4751 = vpow.pop %v4750
        %v4752 = vmul.f32 %v4565, 1.442695
        %v4753 = vpow.pop %v4752
        %v4754 = vmul.f32 %v4566, 1.442695
        %v4755 = vpow.pop %v4754
        %v4756 = vmul.f32 %v4567, 1.442695
        %v4757 = vpow.pop %v4756
        %v4758 = vmul.f32 %v4568, 1.442695
        %v4759 = vpow.pop %v4758
        %v4760 = vmul.f32 %v4569, 1.442695
        %v4761 = vpow.pop %v4760
        %v4762 = vmul.f32 %v4570, 1.442695
        %v4763 = vpow.pop %v4762
        %v4764 = vmul.f32 %v4571, 1.442695
        %v4765 = vpow.pop %v4764
        %v4766 = vmul.f32 %v4572, 1.442695
        %v4767 = vpow.pop %v4766
        %v4768 = vmul.f32 %v4573, 1.442695
        %v4769 = vpow.pop %v4768
        %v4770 = vmul.f32 %v4574, 1.442695
        %v4771 = vpow.pop %v4770
        %v4772 = vmul.f32 %v4575, 1.442695
        %v4773 = vpow.pop %v4772
        %v4774 = vmul.f32 %v4576, 1.442695
        %v4775 = vpow.pop %v4774
        %v4776 = vmul.f32 %v4577, 1.442695
        %v4777 = vpow.pop %v4776
        %v4778 = vmul.f32 %v4578, 1.442695
        %v4779 = vpow.pop %v4778
        %v4780 = vmul.f32 %v4579, 1.442695
        %v4781 = vpow.pop %v4780
        %v4782 = vmul.f32 %v4580, 1.442695
        %v4783 = vpow.pop %v4782
        %v4784 = vmul.f32 %v4581, 1.442695
        %v4785 = vpow.pop %v4784
        %v4786 = vmul.f32 %v4582, 1.442695
        %v4787 = vpow.pop %v4786
        %v4788 = vmul.f32 %v4583, 1.442695
        %v4789 = vpow.pop %v4788
        %v4790 = vmul.f32 %v4584, 1.442695
        %v4791 = vpow.pop %v4790
        %v4792 = vmul.f32 %v4585, 1.442695
        %v4793 = vpow.pop %v4792
        %v4794 = vmul.f32 %v4586, 1.442695
        %v4795 = vpow.pop %v4794
        %v4796 = vmul.f32 %v4587, 1.442695
        %v4797 = vpow.pop %v4796
        %v4798 = vmul.f32 %v4588, 1.442695
        %v4799 = vpow.pop %v4798
        %v4800 = vmul.f32 %v4589, 1.442695
        %v4801 = vpow.pop %v4800
        %v4802 = vmul.f32 %v4590, 1.442695
        %v4803 = vpow.pop %v4802
        %v4804 = vmul.f32 %v4591, 1.442695
        %v4805 = vpow.pop %v4804
        %v4806 = vmul.f32 %v4592, 1.442695
        %v4807 = vpow.pop %v4806
        %v4808 = vmul.f32 %v4593, 1.442695
        %v4809 = vpow.pop %v4808
        %v4810 = vmul.f32 %v4594, 1.442695
        %v4811 = vpow.pop %v4810
        %v4812 = vmul.f32 %v4595, 1.442695
        %v4813 = vpow.pop %v4812
        %v4814 = vmul.f32 %v4596, 1.442695
        %v4815 = vpow.pop %v4814
        %v4816 = vmul.f32 %v4597, 1.442695
        %v4817 = vpow.pop %v4816
        %v4818 = vmul.f32 %v4598, 1.442695
        %v4819 = vpow.pop %v4818
        %v4820 = vmul.f32 %v4599, 1.442695
        %v4821 = vpow.pop %v4820
        %v4822 = vmul.f32 %v4600, 1.442695
        %v4823 = vpow.pop %v4822
        %v4824 = vmul.f32 %v4601, 1.442695
        %v4825 = vpow.pop %v4824
        %v4826 = vmul.f32 %v4602, 1.442695
        %v4827 = vpow.pop %v4826
        %v4828 = vmul.f32 %v4603, 1.442695
        %v4829 = vpow.pop %v4828
        %v4830 = vmul.f32 %v4604, 1.442695
        %v4831 = vpow.pop %v4830
        %v4832 = vmul.f32 %v4605, 1.442695
        %v4833 = vpow.pop %v4832
        %v4834 = vmul.f32 %v4606, 1.442695
        %v4835 = vpow.pop %v4834
        %v4836 = vmul.f32 %v4607, 1.442695
        %v4837 = vpow.pop %v4836
        %v4838 = vmul.f32 %v4608, 1.442695
        %v4839 = vpow.pop %v4838
        %v4840 = vmul.f32 %v4609, 1.442695
        %v4841 = vpow.pop %v4840
        %v4842 = vmul.f32 %v4610, 1.442695
        %v4843 = vpow.pop %v4842
        %v4844 = vmul.f32 %v4611, 1.442695
        %v4845 = vpow.pop %v4844
        %v4846 = vmul.f32 %v4612, 1.442695
        %v4847 = vpow.pop %v4846
        %v4848 = vmul.f32 %v4613, 1.442695
        %v4849 = vpow.pop %v4848
        %v4850 = vmul.f32 %v4614, 1.442695
        %v4851 = vpow.pop %v4850
        %v4852 = vmul.f32 %v4615, 1.442695
        %v4853 = vpow.pop %v4852
        %v4854 = vmul.f32 %v4616, 1.442695
        %v4855 = vpow.pop %v4854
        %v4856 = vmul.f32 %v4617, 1.442695
        %v4857 = vpow.pop %v4856
        %v4858 = vmul.f32 %v4618, 1.442695
        %v4859 = vpow.pop %v4858
        %v4860 = vmul.f32 %v4619, 1.442695
        %v4861 = vpow.pop %v4860
        %v4862 = vmul.f32 %v4620, 1.442695
        %v4863 = vpow.pop %v4862
        %v4864 = vmul.f32 %v4621, 1.442695
        %v4865 = vpow.pop %v4864
        %v4866 = vmul.f32 %v4622, 1.442695
        %v4867 = vpow.pop %v4866
        %v4868 = vmul.f32 %v4623, 1.442695
        %v4869 = vpow.pop %v4868
        %v4870 = vmul.f32 %v4624, 1.442695
        %v4871 = vpow.pop %v4870
        %v4872 = vmul.f32 %v4625, 1.442695
        %v4873 = vpow.pop %v4872
        %v4874 = vmul.f32 %v4626, 1.442695
        %v4875 = vpow.pop %v4874
        %v4876 = vmul.f32 %v4627, 1.442695
        %v4877 = vpow.pop %v4876
        %v4878 = vmul.f32 %v4628, 1.442695
        %v4879 = vpow.pop %v4878
        %v4880 = vmul.f32 %v4629, 1.442695
        %v4881 = vpow.pop %v4880
        %v4882 = vmul.f32 %v4630, 1.442695
        %v4883 = vpow.pop %v4882
        %v4884 = vmul.f32 %v4631, 1.442695
        %v4885 = vpow.pop %v4884
        %v4886 = vmul.f32 %v4632, 1.442695
        %v4887 = vpow.pop %v4886
        %v4888 = vmul.f32 %v4633, 1.442695
        %v4889 = vpow.pop %v4888
        %v4890 = vadd.f32 %v4635, 1.0
        %v4891 = vadd.f32 %v4637, 1.0
        %v4892 = vadd.f32 %v4639, 1.0
        %v4893 = vadd.f32 %v4641, 1.0
        %v4894 = vadd.f32 %v4643, 1.0
        %v4895 = vadd.f32 %v4645, 1.0
        %v4896 = vadd.f32 %v4647, 1.0
        %v4897 = vadd.f32 %v4649, 1.0
        %v4898 = vadd.f32 %v4651, 1.0
        %v4899 = vadd.f32 %v4653, 1.0
        %v4900 = vadd.f32 %v4655, 1.0
        %v4901 = vadd.f32 %v4657, 1.0
        %v4902 = vadd.f32 %v4659, 1.0
        %v4903 = vadd.f32 %v4661, 1.0
        %v4904 = vadd.f32 %v4663, 1.0
        %v4905 = vadd.f32 %v4665, 1.0
        %v4906 = vadd.f32 %v4667, 1.0
        %v4907 = vadd.f32 %v4669, 1.0
        %v4908 = vadd.f32 %v4671, 1.0
        %v4909 = vadd.f32 %v4673, 1.0
        %v4910 = vadd.f32 %v4675, 1.0
        %v4911 = vadd.f32 %v4677, 1.0
        %v4912 = vadd.f32 %v4679, 1.0
        %v4913 = vadd.f32 %v4681, 1.0
        %v4914 = vadd.f32 %v4683, 1.0
        %v4915 = vadd.f32 %v4685, 1.0
        %v4916 = vadd.f32 %v4687, 1.0
        %v4917 = vadd.f32 %v4689, 1.0
        %v4918 = vadd.f32 %v4691, 1.0
        %v4919 = vadd.f32 %v4693, 1.0
        %v4920 = vadd.f32 %v4695, 1.0
        %v4921 = vadd.f32 %v4697, 1.0
        %v4922 = vadd.f32 %v4699, 1.0
        %v4923 = vadd.f32 %v4701, 1.0
        %v4924 = vadd.f32 %v4703, 1.0
        %v4925 = vadd.f32 %v4705, 1.0
        %v4926 = vadd.f32 %v4707, 1.0
        %v4927 = vadd.f32 %v4709, 1.0
        %v4928 = vadd.f32 %v4711, 1.0
        %v4929 = vadd.f32 %v4713, 1.0
        %v4930 = vadd.f32 %v4715, 1.0
        %v4931 = vadd.f32 %v4717, 1.0
        %v4932 = vadd.f32 %v4719, 1.0
        %v4933 = vadd.f32 %v4721, 1.0
        %v4934 = vadd.f32 %v4723, 1.0
        %v4935 = vadd.f32 %v4725, 1.0
        %v4936 = vadd.f32 %v4727, 1.0
        %v4937 = vadd.f32 %v4729, 1.0
        %v4938 = vadd.f32 %v4731, 1.0
        %v4939 = vadd.f32 %v4733, 1.0
        %v4940 = vadd.f32 %v4735, 1.0
        %v4941 = vadd.f32 %v4737, 1.0
        %v4942 = vadd.f32 %v4739, 1.0
        %v4943 = vadd.f32 %v4741, 1.0
        %v4944 = vadd.f32 %v4743, 1.0
        %v4945 = vadd.f32 %v4745, 1.0
        %v4946 = vadd.f32 %v4747, 1.0
        %v4947 = vadd.f32 %v4749, 1.0
        %v4948 = vadd.f32 %v4751, 1.0
        %v4949 = vadd.f32 %v4753, 1.0
        %v4950 = vadd.f32 %v4755, 1.0
        %v4951 = vadd.f32 %v4757, 1.0
        %v4952 = vadd.f32 %v4759, 1.0
        %v4953 = vadd.f32 %v4761, 1.0
        %v4954 = vadd.f32 %v4763, 1.0
        %v4955 = vadd.f32 %v4765, 1.0
        %v4956 = vadd.f32 %v4767, 1.0
        %v4957 = vadd.f32 %v4769, 1.0
        %v4958 = vadd.f32 %v4771, 1.0
        %v4959 = vadd.f32 %v4773, 1.0
        %v4960 = vadd.f32 %v4775, 1.0
        %v4961 = vadd.f32 %v4777, 1.0
        %v4962 = vadd.f32 %v4779, 1.0
        %v4963 = vadd.f32 %v4781, 1.0
        %v4964 = vadd.f32 %v4783, 1.0
        %v4965 = vadd.f32 %v4785, 1.0
        %v4966 = vadd.f32 %v4787, 1.0
        %v4967 = vadd.f32 %v4789, 1.0
        %v4968 = vadd.f32 %v4791, 1.0
        %v4969 = vadd.f32 %v4793, 1.0
        %v4970 = vadd.f32 %v4795, 1.0
        %v4971 = vadd.f32 %v4797, 1.0
        %v4972 = vadd.f32 %v4799, 1.0
        %v4973 = vadd.f32 %v4801, 1.0
        %v4974 = vadd.f32 %v4803, 1.0
        %v4975 = vadd.f32 %v4805, 1.0
        %v4976 = vadd.f32 %v4807, 1.0
        %v4977 = vadd.f32 %v4809, 1.0
        %v4978 = vadd.f32 %v4811, 1.0
        %v4979 = vadd.f32 %v4813, 1.0
        %v4980 = vadd.f32 %v4815, 1.0
        %v4981 = vadd.f32 %v4817, 1.0
        %v4982 = vadd.f32 %v4819, 1.0
        %v4983 = vadd.f32 %v4821, 1.0
        %v4984 = vadd.f32 %v4823, 1.0
        %v4985 = vadd.f32 %v4825, 1.0
        %v4986 = vadd.f32 %v4827, 1.0
        %v4987 = vadd.f32 %v4829, 1.0
        %v4988 = vadd.f32 %v4831, 1.0
        %v4989 = vadd.f32 %v4833, 1.0
        %v4990 = vadd.f32 %v4835, 1.0
        %v4991 = vadd.f32 %v4837, 1.0
        %v4992 = vadd.f32 %v4839, 1.0
        %v4993 = vadd.f32 %v4841, 1.0
        %v4994 = vadd.f32 %v4843, 1.0
        %v4995 = vadd.f32 %v4845, 1.0
        %v4996 = vadd.f32 %v4847, 1.0
        %v4997 = vadd.f32 %v4849, 1.0
        %v4998 = vadd.f32 %v4851, 1.0
        %v4999 = vadd.f32 %v4853, 1.0
        %v5000 = vadd.f32 %v4855, 1.0
        %v5001 = vadd.f32 %v4857, 1.0
        %v5002 = vadd.f32 %v4859, 1.0
        %v5003 = vadd.f32 %v4861, 1.0
        %v5004 = vadd.f32 %v4863, 1.0
        %v5005 = vadd.f32 %v4865, 1.0
        %v5006 = vadd.f32 %v4867, 1.0
        %v5007 = vadd.f32 %v4869, 1.0
        %v5008 = vadd.f32 %v4871, 1.0
        %v5009 = vadd.f32 %v4873, 1.0
        %v5010 = vadd.f32 %v4875, 1.0
        %v5011 = vadd.f32 %v4877, 1.0
        %v5012 = vadd.f32 %v4879, 1.0
        %v5013 = vadd.f32 %v4881, 1.0
        %v5014 = vadd.f32 %v4883, 1.0
        %v5015 = vadd.f32 %v4885, 1.0
        %v5016 = vadd.f32 %v4887, 1.0
        %v5017 = vadd.f32 %v4889, 1.0
        %v5018 = vrcp.pop %v4890
        %v5019 = vmul.f32 1.0, %v5018
        %v5020 = vrcp.pop %v4891
        %v5021 = vmul.f32 1.0, %v5020
        %v5022 = vrcp.pop %v4892
        %v5023 = vmul.f32 1.0, %v5022
        %v5024 = vrcp.pop %v4893
        %v5025 = vmul.f32 1.0, %v5024
        %v5026 = vrcp.pop %v4894
        %v5027 = vmul.f32 1.0, %v5026
        %v5028 = vrcp.pop %v4895
        %v5029 = vmul.f32 1.0, %v5028
        %v5030 = vrcp.pop %v4896
        %v5031 = vmul.f32 1.0, %v5030
        %v5032 = vrcp.pop %v4897
        %v5033 = vmul.f32 1.0, %v5032
        %v5034 = vrcp.pop %v4898
        %v5035 = vmul.f32 1.0, %v5034
        %v5036 = vrcp.pop %v4899
        %v5037 = vmul.f32 1.0, %v5036
        %v5038 = vrcp.pop %v4900
        %v5039 = vmul.f32 1.0, %v5038
        %v5040 = vrcp.pop %v4901
        %v5041 = vmul.f32 1.0, %v5040
        %v5042 = vrcp.pop %v4902
        %v5043 = vmul.f32 1.0, %v5042
        %v5044 = vrcp.pop %v4903
        %v5045 = vmul.f32 1.0, %v5044
        %v5046 = vrcp.pop %v4904
        %v5047 = vmul.f32 1.0, %v5046
        %v5048 = vrcp.pop %v4905
        %v5049 = vmul.f32 1.0, %v5048
        %v5050 = vrcp.pop %v4906
        %v5051 = vmul.f32 1.0, %v5050
        %v5052 = vrcp.pop %v4907
        %v5053 = vmul.f32 1.0, %v5052
        %v5054 = vrcp.pop %v4908
        %v5055 = vmul.f32 1.0, %v5054
        %v5056 = vrcp.pop %v4909
        %v5057 = vmul.f32 1.0, %v5056
        %v5058 = vrcp.pop %v4910
        %v5059 = vmul.f32 1.0, %v5058
        %v5060 = vrcp.pop %v4911
        %v5061 = vmul.f32 1.0, %v5060
        %v5062 = vrcp.pop %v4912
        %v5063 = vmul.f32 1.0, %v5062
        %v5064 = vrcp.pop %v4913
        %v5065 = vmul.f32 1.0, %v5064
        %v5066 = vrcp.pop %v4914
        %v5067 = vmul.f32 1.0, %v5066
        %v5068 = vrcp.pop %v4915
        %v5069 = vmul.f32 1.0, %v5068
        %v5070 = vrcp.pop %v4916
        %v5071 = vmul.f32 1.0, %v5070
        %v5072 = vrcp.pop %v4917
        %v5073 = vmul.f32 1.0, %v5072
        %v5074 = vrcp.pop %v4918
        %v5075 = vmul.f32 1.0, %v5074
        %v5076 = vrcp.pop %v4919
        %v5077 = vmul.f32 1.0, %v5076
        %v5078 = vrcp.pop %v4920
        %v5079 = vmul.f32 1.0, %v5078
        %v5080 = vrcp.pop %v4921
        %v5081 = vmul.f32 1.0, %v5080
        %v5082 = vrcp.pop %v4922
        %v5083 = vmul.f32 1.0, %v5082
        %v5084 = vrcp.pop %v4923
        %v5085 = vmul.f32 1.0, %v5084
        %v5086 = vrcp.pop %v4924
        %v5087 = vmul.f32 1.0, %v5086
        %v5088 = vrcp.pop %v4925
        %v5089 = vmul.f32 1.0, %v5088
        %v5090 = vrcp.pop %v4926
        %v5091 = vmul.f32 1.0, %v5090
        %v5092 = vrcp.pop %v4927
        %v5093 = vmul.f32 1.0, %v5092
        %v5094 = vrcp.pop %v4928
        %v5095 = vmul.f32 1.0, %v5094
        %v5096 = vrcp.pop %v4929
        %v5097 = vmul.f32 1.0, %v5096
        %v5098 = vrcp.pop %v4930
        %v5099 = vmul.f32 1.0, %v5098
        %v5100 = vrcp.pop %v4931
        %v5101 = vmul.f32 1.0, %v5100
        %v5102 = vrcp.pop %v4932
        %v5103 = vmul.f32 1.0, %v5102
        %v5104 = vrcp.pop %v4933
        %v5105 = vmul.f32 1.0, %v5104
        %v5106 = vrcp.pop %v4934
        %v5107 = vmul.f32 1.0, %v5106
        %v5108 = vrcp.pop %v4935
        %v5109 = vmul.f32 1.0, %v5108
        %v5110 = vrcp.pop %v4936
        %v5111 = vmul.f32 1.0, %v5110
        %v5112 = vrcp.pop %v4937
        %v5113 = vmul.f32 1.0, %v5112
        %v5114 = vrcp.pop %v4938
        %v5115 = vmul.f32 1.0, %v5114
        %v5116 = vrcp.pop %v4939
        %v5117 = vmul.f32 1.0, %v5116
        %v5118 = vrcp.pop %v4940
        %v5119 = vmul.f32 1.0, %v5118
        %v5120 = vrcp.pop %v4941
        %v5121 = vmul.f32 1.0, %v5120
        %v5122 = vrcp.pop %v4942
        %v5123 = vmul.f32 1.0, %v5122
        %v5124 = vrcp.pop %v4943
        %v5125 = vmul.f32 1.0, %v5124
        %v5126 = vrcp.pop %v4944
        %v5127 = vmul.f32 1.0, %v5126
        %v5128 = vrcp.pop %v4945
        %v5129 = vmul.f32 1.0, %v5128
        %v5130 = vrcp.pop %v4946
        %v5131 = vmul.f32 1.0, %v5130
        %v5132 = vrcp.pop %v4947
        %v5133 = vmul.f32 1.0, %v5132
        %v5134 = vrcp.pop %v4948
        %v5135 = vmul.f32 1.0, %v5134
        %v5136 = vrcp.pop %v4949
        %v5137 = vmul.f32 1.0, %v5136
        %v5138 = vrcp.pop %v4950
        %v5139 = vmul.f32 1.0, %v5138
        %v5140 = vrcp.pop %v4951
        %v5141 = vmul.f32 1.0, %v5140
        %v5142 = vrcp.pop %v4952
        %v5143 = vmul.f32 1.0, %v5142
        %v5144 = vrcp.pop %v4953
        %v5145 = vmul.f32 1.0, %v5144
        %v5146 = vrcp.pop %v4954
        %v5147 = vmul.f32 1.0, %v5146
        %v5148 = vrcp.pop %v4955
        %v5149 = vmul.f32 1.0, %v5148
        %v5150 = vrcp.pop %v4956
        %v5151 = vmul.f32 1.0, %v5150
        %v5152 = vrcp.pop %v4957
        %v5153 = vmul.f32 1.0, %v5152
        %v5154 = vrcp.pop %v4958
        %v5155 = vmul.f32 1.0, %v5154
        %v5156 = vrcp.pop %v4959
        %v5157 = vmul.f32 1.0, %v5156
        %v5158 = vrcp.pop %v4960
        %v5159 = vmul.f32 1.0, %v5158
        %v5160 = vrcp.pop %v4961
        %v5161 = vmul.f32 1.0, %v5160
        %v5162 = vrcp.pop %v4962
        %v5163 = vmul.f32 1.0, %v5162
        %v5164 = vrcp.pop %v4963
        %v5165 = vmul.f32 1.0, %v5164
        %v5166 = vrcp.pop %v4964
        %v5167 = vmul.f32 1.0, %v5166
        %v5168 = vrcp.pop %v4965
        %v5169 = vmul.f32 1.0, %v5168
        %v5170 = vrcp.pop %v4966
        %v5171 = vmul.f32 1.0, %v5170
        %v5172 = vrcp.pop %v4967
        %v5173 = vmul.f32 1.0, %v5172
        %v5174 = vrcp.pop %v4968
        %v5175 = vmul.f32 1.0, %v5174
        %v5176 = vrcp.pop %v4969
        %v5177 = vmul.f32 1.0, %v5176
        %v5178 = vrcp.pop %v4970
        %v5179 = vmul.f32 1.0, %v5178
        %v5180 = vrcp.pop %v4971
        %v5181 = vmul.f32 1.0, %v5180
        %v5182 = vrcp.pop %v4972
        %v5183 = vmul.f32 1.0, %v5182
        %v5184 = vrcp.pop %v4973
        %v5185 = vmul.f32 1.0, %v5184
        %v5186 = vrcp.pop %v4974
        %v5187 = vmul.f32 1.0, %v5186
        %v5188 = vrcp.pop %v4975
        %v5189 = vmul.f32 1.0, %v5188
        %v5190 = vrcp.pop %v4976
        %v5191 = vmul.f32 1.0, %v5190
        %v5192 = vrcp.pop %v4977
        %v5193 = vmul.f32 1.0, %v5192
        %v5194 = vrcp.pop %v4978
        %v5195 = vmul.f32 1.0, %v5194
        %v5196 = vrcp.pop %v4979
        %v5197 = vmul.f32 1.0, %v5196
        %v5198 = vrcp.pop %v4980
        %v5199 = vmul.f32 1.0, %v5198
        %v5200 = vrcp.pop %v4981
        %v5201 = vmul.f32 1.0, %v5200
        %v5202 = vrcp.pop %v4982
        %v5203 = vmul.f32 1.0, %v5202
        %v5204 = vrcp.pop %v4983
        %v5205 = vmul.f32 1.0, %v5204
        %v5206 = vrcp.pop %v4984
        %v5207 = vmul.f32 1.0, %v5206
        %v5208 = vrcp.pop %v4985
        %v5209 = vmul.f32 1.0, %v5208
        %v5210 = vrcp.pop %v4986
        %v5211 = vmul.f32 1.0, %v5210
        %v5212 = vrcp.pop %v4987
        %v5213 = vmul.f32 1.0, %v5212
        %v5214 = vrcp.pop %v4988
        %v5215 = vmul.f32 1.0, %v5214
        %v5216 = vrcp.pop %v4989
        %v5217 = vmul.f32 1.0, %v5216
        %v5218 = vrcp.pop %v4990
        %v5219 = vmul.f32 1.0, %v5218
        %v5220 = vrcp.pop %v4991
        %v5221 = vmul.f32 1.0, %v5220
        %v5222 = vrcp.pop %v4992
        %v5223 = vmul.f32 1.0, %v5222
        %v5224 = vrcp.pop %v4993
        %v5225 = vmul.f32 1.0, %v5224
        %v5226 = vrcp.pop %v4994
        %v5227 = vmul.f32 1.0, %v5226
        %v5228 = vrcp.pop %v4995
        %v5229 = vmul.f32 1.0, %v5228
        %v5230 = vrcp.pop %v4996
        %v5231 = vmul.f32 1.0, %v5230
        %v5232 = vrcp.pop %v4997
        %v5233 = vmul.f32 1.0, %v5232
        %v5234 = vrcp.pop %v4998
        %v5235 = vmul.f32 1.0, %v5234
        %v5236 = vrcp.pop %v4999
        %v5237 = vmul.f32 1.0, %v5236
        %v5238 = vrcp.pop %v5000
        %v5239 = vmul.f32 1.0, %v5238
        %v5240 = vrcp.pop %v5001
        %v5241 = vmul.f32 1.0, %v5240
        %v5242 = vrcp.pop %v5002
        %v5243 = vmul.f32 1.0, %v5242
        %v5244 = vrcp.pop %v5003
        %v5245 = vmul.f32 1.0, %v5244
        %v5246 = vrcp.pop %v5004
        %v5247 = vmul.f32 1.0, %v5246
        %v5248 = vrcp.pop %v5005
        %v5249 = vmul.f32 1.0, %v5248
        %v5250 = vrcp.pop %v5006
        %v5251 = vmul.f32 1.0, %v5250
        %v5252 = vrcp.pop %v5007
        %v5253 = vmul.f32 1.0, %v5252
        %v5254 = vrcp.pop %v5008
        %v5255 = vmul.f32 1.0, %v5254
        %v5256 = vrcp.pop %v5009
        %v5257 = vmul.f32 1.0, %v5256
        %v5258 = vrcp.pop %v5010
        %v5259 = vmul.f32 1.0, %v5258
        %v5260 = vrcp.pop %v5011
        %v5261 = vmul.f32 1.0, %v5260
        %v5262 = vrcp.pop %v5012
        %v5263 = vmul.f32 1.0, %v5262
        %v5264 = vrcp.pop %v5013
        %v5265 = vmul.f32 1.0, %v5264
        %v5266 = vrcp.pop %v5014
        %v5267 = vmul.f32 1.0, %v5266
        %v5268 = vrcp.pop %v5015
        %v5269 = vmul.f32 1.0, %v5268
        %v5270 = vrcp.pop %v5016
        %v5271 = vmul.f32 1.0, %v5270
        %v5272 = vrcp.pop %v5017
        %v5273 = vmul.f32 1.0, %v5272
        %v5274 = vpack.c.bf16 %v5035, %v5019
        %v5275 = vpack.c.bf16 %v5037, %v5021
        %v5276 = vpack.c.bf16 %v5039, %v5023
        %v5277 = vpack.c.bf16 %v5041, %v5025
        %v5278 = vpack.c.bf16 %v5043, %v5027
        %v5279 = vpack.c.bf16 %v5045, %v5029
        %v5280 = vpack.c.bf16 %v5047, %v5031
        %v5281 = vpack.c.bf16 %v5049, %v5033
        %v5282 = vpack.c.bf16 %v5067, %v5051
        %v5283 = vpack.c.bf16 %v5069, %v5053
        %v5284 = vpack.c.bf16 %v5071, %v5055
        %v5285 = vpack.c.bf16 %v5073, %v5057
        %v5286 = vpack.c.bf16 %v5075, %v5059
        %v5287 = vpack.c.bf16 %v5077, %v5061
        %v5288 = vpack.c.bf16 %v5079, %v5063
        %v5289 = vpack.c.bf16 %v5081, %v5065
        %v5290 = vpack.c.bf16 %v5099, %v5083
        %v5291 = vpack.c.bf16 %v5101, %v5085
        %v5292 = vpack.c.bf16 %v5103, %v5087
        %v5293 = vpack.c.bf16 %v5105, %v5089
        %v5294 = vpack.c.bf16 %v5107, %v5091
        %v5295 = vpack.c.bf16 %v5109, %v5093
        %v5296 = vpack.c.bf16 %v5111, %v5095
        %v5297 = vpack.c.bf16 %v5113, %v5097
        %v5298 = vpack.c.bf16 %v5131, %v5115
        %v5299 = vpack.c.bf16 %v5133, %v5117
        %v5300 = vpack.c.bf16 %v5135, %v5119
        %v5301 = vpack.c.bf16 %v5137, %v5121
        %v5302 = vpack.c.bf16 %v5139, %v5123
        %v5303 = vpack.c.bf16 %v5141, %v5125
        %v5304 = vpack.c.bf16 %v5143, %v5127
        %v5305 = vpack.c.bf16 %v5145, %v5129
        %v5306 = vpack.c.bf16 %v5163, %v5147
        %v5307 = vpack.c.bf16 %v5165, %v5149
        %v5308 = vpack.c.bf16 %v5167, %v5151
        %v5309 = vpack.c.bf16 %v5169, %v5153
        %v5310 = vpack.c.bf16 %v5171, %v5155
        %v5311 = vpack.c.bf16 %v5173, %v5157
        %v5312 = vpack.c.bf16 %v5175, %v5159
        %v5313 = vpack.c.bf16 %v5177, %v5161
        %v5314 = vpack.c.bf16 %v5195, %v5179
        %v5315 = vpack.c.bf16 %v5197, %v5181
        %v5316 = vpack.c.bf16 %v5199, %v5183
        %v5317 = vpack.c.bf16 %v5201, %v5185
        %v5318 = vpack.c.bf16 %v5203, %v5187
        %v5319 = vpack.c.bf16 %v5205, %v5189
        %v5320 = vpack.c.bf16 %v5207, %v5191
        %v5321 = vpack.c.bf16 %v5209, %v5193
        %v5322 = vpack.c.bf16 %v5227, %v5211
        %v5323 = vpack.c.bf16 %v5229, %v5213
        %v5324 = vpack.c.bf16 %v5231, %v5215
        %v5325 = vpack.c.bf16 %v5233, %v5217
        %v5326 = vpack.c.bf16 %v5235, %v5219
        %v5327 = vpack.c.bf16 %v5237, %v5221
        %v5328 = vpack.c.bf16 %v5239, %v5223
        %v5329 = vpack.c.bf16 %v5241, %v5225
        %v5330 = vpack.c.bf16 %v5259, %v5243
        %v5331 = vpack.c.bf16 %v5261, %v5245
        %v5332 = vpack.c.bf16 %v5263, %v5247
        %v5333 = vpack.c.bf16 %v5265, %v5249
        %v5334 = vpack.c.bf16 %v5267, %v5251
        %v5335 = vpack.c.bf16 %v5269, %v5253
        %v5336 = vpack.c.bf16 %v5271, %v5255
        %v5337 = vpack.c.bf16 %v5273, %v5257
        %v5402 = vunpack.c.l.b16 %v5274
        %v5403 = vunpack.c.l.b16 %v5275
        %v5404 = vunpack.c.l.b16 %v5276
        %v5405 = vunpack.c.l.b16 %v5277
        %v5406 = vunpack.c.l.b16 %v5278
        %v5407 = vunpack.c.l.b16 %v5279
        %v5408 = vunpack.c.l.b16 %v5280
        %v5409 = vunpack.c.l.b16 %v5281
        %v5410 = vunpack.c.h.b16 %v5274
        %v5411 = vunpack.c.h.b16 %v5275
        %v5412 = vunpack.c.h.b16 %v5276
        %v5413 = vunpack.c.h.b16 %v5277
        %v5414 = vunpack.c.h.b16 %v5278
        %v5415 = vunpack.c.h.b16 %v5279
        %v5416 = vunpack.c.h.b16 %v5280
        %v5417 = vunpack.c.h.b16 %v5281
        %v5418 = vunpack.c.l.b16 %v5282
        %v5419 = vunpack.c.l.b16 %v5283
        %v5420 = vunpack.c.l.b16 %v5284
        %v5421 = vunpack.c.l.b16 %v5285
        %v5422 = vunpack.c.l.b16 %v5286
        %v5423 = vunpack.c.l.b16 %v5287
        %v5424 = vunpack.c.l.b16 %v5288
        %v5425 = vunpack.c.l.b16 %v5289
        %v5426 = vunpack.c.h.b16 %v5282
        %v5427 = vunpack.c.h.b16 %v5283
        %v5428 = vunpack.c.h.b16 %v5284
        %v5429 = vunpack.c.h.b16 %v5285
        %v5430 = vunpack.c.h.b16 %v5286
        %v5431 = vunpack.c.h.b16 %v5287
        %v5432 = vunpack.c.h.b16 %v5288
        %v5433 = vunpack.c.h.b16 %v5289
        %v5434 = vunpack.c.l.b16 %v5290
        %v5435 = vunpack.c.l.b16 %v5291
        %v5436 = vunpack.c.l.b16 %v5292
        %v5437 = vunpack.c.l.b16 %v5293
        %v5438 = vunpack.c.l.b16 %v5294
        %v5439 = vunpack.c.l.b16 %v5295
        %v5440 = vunpack.c.l.b16 %v5296
        %v5441 = vunpack.c.l.b16 %v5297
        %v5442 = vunpack.c.h.b16 %v5290
        %v5443 = vunpack.c.h.b16 %v5291
        %v5444 = vunpack.c.h.b16 %v5292
        %v5445 = vunpack.c.h.b16 %v5293
        %v5446 = vunpack.c.h.b16 %v5294
        %v5447 = vunpack.c.h.b16 %v5295
        %v5448 = vunpack.c.h.b16 %v5296
        %v5449 = vunpack.c.h.b16 %v5297
        %v5450 = vunpack.c.l.b16 %v5298
        %v5451 = vunpack.c.l.b16 %v5299
        %v5452 = vunpack.c.l.b16 %v5300
        %v5453 = vunpack.c.l.b16 %v5301
        %v5454 = vunpack.c.l.b16 %v5302
        %v5455 = vunpack.c.l.b16 %v5303
        %v5456 = vunpack.c.l.b16 %v5304
        %v5457 = vunpack.c.l.b16 %v5305
        %v5458 = vunpack.c.h.b16 %v5298
        %v5459 = vunpack.c.h.b16 %v5299
        %v5460 = vunpack.c.h.b16 %v5300
        %v5461 = vunpack.c.h.b16 %v5301
        %v5462 = vunpack.c.h.b16 %v5302
        %v5463 = vunpack.c.h.b16 %v5303
        %v5464 = vunpack.c.h.b16 %v5304
        %v5465 = vunpack.c.h.b16 %v5305
        %v5466 = vunpack.c.l.b16 %v5306
        %v5467 = vunpack.c.l.b16 %v5307
        %v5468 = vunpack.c.l.b16 %v5308
        %v5469 = vunpack.c.l.b16 %v5309
        %v5470 = vunpack.c.l.b16 %v5310
        %v5471 = vunpack.c.l.b16 %v5311
        %v5472 = vunpack.c.l.b16 %v5312
        %v5473 = vunpack.c.l.b16 %v5313
        %v5474 = vunpack.c.h.b16 %v5306
        %v5475 = vunpack.c.h.b16 %v5307
        %v5476 = vunpack.c.h.b16 %v5308
        %v5477 = vunpack.c.h.b16 %v5309
        %v5478 = vunpack.c.h.b16 %v5310
        %v5479 = vunpack.c.h.b16 %v5311
        %v5480 = vunpack.c.h.b16 %v5312
        %v5481 = vunpack.c.h.b16 %v5313
        %v5482 = vunpack.c.l.b16 %v5314
        %v5483 = vunpack.c.l.b16 %v5315
        %v5484 = vunpack.c.l.b16 %v5316
        %v5485 = vunpack.c.l.b16 %v5317
        %v5486 = vunpack.c.l.b16 %v5318
        %v5487 = vunpack.c.l.b16 %v5319
        %v5488 = vunpack.c.l.b16 %v5320
        %v5489 = vunpack.c.l.b16 %v5321
        %v5490 = vunpack.c.h.b16 %v5314
        %v5491 = vunpack.c.h.b16 %v5315
        %v5492 = vunpack.c.h.b16 %v5316
        %v5493 = vunpack.c.h.b16 %v5317
        %v5494 = vunpack.c.h.b16 %v5318
        %v5495 = vunpack.c.h.b16 %v5319
        %v5496 = vunpack.c.h.b16 %v5320
        %v5497 = vunpack.c.h.b16 %v5321
        %v5498 = vunpack.c.l.b16 %v5322
        %v5499 = vunpack.c.l.b16 %v5323
        %v5500 = vunpack.c.l.b16 %v5324
        %v5501 = vunpack.c.l.b16 %v5325
        %v5502 = vunpack.c.l.b16 %v5326
        %v5503 = vunpack.c.l.b16 %v5327
        %v5504 = vunpack.c.l.b16 %v5328
        %v5505 = vunpack.c.l.b16 %v5329
        %v5506 = vunpack.c.h.b16 %v5322
        %v5507 = vunpack.c.h.b16 %v5323
        %v5508 = vunpack.c.h.b16 %v5324
        %v5509 = vunpack.c.h.b16 %v5325
        %v5510 = vunpack.c.h.b16 %v5326
        %v5511 = vunpack.c.h.b16 %v5327
        %v5512 = vunpack.c.h.b16 %v5328
        %v5513 = vunpack.c.h.b16 %v5329
        %v5514 = vunpack.c.l.b16 %v5330
        %v5515 = vunpack.c.l.b16 %v5331
        %v5516 = vunpack.c.l.b16 %v5332
        %v5517 = vunpack.c.l.b16 %v5333
        %v5518 = vunpack.c.l.b16 %v5334
        %v5519 = vunpack.c.l.b16 %v5335
        %v5520 = vunpack.c.l.b16 %v5336
        %v5521 = vunpack.c.l.b16 %v5337
        %v5522 = vunpack.c.h.b16 %v5330
        %v5523 = vunpack.c.h.b16 %v5331
        %v5524 = vunpack.c.h.b16 %v5332
        %v5525 = vunpack.c.h.b16 %v5333
        %v5526 = vunpack.c.h.b16 %v5334
        %v5527 = vunpack.c.h.b16 %v5335
        %v5528 = vunpack.c.h.b16 %v5336
        %v5529 = vunpack.c.h.b16 %v5337
        %v5530 = vpack.c.b16 %v5403, %v5402
        %v5531 = vpack.c.b16 %v5405, %v5404
        %v5532 = vpack.c.b16 %v5407, %v5406
        %v5533 = vpack.c.b16 %v5409, %v5408
        %v5534 = vpack.c.b16 %v5411, %v5410
        %v5535 = vpack.c.b16 %v5413, %v5412
        %v5536 = vpack.c.b16 %v5415, %v5414
        %v5537 = vpack.c.b16 %v5417, %v5416
        %v5538 = vpack.c.b16 %v5419, %v5418
        %v5539 = vpack.c.b16 %v5421, %v5420
        %v5540 = vpack.c.b16 %v5423, %v5422
        %v5541 = vpack.c.b16 %v5425, %v5424
        %v5542 = vpack.c.b16 %v5427, %v5426
        %v5543 = vpack.c.b16 %v5429, %v5428
        %v5544 = vpack.c.b16 %v5431, %v5430
        %v5545 = vpack.c.b16 %v5433, %v5432
        %v5546 = vpack.c.b16 %v5435, %v5434
        %v5547 = vpack.c.b16 %v5437, %v5436
        %v5548 = vpack.c.b16 %v5439, %v5438
        %v5549 = vpack.c.b16 %v5441, %v5440
        %v5550 = vpack.c.b16 %v5443, %v5442
        %v5551 = vpack.c.b16 %v5445, %v5444
        %v5552 = vpack.c.b16 %v5447, %v5446
        %v5553 = vpack.c.b16 %v5449, %v5448
        %v5554 = vpack.c.b16 %v5451, %v5450
        %v5555 = vpack.c.b16 %v5453, %v5452
        %v5556 = vpack.c.b16 %v5455, %v5454
        %v5557 = vpack.c.b16 %v5457, %v5456
        %v5558 = vpack.c.b16 %v5459, %v5458
        %v5559 = vpack.c.b16 %v5461, %v5460
        %v5560 = vpack.c.b16 %v5463, %v5462
        %v5561 = vpack.c.b16 %v5465, %v5464
        %v5562 = vpack.c.b16 %v5467, %v5466
        %v5563 = vpack.c.b16 %v5469, %v5468
        %v5564 = vpack.c.b16 %v5471, %v5470
        %v5565 = vpack.c.b16 %v5473, %v5472
        %v5566 = vpack.c.b16 %v5475, %v5474
        %v5567 = vpack.c.b16 %v5477, %v5476
        %v5568 = vpack.c.b16 %v5479, %v5478
        %v5569 = vpack.c.b16 %v5481, %v5480
        %v5570 = vpack.c.b16 %v5483, %v5482
        %v5571 = vpack.c.b16 %v5485, %v5484
        %v5572 = vpack.c.b16 %v5487, %v5486
        %v5573 = vpack.c.b16 %v5489, %v5488
        %v5574 = vpack.c.b16 %v5491, %v5490
        %v5575 = vpack.c.b16 %v5493, %v5492
        %v5576 = vpack.c.b16 %v5495, %v5494
        %v5577 = vpack.c.b16 %v5497, %v5496
        %v5578 = vpack.c.b16 %v5499, %v5498
        %v5579 = vpack.c.b16 %v5501, %v5500
        %v5580 = vpack.c.b16 %v5503, %v5502
        %v5581 = vpack.c.b16 %v5505, %v5504
        %v5582 = vpack.c.b16 %v5507, %v5506
        %v5583 = vpack.c.b16 %v5509, %v5508
        %v5584 = vpack.c.b16 %v5511, %v5510
        %v5585 = vpack.c.b16 %v5513, %v5512
        %v5586 = vpack.c.b16 %v5515, %v5514
        %v5587 = vpack.c.b16 %v5517, %v5516
        %v5588 = vpack.c.b16 %v5519, %v5518
        %v5589 = vpack.c.b16 %v5521, %v5520
        %v5590 = vpack.c.b16 %v5523, %v5522
        %v5591 = vpack.c.b16 %v5525, %v5524
        %v5592 = vpack.c.b16 %v5527, %v5526
        %v5593 = vpack.c.b16 %v5529, %v5528
        %5658 = vst [vmem:[%s507] sm:$0xff] %v5530
        %5659 = vst [vmem:[%s507 + $0x8] sm:$0xff] %v5531
        %5660 = vst [vmem:[%s507 + $0x10] sm:$0xff] %v5532
        %5661 = vst [vmem:[%s507 + $0x18] sm:$0xff] %v5533
        %5662 = vst [vmem:[%s507 + $0x20] sm:$0xff] %v5534
        %5663 = vst [vmem:[%s507 + $0x28] sm:$0xff] %v5535
        %5664 = vst [vmem:[%s507 + $0x30] sm:$0xff] %v5536
        %5665 = vst [vmem:[%s507 + $0x38] sm:$0xff] %v5537
        %5666 = vst [vmem:[%s507 + $0x40] sm:$0xff] %v5538
        %5667 = vst [vmem:[%s507 + $0x48] sm:$0xff] %v5539
        %5668 = vst [vmem:[%s507 + $0x50] sm:$0xff] %v5540
        %5669 = vst [vmem:[%s507 + $0x58] sm:$0xff] %v5541
        %5670 = vst [vmem:[%s507 + $0x60] sm:$0xff] %v5542
        %5671 = vst [vmem:[%s507 + $0x68] sm:$0xff] %v5543
        %5672 = vst [vmem:[%s507 + $0x70] sm:$0xff] %v5544
        %5673 = vst [vmem:[%s507 + $0x78] sm:$0xff] %v5545
        %5674 = vst [vmem:[%s507 + $0x80] sm:$0xff] %v5546
        %5675 = vst [vmem:[%s507 + $0x88] sm:$0xff] %v5547
        %5676 = vst [vmem:[%s507 + $0x90] sm:$0xff] %v5548
        %5677 = vst [vmem:[%s507 + $0x98] sm:$0xff] %v5549
        %5678 = vst [vmem:[%s507 + $0xa0] sm:$0xff] %v5550
        %5679 = vst [vmem:[%s507 + $0xa8] sm:$0xff] %v5551
        %5680 = vst [vmem:[%s507 + $0xb0] sm:$0xff] %v5552
        %5681 = vst [vmem:[%s507 + $0xb8] sm:$0xff] %v5553
        %5682 = vst [vmem:[%s507 + $0xc0] sm:$0xff] %v5554
        %5683 = vst [vmem:[%s507 + $0xc8] sm:$0xff] %v5555
        %5684 = vst [vmem:[%s507 + $0xd0] sm:$0xff] %v5556
        %5685 = vst [vmem:[%s507 + $0xd8] sm:$0xff] %v5557
        %5686 = vst [vmem:[%s507 + $0xe0] sm:$0xff] %v5558
        %5687 = vst [vmem:[%s507 + $0xe8] sm:$0xff] %v5559
        %5688 = vst [vmem:[%s507 + $0xf0] sm:$0xff] %v5560
        %5689 = vst [vmem:[%s507 + $0xf8] sm:$0xff] %v5561
        %5690 = vst [vmem:[%s507 + $0x100] sm:$0xff] %v5562
        %5691 = vst [vmem:[%s507 + $0x108] sm:$0xff] %v5563
        %5692 = vst [vmem:[%s507 + $0x110] sm:$0xff] %v5564
        %5693 = vst [vmem:[%s507 + $0x118] sm:$0xff] %v5565
        %5694 = vst [vmem:[%s507 + $0x120] sm:$0xff] %v5566
        %5695 = vst [vmem:[%s507 + $0x128] sm:$0xff] %v5567
        %5696 = vst [vmem:[%s507 + $0x130] sm:$0xff] %v5568
        %5697 = vst [vmem:[%s507 + $0x138] sm:$0xff] %v5569
        %5698 = vst [vmem:[%s507 + $0x140] sm:$0xff] %v5570
        %5699 = vst [vmem:[%s507 + $0x148] sm:$0xff] %v5571
        %5700 = vst [vmem:[%s507 + $0x150] sm:$0xff] %v5572
        %5701 = vst [vmem:[%s507 + $0x158] sm:$0xff] %v5573
        %5702 = vst [vmem:[%s507 + $0x160] sm:$0xff] %v5574
        %5703 = vst [vmem:[%s507 + $0x168] sm:$0xff] %v5575
        %5704 = vst [vmem:[%s507 + $0x170] sm:$0xff] %v5576
        %5705 = vst [vmem:[%s507 + $0x178] sm:$0xff] %v5577
        %5706 = vst [vmem:[%s507 + $0x180] sm:$0xff] %v5578
        %5707 = vst [vmem:[%s507 + $0x188] sm:$0xff] %v5579
        %5708 = vst [vmem:[%s507 + $0x190] sm:$0xff] %v5580
        %5709 = vst [vmem:[%s507 + $0x198] sm:$0xff] %v5581
        %5710 = vst [vmem:[%s507 + $0x1a0] sm:$0xff] %v5582
        %5711 = vst [vmem:[%s507 + $0x1a8] sm:$0xff] %v5583
        %5712 = vst [vmem:[%s507 + $0x1b0] sm:$0xff] %v5584
        %5713 = vst [vmem:[%s507 + $0x1b8] sm:$0xff] %v5585
        %5714 = vst [vmem:[%s507 + $0x1c0] sm:$0xff] %v5586
        %5715 = vst [vmem:[%s507 + $0x1c8] sm:$0xff] %v5587
        %5716 = vst [vmem:[%s507 + $0x1d0] sm:$0xff] %v5588
        %5717 = vst [vmem:[%s507 + $0x1d8] sm:$0xff] %v5589
        %5718 = vst [vmem:[%s507 + $0x1e0] sm:$0xff] %v5590
        %5719 = vst [vmem:[%s507 + $0x1e8] sm:$0xff] %v5591
        %5720 = vst [vmem:[%s507 + $0x1f0] sm:$0xff] %v5592
        %5721 = vst [vmem:[%s507 + $0x1f8] sm:$0xff] %v5593
        %5722 = vst [vmem:[%s535] sm:$0xff] %v2601
        %5723 = vst [vmem:[%s535 + $0x8] sm:$0xff] %v2603
        %5724 = vst [vmem:[%s535 + $0x10] sm:$0xff] %v2605
        %5725 = vst [vmem:[%s535 + $0x18] sm:$0xff] %v2607
        %5726 = vst [vmem:[%s535 + $0x20] sm:$0xff] %v2611
        %5727 = vst [vmem:[%s535 + $0x28] sm:$0xff] %v2613
        %5728 = vst [vmem:[%s535 + $0x30] sm:$0xff] %v2615
        %5729 = vst [vmem:[%s535 + $0x38] sm:$0xff] %v2617
        %5730 = vst [vmem:[%s535 + $0x40] sm:$0xff] %v2621
        %5731 = vst [vmem:[%s535 + $0x48] sm:$0xff] %v2623
        %5732 = vst [vmem:[%s535 + $0x50] sm:$0xff] %v2625
        %5733 = vst [vmem:[%s535 + $0x58] sm:$0xff] %v2627
        %5734 = vst [vmem:[%s535 + $0x60] sm:$0xff] %v2631
        %5735 = vst [vmem:[%s535 + $0x68] sm:$0xff] %v2633
        %5736 = vst [vmem:[%s535 + $0x70] sm:$0xff] %v2635
        %5737 = vst [vmem:[%s535 + $0x78] sm:$0xff] %v2637
        %5738 = vst [vmem:[%s535 + $0x80] sm:$0xff] %v2641
        %5739 = vst [vmem:[%s535 + $0x88] sm:$0xff] %v2643
        %5740 = vst [vmem:[%s535 + $0x90] sm:$0xff] %v2645
        %5741 = vst [vmem:[%s535 + $0x98] sm:$0xff] %v2647
        %5742 = vst [vmem:[%s535 + $0xa0] sm:$0xff] %v2651
        %5743 = vst [vmem:[%s535 + $0xa8] sm:$0xff] %v2653
        %5744 = vst [vmem:[%s535 + $0xb0] sm:$0xff] %v2655
        %5745 = vst [vmem:[%s535 + $0xb8] sm:$0xff] %v2657
        %5746 = vst [vmem:[%s535 + $0xc0] sm:$0xff] %v2661
        %5747 = vst [vmem:[%s535 + $0xc8] sm:$0xff] %v2663
        %5748 = vst [vmem:[%s535 + $0xd0] sm:$0xff] %v2665
        %5749 = vst [vmem:[%s535 + $0xd8] sm:$0xff] %v2667
        %5750 = vst [vmem:[%s535 + $0xe0] sm:$0xff] %v2671
        %5751 = vst [vmem:[%s535 + $0xe8] sm:$0xff] %v2673
        %5752 = vst [vmem:[%s535 + $0xf0] sm:$0xff] %v2675
        %5753 = vst [vmem:[%s535 + $0xf8] sm:$0xff] %v2677
        %s5754 = sand.u32 %s342, 1
        %s5755 = scalar_lea.sflag [#allocation3], %s5754
        %s5756 = sand.u32 %s342, 1
        %s5757 = smul.addr %s5756, 512
        %s5758 = scalar_lea.vmem [#allocation2], %s5757
        %s5759 = smul.u32 16, %s30
        %p5760 = scmp.lt.s32.totalorder %s5759, 31
        %s5761 = scalar_select %p5760, %s5759, 31
        %s5762 = smul.addr %s5761, 2
        %s5763 = smul.addr %s5762, 8
        %s5764 = scalar_lea.vmem %s15, %s5763
        // Predicated region
        $region77: #{vae_forward.1} parent=75 // pred_check
          %p5765 = pneg %p352
        $region78: #{vae_forward.1} parent=75 // pred_check_branch
          %5767 = sbr.rel (%p5765) target = $region80
        $region79: #{vae_forward.1} parent=75 // pred_region
          %s5768 = smul.u32 16, %s30
          %s5770 = ssub.s32 8192, 8192
          %5771 = vsyncadd %s5755, %s5770
          %s5772 = smul.addr %s5768, 8
          %s5773 = smul.addr %s5772, 64
          %s5774 = scalar_lea.hbm %s14, %s5773
          %s5775 = sshll.u32 %s5758, 4
          %s5776 = int_to_ptr.vmem [resolvable:$true] %s5775
          %5781 = dma.vmem_to_hbm [thread:$0]  %s5776, 8192, %s5774, %s5755, 512, 512, 32
        $region80: #{vae_forward.1} parent=75 // pred_fallthru
          _
        // Predicated region
        $region81: #{vae_forward.1} parent=75 // pred_check
          %p5782 = pneg %p378
        $region82: #{vae_forward.1} parent=75 // pred_check_branch
          %5784 = sbr.rel (%p5782) target = $region84
        $region83: #{vae_forward.1} parent=75 // pred_region
          %s5785 = smul.u32 16, %s30
        $region84: #{vae_forward.1} parent=75 // pred_fallthru
          _
      $region76: #{vae_forward.1} parent=5 // pred_fallthru
        _
      %p5786 = scmp.le.s32.totalorder 2, %s25
      // Predicated region
      $region85: #{vae_forward.1} parent=5 // pred_check
        %p5787 = pneg %p5786
      $region86: #{vae_forward.1} parent=5 // pred_check_branch
        %5789 = sbr.rel (%p5787) target = $region88
      $region87: #{vae_forward.1} parent=5 // pred_region
        %s5790 = ssub.s32 %s25, 2
        // Predicated region
        $region89: #{vae_forward.1} parent=87 // pred_check
          %p5791 = pneg %p358
        $region90: #{vae_forward.1} parent=87 // pred_check_branch
          %5793 = sbr.rel (%p5791) target = $region92
        $region91: #{vae_forward.1} parent=87 // pred_region
          %s5794 = sand.u32 %s343, 1
          %s5795 = scalar_lea.sflag [#allocation3], %s5794
          %s5796 = sand.u32 %s343, 1
          %s5797 = smul.addr %s5796, 512
          %s5798 = scalar_lea.vmem [#allocation2], %s5797
          %5799 = dma.done %s5795, 8192
        $region92: #{vae_forward.1} parent=87 // pred_fallthru
          _
        // Predicated region
        $region93: #{vae_forward.1} parent=87 // pred_check
          %p5800 = pneg %p384
        $region94: #{vae_forward.1} parent=87 // pred_check_branch
          %5802 = sbr.rel (%p5800) target = $region96
        $region95: #{vae_forward.1} parent=87 // pred_region
          %s5803 = smul.u32 16, %s31
          %p5804 = scmp.lt.s32.totalorder %s5803, 31
          %s5805 = scalar_select %p5804, %s5803, 31
          %s5806 = smul.addr %s5805, 2
          %s5807 = smul.addr %s5806, 8
          %s5808 = scalar_lea.vmem %s15, %s5807
        $region96: #{vae_forward.1} parent=87 // pred_fallthru
          _
      $region88: #{vae_forward.1} parent=5 // pred_fallthru
        _
    $region6: #{vae_forward.1} parent=1 // loop_footer
      %s29 = sadd.s32 1, %s25
    $region7: #{vae_forward.1} parent=1 // loop_footer_branch
      %24 = sbr.rel target = $region3
    $region8: #{vae_forward.1} parent=1 // loop_exit
      _
    %5809 = vsyncpa [#allocation3], 1
    %s5810 = scalar_lea.sflag [#allocation3], 1
    %5811 = vsyncpa %s5810, 1

</llo_original>
